<compile_context>
chip_gen: v6e
topology: v6e:2x2x1
jax: 0.10.0
libtpu: 0.0.40
codegen_flags: <defaults>
</compile_context>

<pallas_src>
import functools

import jax
import jax.numpy as jnp
from jax.experimental import pallas as pl
from jax.experimental.pallas import tpu as pltpu


# ----------------------------- model configuration -----------------------------

PATCH = 14
IN_CH = 3
DIM = 32       # (real ViT-S/14: 384) — small synthetic hidden size
DEPTH = 2      # (real: 12)
HEADS = 2      # (real: 6)
MLP_RATIO = 4
LN_EPS = 1e-6


# ----------------------------- fused Pallas kernel -----------------------------

def _vit_pair_kernel(patches_ref, patch_w_ref, base_ref,
                     ln1_g_ref, ln1_b_ref, wq_ref, wk_ref, wv_ref,
                     qb_ref, kb_ref, vb_ref, proj_w_ref, proj_b_ref, ls1_ref,
                     ln2_g_ref, ln2_b_ref, fc1_w_ref, fc1_b_ref,
                     fc2_w_ref, fc2_b_ref, ls2_ref,
                     lnf_g_ref, lnf_b_ref,
                     o_ref, tok_scr, *, heads, eps):
    """Grid (pair i, layer d). One image pair per i; one transformer layer per d.

    patches_ref: (2, N, patch_dim) bf16   — x_i / y_i patch slabs (row 0 is a zero CLS slot).
    base_ref:    (N, DIM) f32             — pos_embed (+cls on row 0, +patch_bias on rows 1..).
    per-layer refs: depth axis squeezed by BlockSpec (weight streaming, one layer resident).
    tok_scr:     (2, N, DIM) f32 VMEM scratch — token slab persisted across the depth axis.
    o_ref:       (1, 1, 1) f32            — per-pair sum_d |cls_x - cls_y| (written at last d).
    """
    f32, bf16 = jnp.float32, jnp.bfloat16
    d = pl.program_id(1)

    def ln(x, g, b):
        mu = jnp.mean(x, axis=-1, keepdims=True)
        xc = x - mu
        var = jnp.mean(xc * xc, axis=-1, keepdims=True)
        return xc * jax.lax.rsqrt(var + eps) * g + b

    # ---- d == 0: patch embed + CLS token + positional embedding -> token scratch ----
    @pl.when(d == 0)
    def _():
        base = base_ref[...]                                       # (N, DIM) f32
        for img in range(2):                                       # static unroll of 2
            pe = jnp.dot(patches_ref[img], patch_w_ref[...],
                         preferred_element_type=f32)               # (N, DIM) f32
            tok_scr[img] = pe + base

    # ---- one transformer layer (layer index d comes from the weight BlockSpecs) ----
    dh = wq_ref.shape[-1]
    scale = float(dh) ** -0.5

    ln1_g = ln1_g_ref[...]; ln1_b = ln1_b_ref[...]
    proj_b = proj_b_ref[...]; ls1 = ls1_ref[...]
    ln2_g = ln2_g_ref[...]; ln2_b = ln2_b_ref[...]
    fc1_b = fc1_b_ref[...]; fc2_b = fc2_b_ref[...]; ls2 = ls2_ref[...]

    for img in range(2):                                           # x-image, then y-image
        t = tok_scr[img]                                           # (N, DIM) f32
        h1 = ln(t, ln1_g, ln1_b).astype(bf16)

        def head_body(hd, acc):
            # per-head weights -> q/k/v land lane-dense at offset 0 (no unaligned lane slices)
            q = jnp.dot(h1, wq_ref[hd], preferred_element_type=f32) + qb_ref[hd]
            k = jnp.dot(h1, wk_ref[hd], preferred_element_type=f32) + kb_ref[hd]
            v = jnp.dot(h1, wv_ref[hd], preferred_element_type=f32) + vb_ref[hd]
            s = jax.lax.dot_general(q.astype(bf16), k.astype(bf16),
                                    (((1,), (1,)), ((), ())),
                                    preferred_element_type=f32) * scale   # (N, N) f32
            s = s - jnp.max(s, axis=-1, keepdims=True)
            e = jnp.exp(s)
            p = e * pl.reciprocal(jnp.sum(e, axis=-1, keepdims=True), approx=True)
            o_h = jnp.dot(p.astype(bf16), v.astype(bf16),
                          preferred_element_type=f32)                     # (N, dh)
            # fold heads into the output projection (no lane-axis concat)
            return acc + jnp.dot(o_h.astype(bf16), proj_w_ref[hd],
                                 preferred_element_type=f32)

        attn = jax.lax.fori_loop(0, heads, head_body,
                                 jnp.zeros_like(t), unroll=True)
        t = t + ls1 * (attn + proj_b)                              # residual + LayerScale

        h2 = ln(t, ln2_g, ln2_b)
        m = jnp.dot(h2.astype(bf16), fc1_w_ref[...],
                    preferred_element_type=f32) + fc1_b            # (N, HID) lane-dense
        m = jax.nn.gelu(m, approximate=True)
        m = jnp.dot(m.astype(bf16), fc2_w_ref[...],
                    preferred_element_type=f32) + fc2_b
        tok_scr[img] = t + ls2 * m                                 # residual + LayerScale

    # ---- last layer: final LN on CLS rows + per-pair L1 partial sum ----
    @pl.when(d == pl.num_programs(1) - 1)
    def _():
        tx = tok_scr[0]
        ty = tok_scr[1]
        cls_x = ln(tx[0:1, :], lnf_g_ref[...], lnf_b_ref[...])     # (1, DIM)
        cls_y = ln(ty[0:1, :], lnf_g_ref[...], lnf_b_ref[...])
        diff = jnp.sum(jnp.abs(cls_x - cls_y), axis=-1, keepdims=True)   # (1, 1)
        o_ref[...] = diff[None]                                    # (1, 1, 1)


def vit_pair_loss(patches, base, params):
    """patches: (B, 2, N, patch_dim) bf16; base: (N, DIM) f32. Returns scalar L1 loss."""
    B = patches.shape[0]
    N, dim = base.shape
    blk = params["blocks"]
    depth = blk["wq"].shape[0]

    def const_spec(a):
        nd = a.ndim
        return pl.BlockSpec(a.shape, lambda i, d, _nd=nd: (0,) * _nd)

    def pair_spec(a):       # leading B axis, indexed by pair i, squeezed in-kernel
        nd = a.ndim
        return pl.BlockSpec((pl.Squeezed(),) + tuple(a.shape[1:]),
                            lambda i, d, _nd=nd: (i,) + (0,) * (_nd - 1))

    def layer_spec(a):      # leading DEPTH axis, indexed by layer d (weight streaming)
        nd = a.ndim
        return pl.BlockSpec((pl.Squeezed(),) + tuple(a.shape[1:]),
                            lambda i, d, _nd=nd: (d,) + (0,) * (_nd - 1))

    layer_keys = ("ln1_g", "ln1_b", "wq", "wk", "wv", "qb", "kb", "vb",
                  "proj_w", "proj_b", "ls1", "ln2_g", "ln2_b",
                  "fc1_w", "fc1_b", "fc2_w", "fc2_b", "ls2")

    inputs = ([patches, params["patch_w"], base]
              + [blk[k] for k in layer_keys]
              + [params["ln_g"], params["ln_b"]])
    in_specs = ([pair_spec(patches), const_spec(params["patch_w"]), const_spec(base)]
                + [layer_spec(blk[k]) for k in layer_keys]
                + [const_spec(params["ln_g"]), const_spec(params["ln_b"])])

    out = pl.pallas_call(
        functools.partial(_vit_pair_kernel, heads=HEADS, eps=LN_EPS),
        out_shape=jax.ShapeDtypeStruct((B, 1, 1), jnp.float32),
        grid=(B, depth),
        in_specs=in_specs,
        out_specs=pl.BlockSpec((1, 1, 1), lambda i, d: (i, 0, 0)),
        scratch_shapes=[pltpu.VMEM((2, N, dim), jnp.float32)],
        compiler_params=pltpu.CompilerParams(
            dimension_semantics=("parallel", "arbitrary")),
    )(*inputs)

    # tiny scalar glue: mean over (B, DIM) feature elements == torch F.l1_loss
    return jnp.sum(out) / (B * dim)


# -------------------------- synthetic DINOv2-ish ViT --------------------------

def init_params(key, num_patches):
    """Kernel-ready layout: DEPTH-stacked per-layer params, per-head Wq/Wk/Wv/proj,
    bf16 matmul weights, (1, X)-shaped biases/LN params."""
    patch_dim = IN_CH * PATCH * PATCH
    hidden = DIM * MLP_RATIO
    dh = DIM // HEADS
    keys = jax.random.split(key, 4 + DEPTH)
    w = lambda k, shape: (0.02 * jax.random.normal(k, shape)).astype(jnp.float32)

    blocks = []
    for d in range(DEPTH):
        bk = jax.random.split(keys[4 + d], 4)
        qkv_w = w(bk[0], (DIM, 3 * DIM))
        # split the fused QKV into per-head Wq/Wk/Wv -> lane-dense per-head slabs in-kernel
        wq = qkv_w[:, 0 * DIM:1 * DIM].reshape(DIM, HEADS, dh).transpose(1, 0, 2)
        wk = qkv_w[:, 1 * DIM:2 * DIM].reshape(DIM, HEADS, dh).transpose(1, 0, 2)
        wv = qkv_w[:, 2 * DIM:3 * DIM].reshape(DIM, HEADS, dh).transpose(1, 0, 2)
        proj_w = w(bk[1], (DIM, DIM)).reshape(HEADS, dh, DIM)
        blocks.append({
            "ln1_g": jnp.ones((1, DIM), jnp.float32),
            "ln1_b": jnp.zeros((1, DIM), jnp.float32),
            "wq": wq, "wk": wk, "wv": wv,
            "qb": jnp.zeros((HEADS, 1, dh), jnp.float32),
            "kb": jnp.zeros((HEADS, 1, dh), jnp.float32),
            "vb": jnp.zeros((HEADS, 1, dh), jnp.float32),
            "proj_w": proj_w,
            "proj_b": jnp.zeros((1, DIM), jnp.float32),
            "ls1": jnp.ones((1, DIM), jnp.float32),    # DINOv2 LayerScale (synthetic init = 1)
            "ln2_g": jnp.ones((1, DIM), jnp.float32),
            "ln2_b": jnp.zeros((1, DIM), jnp.float32),
            "fc1_w": w(bk[2], (DIM, hidden)),
            "fc1_b": jnp.zeros((1, hidden), jnp.float32),
            "fc2_w": w(bk[3], (hidden, DIM)),
            "fc2_b": jnp.zeros((1, DIM), jnp.float32),
            "ls2": jnp.ones((1, DIM), jnp.float32),
        })
    stacked = {k: jnp.stack([b[k] for b in blocks]) for k in blocks[0]}
    for k in ("wq", "wk", "wv", "proj_w", "fc1_w", "fc2_w"):
        stacked[k] = stacked[k].astype(jnp.bfloat16)   # MXU-native, half the weight DMA

    return {
        "patch_w": w(keys[0], (patch_dim, DIM)).astype(jnp.bfloat16),
        "patch_b": jnp.zeros((1, DIM), jnp.float32),
        "cls_token": w(keys[1], (1, 1, DIM)),
        "pos_embed": w(keys[2], (1, num_patches + 1, DIM)),
        "ln_g": jnp.ones((1, DIM), jnp.float32),
        "ln_b": jnp.zeros((1, DIM), jnp.float32),
        "blocks": stacked,
    }


def semantic_loss(params, x, y):
    """x, y: (B, C, H, W) NCHW (like the PyTorch module) -> scalar L1 between CLS features."""
    B, C, H, W = x.shape
    P = PATCH
    nh, nw = H // P, W // P
    Np = nh * nw
    N = Np + 1
    patch_dim = C * P * P

    # Pair x_i with y_i on a new axis so one grid step handles one image pair.
    xy = jnp.stack([x, y], axis=1)                                  # (B, 2, C, H, W)

    # Patchify (glue): conv(kernel=14, stride=14) == matmul over flattened patches.
    patches = (xy.reshape(B, 2, C, nh, P, nw, P)
                 .transpose(0, 1, 3, 5, 2, 4, 6)
                 .reshape(B, 2, Np, patch_dim))
    # Prepend a zero "CLS slot" row so the in-kernel token-slab write is a single aligned block.
    patches = jnp.concatenate(
        [jnp.zeros((B, 2, 1, patch_dim), patches.dtype), patches], axis=2)   # (B, 2, N, pd)
    patches = patches.astype(jnp.bfloat16)          # halve the dominant HBM->VMEM stream

    # base[0] = cls + pos[0]; base[1:] = pos[1:] + patch_bias  (patch bias folded here so the
    # zero CLS-slot row of `patches` stays exact).
    pos = params["pos_embed"][0]                                    # (N, DIM)
    base = pos.at[0].add(params["cls_token"][0, 0])
    base = base.at[1:].add(params["patch_b"][0])

    return vit_pair_loss(patches, base, params)


# ---------------------------------- main ----------------------------------

if __name__ == "__main__":
    key = jax.random.PRNGKey(0)
    kx, ky, kp = jax.random.split(key, 3)

    B, H, W = 2, 28, 28  # 2x2 = 4 patches of 14x14 per image
    x = jax.random.normal(kx, (B, IN_CH, H, W), dtype=jnp.float32)
    y = jax.random.normal(ky, (B, IN_CH, H, W), dtype=jnp.float32)

    num_patches = (H // PATCH) * (W // PATCH)
    params = init_params(kp, num_patches)

    loss = jax.jit(semantic_loss)(params, x, y)
    jax.block_until_ready(loss)
    assert loss.shape == () and jnp.isfinite(loss)
    print("KERNEL_OK")
</pallas_src>

<mosaic_0001>
module attributes {stable_mosaic.version = 11 : i64} {
  func.func @_vit_pair_kernel(%arg0: i32, %arg1: i32, %arg2: memref<1x2x5x588xbf16, #tpu.memory_space<vmem>>, %arg3: memref<588x32xbf16, #tpu.memory_space<vmem>>, %arg4: memref<5x32xf32, #tpu.memory_space<vmem>>, %arg5: memref<1x1x32xf32, #tpu.memory_space<vmem>>, %arg6: memref<1x1x32xf32, #tpu.memory_space<vmem>>, %arg7: memref<1x2x32x16xbf16, #tpu.memory_space<vmem>>, %arg8: memref<1x2x32x16xbf16, #tpu.memory_space<vmem>>, %arg9: memref<1x2x32x16xbf16, #tpu.memory_space<vmem>>, %arg10: memref<1x2x1x16xf32, #tpu.memory_space<vmem>>, %arg11: memref<1x2x1x16xf32, #tpu.memory_space<vmem>>, %arg12: memref<1x2x1x16xf32, #tpu.memory_space<vmem>>, %arg13: memref<1x2x16x32xbf16, #tpu.memory_space<vmem>>, %arg14: memref<1x1x32xf32, #tpu.memory_space<vmem>>, %arg15: memref<1x1x32xf32, #tpu.memory_space<vmem>>, %arg16: memref<1x1x32xf32, #tpu.memory_space<vmem>>, %arg17: memref<1x1x32xf32, #tpu.memory_space<vmem>>, %arg18: memref<1x32x128xbf16, #tpu.memory_space<vmem>>, %arg19: memref<1x1x128xf32, #tpu.memory_space<vmem>>, %arg20: memref<1x128x32xbf16, #tpu.memory_space<vmem>>, %arg21: memref<1x1x32xf32, #tpu.memory_space<vmem>>, %arg22: memref<1x1x32xf32, #tpu.memory_space<vmem>>, %arg23: memref<1x32xf32, #tpu.memory_space<vmem>>, %arg24: memref<1x32xf32, #tpu.memory_space<vmem>>, %arg25: memref<1x1x1xf32, #tpu.memory_space<vmem>>, %arg26: memref<2x5x32xf32, #tpu.memory_space<vmem>>) attributes {dimension_semantics = [#tpu.dimension_semantics<parallel>, #tpu.dimension_semantics<arbitrary>], iteration_bounds = array<i64: 2, 2>, scalar_prefetch = 0 : i64, scratch_operands = 1 : i64, tpu.core_type = #tpu.core_type<tc>, window_params = [{transform_indices = @transform_0, window_bounds = array<i64: 1, 2, 5, 588>}, {pipeline_mode = #tpu.pipeline_mode<synchronous>, transform_indices = @transform_1, window_bounds = array<i64: 588, 32>}, {pipeline_mode = #tpu.pipeline_mode<synchronous>, transform_indices = @transform_2, window_bounds = array<i64: 5, 32>}, {transform_indices = @transform_3, window_bounds = array<i64: 1, 1, 32>}, {transform_indices = @transform_4, window_bounds = array<i64: 1, 1, 32>}, {transform_indices = @transform_5, window_bounds = array<i64: 1, 2, 32, 16>}, {transform_indices = @transform_6, window_bounds = array<i64: 1, 2, 32, 16>}, {transform_indices = @transform_7, window_bounds = array<i64: 1, 2, 32, 16>}, {transform_indices = @transform_8, window_bounds = array<i64: 1, 2, 1, 16>}, {transform_indices = @transform_9, window_bounds = array<i64: 1, 2, 1, 16>}, {transform_indices = @transform_10, window_bounds = array<i64: 1, 2, 1, 16>}, {transform_indices = @transform_11, window_bounds = array<i64: 1, 2, 16, 32>}, {transform_indices = @transform_12, window_bounds = array<i64: 1, 1, 32>}, {transform_indices = @transform_13, window_bounds = array<i64: 1, 1, 32>}, {transform_indices = @transform_14, window_bounds = array<i64: 1, 1, 32>}, {transform_indices = @transform_15, window_bounds = array<i64: 1, 1, 32>}, {transform_indices = @transform_16, window_bounds = array<i64: 1, 32, 128>}, {transform_indices = @transform_17, window_bounds = array<i64: 1, 1, 128>}, {transform_indices = @transform_18, window_bounds = array<i64: 1, 128, 32>}, {transform_indices = @transform_19, window_bounds = array<i64: 1, 1, 32>}, {transform_indices = @transform_20, window_bounds = array<i64: 1, 1, 32>}, {pipeline_mode = #tpu.pipeline_mode<synchronous>, transform_indices = @transform_21, window_bounds = array<i64: 1, 32>}, {pipeline_mode = #tpu.pipeline_mode<synchronous>, transform_indices = @transform_22, window_bounds = array<i64: 1, 32>}, {transform_indices = @transform_23, window_bounds = array<i64: 1, 1, 1>}]} {
    %c0_i32 = arith.constant 0 : i32
    %0 = arith.cmpi eq, %arg1, %c0_i32 : i32
    %1 = arith.extui %0 : i1 to i32
    %c0_i32_0 = arith.constant 0 : i32
    %2 = arith.cmpi ne, %1, %c0_i32_0 : i32
    scf.if %2 {
      %c0_209 = arith.constant 0 : index
      %c0_210 = arith.constant 0 : index
      %388 = vector.load %arg4[%c0_209, %c0_210] : memref<5x32xf32, #tpu.memory_space<vmem>>, vector<5x32xf32>
      %c0_211 = arith.constant 0 : index
      %c0_212 = arith.constant 0 : index
      %c0_213 = arith.constant 0 : index
      %c0_214 = arith.constant 0 : index
      %389 = vector.load %arg2[%c0_211, %c0_212, %c0_213, %c0_214] : memref<1x2x5x588xbf16, #tpu.memory_space<vmem>>, vector<1x1x5x588xbf16>
      %390 = vector.shape_cast %389 : vector<1x1x5x588xbf16> to vector<5x588xbf16>
      %c0_215 = arith.constant 0 : index
      %c0_216 = arith.constant 0 : index
      %391 = vector.load %arg3[%c0_215, %c0_216] : memref<588x32xbf16, #tpu.memory_space<vmem>>, vector<588x32xbf16>
      %cst_217 = arith.constant dense<0.000000e+00> : vector<5x32xf32>
      %392 = tpu.matmul %390, %391, %cst_217 {dimension_numbers = #tpu.dot_dimension_numbers<[1], [0], [0], [1], [0, 0, 1, 1], [], []>} : vector<5x588xbf16>, vector<588x32xbf16>, vector<5x32xf32> -> vector<5x32xf32>
      %393 = arith.addf %392, %388 : vector<5x32xf32>
      %c0_218 = arith.constant 0 : index
      %c0_219 = arith.constant 0 : index
      %c0_220 = arith.constant 0 : index
      %394 = vector.load %arg26[%c0_218, %c0_219, %c0_220] : memref<2x5x32xf32, #tpu.memory_space<vmem>>, vector<1x5x32xf32>
      %395 = vector.shape_cast %394 : vector<1x5x32xf32> to vector<5x32xf32>
      %396 = vector.shape_cast %393 : vector<5x32xf32> to vector<1x5x32xf32>
      tpu.vector_store %arg26[%c0_218, %c0_219, %c0_220], %396 {strides = array<i32>} : memref<2x5x32xf32, #tpu.memory_space<vmem>>, vector<1x5x32xf32>,
      %c0_221 = arith.constant 0 : index
      %c1_222 = arith.constant 1 : index
      %c0_223 = arith.constant 0 : index
      %c0_224 = arith.constant 0 : index
      %397 = vector.load %arg2[%c0_221, %c1_222, %c0_223, %c0_224] : memref<1x2x5x588xbf16, #tpu.memory_space<vmem>>, vector<1x1x5x588xbf16>
      %398 = vector.shape_cast %397 : vector<1x1x5x588xbf16> to vector<5x588xbf16>
      %c0_225 = arith.constant 0 : index
      %c0_226 = arith.constant 0 : index
      %399 = vector.load %arg3[%c0_225, %c0_226] : memref<588x32xbf16, #tpu.memory_space<vmem>>, vector<588x32xbf16>
      %cst_227 = arith.constant dense<0.000000e+00> : vector<5x32xf32>
      %400 = tpu.matmul %398, %399, %cst_227 {dimension_numbers = #tpu.dot_dimension_numbers<[1], [0], [0], [1], [0, 0, 1, 1], [], []>} : vector<5x588xbf16>, vector<588x32xbf16>, vector<5x32xf32> -> vector<5x32xf32>
      %401 = arith.addf %400, %388 : vector<5x32xf32>
      %c1_228 = arith.constant 1 : index
      %c0_229 = arith.constant 0 : index
      %c0_230 = arith.constant 0 : index
      %402 = vector.load %arg26[%c1_228, %c0_229, %c0_230] : memref<2x5x32xf32, #tpu.memory_space<vmem>>, vector<1x5x32xf32>
      %403 = vector.shape_cast %402 : vector<1x5x32xf32> to vector<5x32xf32>
      %404 = vector.shape_cast %401 : vector<5x32xf32> to vector<1x5x32xf32>
      tpu.vector_store %arg26[%c1_228, %c0_229, %c0_230], %404 {strides = array<i32>} : memref<2x5x32xf32, #tpu.memory_space<vmem>>, vector<1x5x32xf32>,
    } else {
    }
    %c0 = arith.constant 0 : index
    %c0_1 = arith.constant 0 : index
    %c0_2 = arith.constant 0 : index
    %3 = vector.load %arg5[%c0, %c0_1, %c0_2] : memref<1x1x32xf32, #tpu.memory_space<vmem>>, vector<1x1x32xf32>
    %4 = vector.shape_cast %3 : vector<1x1x32xf32> to vector<1x32xf32>
    %c0_3 = arith.constant 0 : index
    %c0_4 = arith.constant 0 : index
    %c0_5 = arith.constant 0 : index
    %5 = vector.load %arg6[%c0_3, %c0_4, %c0_5] : memref<1x1x32xf32, #tpu.memory_space<vmem>>, vector<1x1x32xf32>
    %6 = vector.shape_cast %5 : vector<1x1x32xf32> to vector<1x32xf32>
    %c0_6 = arith.constant 0 : index
    %c0_7 = arith.constant 0 : index
    %c0_8 = arith.constant 0 : index
    %7 = vector.load %arg14[%c0_6, %c0_7, %c0_8] : memref<1x1x32xf32, #tpu.memory_space<vmem>>, vector<1x1x32xf32>
    %8 = vector.shape_cast %7 : vector<1x1x32xf32> to vector<1x32xf32>
    %c0_9 = arith.constant 0 : index
    %c0_10 = arith.constant 0 : index
    %c0_11 = arith.constant 0 : index
    %9 = vector.load %arg15[%c0_9, %c0_10, %c0_11] : memref<1x1x32xf32, #tpu.memory_space<vmem>>, vector<1x1x32xf32>
    %10 = vector.shape_cast %9 : vector<1x1x32xf32> to vector<1x32xf32>
    %c0_12 = arith.constant 0 : index
    %c0_13 = arith.constant 0 : index
    %c0_14 = arith.constant 0 : index
    %11 = vector.load %arg16[%c0_12, %c0_13, %c0_14] : memref<1x1x32xf32, #tpu.memory_space<vmem>>, vector<1x1x32xf32>
    %12 = vector.shape_cast %11 : vector<1x1x32xf32> to vector<1x32xf32>
    %c0_15 = arith.constant 0 : index
    %c0_16 = arith.constant 0 : index
    %c0_17 = arith.constant 0 : index
    %13 = vector.load %arg17[%c0_15, %c0_16, %c0_17] : memref<1x1x32xf32, #tpu.memory_space<vmem>>, vector<1x1x32xf32>
    %14 = vector.shape_cast %13 : vector<1x1x32xf32> to vector<1x32xf32>
    %c0_18 = arith.constant 0 : index
    %c0_19 = arith.constant 0 : index
    %c0_20 = arith.constant 0 : index
    %15 = vector.load %arg19[%c0_18, %c0_19, %c0_20] : memref<1x1x128xf32, #tpu.memory_space<vmem>>, vector<1x1x128xf32>
    %16 = vector.shape_cast %15 : vector<1x1x128xf32> to vector<1x128xf32>
    %c0_21 = arith.constant 0 : index
    %c0_22 = arith.constant 0 : index
    %c0_23 = arith.constant 0 : index
    %17 = vector.load %arg21[%c0_21, %c0_22, %c0_23] : memref<1x1x32xf32, #tpu.memory_space<vmem>>, vector<1x1x32xf32>
    %18 = vector.shape_cast %17 : vector<1x1x32xf32> to vector<1x32xf32>
    %c0_24 = arith.constant 0 : index
    %c0_25 = arith.constant 0 : index
    %c0_26 = arith.constant 0 : index
    %19 = vector.load %arg22[%c0_24, %c0_25, %c0_26] : memref<1x1x32xf32, #tpu.memory_space<vmem>>, vector<1x1x32xf32>
    %20 = vector.shape_cast %19 : vector<1x1x32xf32> to vector<1x32xf32>
    %c0_27 = arith.constant 0 : index
    %c0_28 = arith.constant 0 : index
    %c0_29 = arith.constant 0 : index
    %21 = vector.load %arg26[%c0_27, %c0_28, %c0_29] : memref<2x5x32xf32, #tpu.memory_space<vmem>>, vector<1x5x32xf32>
    %22 = vector.shape_cast %21 : vector<1x5x32xf32> to vector<5x32xf32>
    %cst = arith.constant dense<0.000000e+00> : vector<5xf32>
    %23 = vector.multi_reduction <add>, %22, %cst [1] : vector<5x32xf32> to vector<5xf32>
    %24 = vector.shape_cast %23 : vector<5xf32> to vector<5x1xf32>
    %cst_30 = arith.constant 3.200000e+01 : f32
    %25 = vector.broadcast %cst_30 : f32 to vector<5x1xf32>
    %26 = arith.divf %24, %25 : vector<5x1xf32>
    %27 = vector.broadcast %26 : vector<5x1xf32> to vector<5x32xf32>
    %28 = arith.subf %22, %27 : vector<5x32xf32>
    %29 = arith.mulf %28, %28 : vector<5x32xf32>
    %cst_31 = arith.constant dense<0.000000e+00> : vector<5xf32>
    %30 = vector.multi_reduction <add>, %29, %cst_31 [1] : vector<5x32xf32> to vector<5xf32>
    %31 = vector.shape_cast %30 : vector<5xf32> to vector<5x1xf32>
    %cst_32 = arith.constant 3.200000e+01 : f32
    %32 = vector.broadcast %cst_32 : f32 to vector<5x1xf32>
    %33 = arith.divf %31, %32 : vector<5x1xf32>
    %cst_33 = arith.constant 9.99999997E-7 : f32
    %34 = vector.broadcast %cst_33 : f32 to vector<5x1xf32>
    %35 = arith.addf %33, %34 : vector<5x1xf32>
    %36 = math.rsqrt %35 : vector<5x1xf32>
    %37 = vector.broadcast %36 : vector<5x1xf32> to vector<5x32xf32>
    %38 = arith.mulf %28, %37 : vector<5x32xf32>
    %39 = vector.broadcast %4 : vector<1x32xf32> to vector<5x32xf32>
    %40 = arith.mulf %38, %39 : vector<5x32xf32>
    %41 = vector.broadcast %6 : vector<1x32xf32> to vector<5x32xf32>
    %42 = arith.addf %40, %41 : vector<5x32xf32>
    %43 = arith.truncf %42 : vector<5x32xf32> to vector<5x32xbf16>
    %cst_34 = arith.constant 0.000000e+00 : f32
    %44 = vector.broadcast %cst_34 : f32 to vector<5x32xf32>
    %c0_i32_35 = arith.constant 0 : i32
    %c0_36 = arith.constant 0 : index
    %45 = arith.index_cast %c0_i32_35 : i32 to index
    %c0_37 = arith.constant 0 : index
    %c0_38 = arith.constant 0 : index
    %46 = vector.load %arg7[%c0_36, %45, %c0_37, %c0_38] : memref<1x2x32x16xbf16, #tpu.memory_space<vmem>>, vector<1x1x32x16xbf16>
    %47 = vector.shape_cast %46 : vector<1x1x32x16xbf16> to vector<32x16xbf16>
    %cst_39 = arith.constant dense<0.000000e+00> : vector<5x16xf32>
    %48 = tpu.matmul %43, %47, %cst_39 {dimension_numbers = #tpu.dot_dimension_numbers<[1], [0], [0], [1], [0, 0, 1, 1], [], []>} : vector<5x32xbf16>, vector<32x16xbf16>, vector<5x16xf32> -> vector<5x16xf32>
    %c0_40 = arith.constant 0 : index
    %49 = arith.index_cast %c0_i32_35 : i32 to index
    %c0_41 = arith.constant 0 : index
    %c0_42 = arith.constant 0 : index
    %50 = vector.load %arg10[%c0_40, %49, %c0_41, %c0_42] : memref<1x2x1x16xf32, #tpu.memory_space<vmem>>, vector<1x1x1x16xf32>
    %51 = vector.shape_cast %50 : vector<1x1x1x16xf32> to vector<1x16xf32>
    %52 = vector.broadcast %51 : vector<1x16xf32> to vector<5x16xf32>
    %53 = arith.addf %48, %52 : vector<5x16xf32>
    %c0_43 = arith.constant 0 : index
    %54 = arith.index_cast %c0_i32_35 : i32 to index
    %c0_44 = arith.constant 0 : index
    %c0_45 = arith.constant 0 : index
    %55 = vector.load %arg8[%c0_43, %54, %c0_44, %c0_45] : memref<1x2x32x16xbf16, #tpu.memory_space<vmem>>, vector<1x1x32x16xbf16>
    %56 = vector.shape_cast %55 : vector<1x1x32x16xbf16> to vector<32x16xbf16>
    %cst_46 = arith.constant dense<0.000000e+00> : vector<5x16xf32>
    %57 = tpu.matmul %43, %56, %cst_46 {dimension_numbers = #tpu.dot_dimension_numbers<[1], [0], [0], [1], [0, 0, 1, 1], [], []>} : vector<5x32xbf16>, vector<32x16xbf16>, vector<5x16xf32> -> vector<5x16xf32>
    %c0_47 = arith.constant 0 : index
    %58 = arith.index_cast %c0_i32_35 : i32 to index
    %c0_48 = arith.constant 0 : index
    %c0_49 = arith.constant 0 : index
    %59 = vector.load %arg11[%c0_47, %58, %c0_48, %c0_49] : memref<1x2x1x16xf32, #tpu.memory_space<vmem>>, vector<1x1x1x16xf32>
    %60 = vector.shape_cast %59 : vector<1x1x1x16xf32> to vector<1x16xf32>
    %61 = vector.broadcast %60 : vector<1x16xf32> to vector<5x16xf32>
    %62 = arith.addf %57, %61 : vector<5x16xf32>
    %c0_50 = arith.constant 0 : index
    %63 = arith.index_cast %c0_i32_35 : i32 to index
    %c0_51 = arith.constant 0 : index
    %c0_52 = arith.constant 0 : index
    %64 = vector.load %arg9[%c0_50, %63, %c0_51, %c0_52] : memref<1x2x32x16xbf16, #tpu.memory_space<vmem>>, vector<1x1x32x16xbf16>
    %65 = vector.shape_cast %64 : vector<1x1x32x16xbf16> to vector<32x16xbf16>
    %cst_53 = arith.constant dense<0.000000e+00> : vector<5x16xf32>
    %66 = tpu.matmul %43, %65, %cst_53 {dimension_numbers = #tpu.dot_dimension_numbers<[1], [0], [0], [1], [0, 0, 1, 1], [], []>} : vector<5x32xbf16>, vector<32x16xbf16>, vector<5x16xf32> -> vector<5x16xf32>
    %c0_54 = arith.constant 0 : index
    %67 = arith.index_cast %c0_i32_35 : i32 to index
    %c0_55 = arith.constant 0 : index
    %c0_56 = arith.constant 0 : index
    %68 = vector.load %arg12[%c0_54, %67, %c0_55, %c0_56] : memref<1x2x1x16xf32, #tpu.memory_space<vmem>>, vector<1x1x1x16xf32>
    %69 = vector.shape_cast %68 : vector<1x1x1x16xf32> to vector<1x16xf32>
    %70 = vector.broadcast %69 : vector<1x16xf32> to vector<5x16xf32>
    %71 = arith.addf %66, %70 : vector<5x16xf32>
    %72 = arith.truncf %53 : vector<5x16xf32> to vector<5x16xbf16>
    %73 = arith.truncf %62 : vector<5x16xf32> to vector<5x16xbf16>
    %cst_57 = arith.constant dense<0.000000e+00> : vector<5x5xf32>
    %74 = tpu.matmul %72, %73, %cst_57 {dimension_numbers = #tpu.dot_dimension_numbers<[1], [1], [0], [0], [0, 0, 1, 0], [], []>} : vector<5x16xbf16>, vector<5x16xbf16>, vector<5x5xf32> -> vector<5x5xf32>
    %cst_58 = arith.constant 2.500000e-01 : f32
    %75 = vector.broadcast %cst_58 : f32 to vector<5x5xf32>
    %76 = arith.mulf %74, %75 : vector<5x5xf32>
    %cst_59 = arith.constant dense<0xFF800000> : vector<5xf32>
    %77 = vector.multi_reduction <maximumf>, %76, %cst_59 [1] : vector<5x5xf32> to vector<5xf32>
    %78 = vector.shape_cast %77 : vector<5xf32> to vector<5x1xf32>
    %79 = vector.broadcast %78 : vector<5x1xf32> to vector<5x5xf32>
    %80 = arith.subf %76, %79 : vector<5x5xf32>
    %81 = math.exp %80 : vector<5x5xf32>
    %cst_60 = arith.constant dense<0.000000e+00> : vector<5xf32>
    %82 = vector.multi_reduction <add>, %81, %cst_60 [1] : vector<5x5xf32> to vector<5xf32>
    %83 = vector.shape_cast %82 : vector<5xf32> to vector<5x1xf32>
    %84 = tpu.reciprocal %83 {approx = true} : vector<5x1xf32> -> vector<5x1xf32>
    %85 = vector.broadcast %84 : vector<5x1xf32> to vector<5x5xf32>
    %86 = arith.mulf %81, %85 : vector<5x5xf32>
    %87 = arith.truncf %86 : vector<5x5xf32> to vector<5x5xbf16>
    %88 = arith.truncf %71 : vector<5x16xf32> to vector<5x16xbf16>
    %cst_61 = arith.constant dense<0.000000e+00> : vector<5x16xf32>
    %89 = tpu.matmul %87, %88, %cst_61 {dimension_numbers = #tpu.dot_dimension_numbers<[1], [0], [0], [1], [0, 0, 1, 1], [], []>} : vector<5x5xbf16>, vector<5x16xbf16>, vector<5x16xf32> -> vector<5x16xf32>
    %90 = arith.truncf %89 : vector<5x16xf32> to vector<5x16xbf16>
    %c0_62 = arith.constant 0 : index
    %91 = arith.index_cast %c0_i32_35 : i32 to index
    %c0_63 = arith.constant 0 : index
    %c0_64 = arith.constant 0 : index
    %92 = vector.load %arg13[%c0_62, %91, %c0_63, %c0_64] : memref<1x2x16x32xbf16, #tpu.memory_space<vmem>>, vector<1x1x16x32xbf16>
    %93 = vector.shape_cast %92 : vector<1x1x16x32xbf16> to vector<16x32xbf16>
    %cst_65 = arith.constant dense<0.000000e+00> : vector<5x32xf32>
    %94 = tpu.matmul %90, %93, %cst_65 {dimension_numbers = #tpu.dot_dimension_numbers<[1], [0], [0], [1], [0, 0, 1, 1], [], []>} : vector<5x16xbf16>, vector<16x32xbf16>, vector<5x32xf32> -> vector<5x32xf32>
    %95 = arith.addf %44, %94 : vector<5x32xf32>
    %c1_i32 = arith.constant 1 : i32
    %c0_66 = arith.constant 0 : index
    %96 = arith.index_cast %c1_i32 : i32 to index
    %c0_67 = arith.constant 0 : index
    %c0_68 = arith.constant 0 : index
    %97 = vector.load %arg7[%c0_66, %96, %c0_67, %c0_68] : memref<1x2x32x16xbf16, #tpu.memory_space<vmem>>, vector<1x1x32x16xbf16>
    %98 = vector.shape_cast %97 : vector<1x1x32x16xbf16> to vector<32x16xbf16>
    %cst_69 = arith.constant dense<0.000000e+00> : vector<5x16xf32>
    %99 = tpu.matmul %43, %98, %cst_69 {dimension_numbers = #tpu.dot_dimension_numbers<[1], [0], [0], [1], [0, 0, 1, 1], [], []>} : vector<5x32xbf16>, vector<32x16xbf16>, vector<5x16xf32> -> vector<5x16xf32>
    %c0_70 = arith.constant 0 : index
    %100 = arith.index_cast %c1_i32 : i32 to index
    %c0_71 = arith.constant 0 : index
    %c0_72 = arith.constant 0 : index
    %101 = vector.load %arg10[%c0_70, %100, %c0_71, %c0_72] : memref<1x2x1x16xf32, #tpu.memory_space<vmem>>, vector<1x1x1x16xf32>
    %102 = vector.shape_cast %101 : vector<1x1x1x16xf32> to vector<1x16xf32>
    %103 = vector.broadcast %102 : vector<1x16xf32> to vector<5x16xf32>
    %104 = arith.addf %99, %103 : vector<5x16xf32>
    %c0_73 = arith.constant 0 : index
    %105 = arith.index_cast %c1_i32 : i32 to index
    %c0_74 = arith.constant 0 : index
    %c0_75 = arith.constant 0 : index
    %106 = vector.load %arg8[%c0_73, %105, %c0_74, %c0_75] : memref<1x2x32x16xbf16, #tpu.memory_space<vmem>>, vector<1x1x32x16xbf16>
    %107 = vector.shape_cast %106 : vector<1x1x32x16xbf16> to vector<32x16xbf16>
    %cst_76 = arith.constant dense<0.000000e+00> : vector<5x16xf32>
    %108 = tpu.matmul %43, %107, %cst_76 {dimension_numbers = #tpu.dot_dimension_numbers<[1], [0], [0], [1], [0, 0, 1, 1], [], []>} : vector<5x32xbf16>, vector<32x16xbf16>, vector<5x16xf32> -> vector<5x16xf32>
    %c0_77 = arith.constant 0 : index
    %109 = arith.index_cast %c1_i32 : i32 to index
    %c0_78 = arith.constant 0 : index
    %c0_79 = arith.constant 0 : index
    %110 = vector.load %arg11[%c0_77, %109, %c0_78, %c0_79] : memref<1x2x1x16xf32, #tpu.memory_space<vmem>>, vector<1x1x1x16xf32>
    %111 = vector.shape_cast %110 : vector<1x1x1x16xf32> to vector<1x16xf32>
    %112 = vector.broadcast %111 : vector<1x16xf32> to vector<5x16xf32>
    %113 = arith.addf %108, %112 : vector<5x16xf32>
    %c0_80 = arith.constant 0 : index
    %114 = arith.index_cast %c1_i32 : i32 to index
    %c0_81 = arith.constant 0 : index
    %c0_82 = arith.constant 0 : index
    %115 = vector.load %arg9[%c0_80, %114, %c0_81, %c0_82] : memref<1x2x32x16xbf16, #tpu.memory_space<vmem>>, vector<1x1x32x16xbf16>
    %116 = vector.shape_cast %115 : vector<1x1x32x16xbf16> to vector<32x16xbf16>
    %cst_83 = arith.constant dense<0.000000e+00> : vector<5x16xf32>
    %117 = tpu.matmul %43, %116, %cst_83 {dimension_numbers = #tpu.dot_dimension_numbers<[1], [0], [0], [1], [0, 0, 1, 1], [], []>} : vector<5x32xbf16>, vector<32x16xbf16>, vector<5x16xf32> -> vector<5x16xf32>
    %c0_84 = arith.constant 0 : index
    %118 = arith.index_cast %c1_i32 : i32 to index
    %c0_85 = arith.constant 0 : index
    %c0_86 = arith.constant 0 : index
    %119 = vector.load %arg12[%c0_84, %118, %c0_85, %c0_86] : memref<1x2x1x16xf32, #tpu.memory_space<vmem>>, vector<1x1x1x16xf32>
    %120 = vector.shape_cast %119 : vector<1x1x1x16xf32> to vector<1x16xf32>
    %121 = vector.broadcast %120 : vector<1x16xf32> to vector<5x16xf32>
    %122 = arith.addf %117, %121 : vector<5x16xf32>
    %123 = arith.truncf %104 : vector<5x16xf32> to vector<5x16xbf16>
    %124 = arith.truncf %113 : vector<5x16xf32> to vector<5x16xbf16>
    %cst_87 = arith.constant dense<0.000000e+00> : vector<5x5xf32>
    %125 = tpu.matmul %123, %124, %cst_87 {dimension_numbers = #tpu.dot_dimension_numbers<[1], [1], [0], [0], [0, 0, 1, 0], [], []>} : vector<5x16xbf16>, vector<5x16xbf16>, vector<5x5xf32> -> vector<5x5xf32>
    %cst_88 = arith.constant 2.500000e-01 : f32
    %126 = vector.broadcast %cst_88 : f32 to vector<5x5xf32>
    %127 = arith.mulf %125, %126 : vector<5x5xf32>
    %cst_89 = arith.constant dense<0xFF800000> : vector<5xf32>
    %128 = vector.multi_reduction <maximumf>, %127, %cst_89 [1] : vector<5x5xf32> to vector<5xf32>
    %129 = vector.shape_cast %128 : vector<5xf32> to vector<5x1xf32>
    %130 = vector.broadcast %129 : vector<5x1xf32> to vector<5x5xf32>
    %131 = arith.subf %127, %130 : vector<5x5xf32>
    %132 = math.exp %131 : vector<5x5xf32>
    %cst_90 = arith.constant dense<0.000000e+00> : vector<5xf32>
    %133 = vector.multi_reduction <add>, %132, %cst_90 [1] : vector<5x5xf32> to vector<5xf32>
    %134 = vector.shape_cast %133 : vector<5xf32> to vector<5x1xf32>
    %135 = tpu.reciprocal %134 {approx = true} : vector<5x1xf32> -> vector<5x1xf32>
    %136 = vector.broadcast %135 : vector<5x1xf32> to vector<5x5xf32>
    %137 = arith.mulf %132, %136 : vector<5x5xf32>
    %138 = arith.truncf %137 : vector<5x5xf32> to vector<5x5xbf16>
    %139 = arith.truncf %122 : vector<5x16xf32> to vector<5x16xbf16>
    %cst_91 = arith.constant dense<0.000000e+00> : vector<5x16xf32>
    %140 = tpu.matmul %138, %139, %cst_91 {dimension_numbers = #tpu.dot_dimension_numbers<[1], [0], [0], [1], [0, 0, 1, 1], [], []>} : vector<5x5xbf16>, vector<5x16xbf16>, vector<5x16xf32> -> vector<5x16xf32>
    %141 = arith.truncf %140 : vector<5x16xf32> to vector<5x16xbf16>
    %c0_92 = arith.constant 0 : index
    %142 = arith.index_cast %c1_i32 : i32 to index
    %c0_93 = arith.constant 0 : index
    %c0_94 = arith.constant 0 : index
    %143 = vector.load %arg13[%c0_92, %142, %c0_93, %c0_94] : memref<1x2x16x32xbf16, #tpu.memory_space<vmem>>, vector<1x1x16x32xbf16>
    %144 = vector.shape_cast %143 : vector<1x1x16x32xbf16> to vector<16x32xbf16>
    %cst_95 = arith.constant dense<0.000000e+00> : vector<5x32xf32>
    %145 = tpu.matmul %141, %144, %cst_95 {dimension_numbers = #tpu.dot_dimension_numbers<[1], [0], [0], [1], [0, 0, 1, 1], [], []>} : vector<5x16xbf16>, vector<16x32xbf16>, vector<5x32xf32> -> vector<5x32xf32>
    %146 = arith.addf %95, %145 : vector<5x32xf32>
    %c2_i32 = arith.constant 2 : i32
    %147 = vector.broadcast %8 : vector<1x32xf32> to vector<5x32xf32>
    %148 = arith.addf %146, %147 : vector<5x32xf32>
    %149 = vector.broadcast %10 : vector<1x32xf32> to vector<5x32xf32>
    %150 = arith.mulf %149, %148 : vector<5x32xf32>
    %151 = arith.addf %22, %150 : vector<5x32xf32>
    %cst_96 = arith.constant dense<0.000000e+00> : vector<5xf32>
    %152 = vector.multi_reduction <add>, %151, %cst_96 [1] : vector<5x32xf32> to vector<5xf32>
    %153 = vector.shape_cast %152 : vector<5xf32> to vector<5x1xf32>
    %cst_97 = arith.constant 3.200000e+01 : f32
    %154 = vector.broadcast %cst_97 : f32 to vector<5x1xf32>
    %155 = arith.divf %153, %154 : vector<5x1xf32>
    %156 = vector.broadcast %155 : vector<5x1xf32> to vector<5x32xf32>
    %157 = arith.subf %151, %156 : vector<5x32xf32>
    %158 = arith.mulf %157, %157 : vector<5x32xf32>
    %cst_98 = arith.constant dense<0.000000e+00> : vector<5xf32>
    %159 = vector.multi_reduction <add>, %158, %cst_98 [1] : vector<5x32xf32> to vector<5xf32>
    %160 = vector.shape_cast %159 : vector<5xf32> to vector<5x1xf32>
    %cst_99 = arith.constant 3.200000e+01 : f32
    %161 = vector.broadcast %cst_99 : f32 to vector<5x1xf32>
    %162 = arith.divf %160, %161 : vector<5x1xf32>
    %cst_100 = arith.constant 9.99999997E-7 : f32
    %163 = vector.broadcast %cst_100 : f32 to vector<5x1xf32>
    %164 = arith.addf %162, %163 : vector<5x1xf32>
    %165 = math.rsqrt %164 : vector<5x1xf32>
    %166 = vector.broadcast %165 : vector<5x1xf32> to vector<5x32xf32>
    %167 = arith.mulf %157, %166 : vector<5x32xf32>
    %168 = vector.broadcast %12 : vector<1x32xf32> to vector<5x32xf32>
    %169 = arith.mulf %167, %168 : vector<5x32xf32>
    %170 = vector.broadcast %14 : vector<1x32xf32> to vector<5x32xf32>
    %171 = arith.addf %169, %170 : vector<5x32xf32>
    %172 = arith.truncf %171 : vector<5x32xf32> to vector<5x32xbf16>
    %c0_101 = arith.constant 0 : index
    %c0_102 = arith.constant 0 : index
    %c0_103 = arith.constant 0 : index
    %173 = vector.load %arg18[%c0_101, %c0_102, %c0_103] : memref<1x32x128xbf16, #tpu.memory_space<vmem>>, vector<1x32x128xbf16>
    %174 = vector.shape_cast %173 : vector<1x32x128xbf16> to vector<32x128xbf16>
    %cst_104 = arith.constant dense<0.000000e+00> : vector<5x128xf32>
    %175 = tpu.matmul %172, %174, %cst_104 {dimension_numbers = #tpu.dot_dimension_numbers<[1], [0], [0], [1], [0, 0, 1, 1], [], []>} : vector<5x32xbf16>, vector<32x128xbf16>, vector<5x128xf32> -> vector<5x128xf32>
    %176 = vector.broadcast %16 : vector<1x128xf32> to vector<5x128xf32>
    %177 = arith.addf %175, %176 : vector<5x128xf32>
    %178 = arith.mulf %177, %177 : vector<5x128xf32>
    %179 = arith.mulf %177, %178 : vector<5x128xf32>
    %cst_105 = arith.constant 4.471500e-02 : f32
    %180 = vector.broadcast %cst_105 : f32 to vector<5x128xf32>
    %181 = arith.mulf %180, %179 : vector<5x128xf32>
    %182 = arith.addf %177, %181 : vector<5x128xf32>
    %cst_106 = arith.constant 0.797884583 : f32
    %183 = vector.broadcast %cst_106 : f32 to vector<5x128xf32>
    %184 = arith.mulf %183, %182 : vector<5x128xf32>
    %185 = math.tanh %184 : vector<5x128xf32>
    %cst_107 = arith.constant 1.000000e+00 : f32
    %186 = vector.broadcast %cst_107 : f32 to vector<5x128xf32>
    %187 = arith.addf %186, %185 : vector<5x128xf32>
    %cst_108 = arith.constant 5.000000e-01 : f32
    %188 = vector.broadcast %cst_108 : f32 to vector<5x128xf32>
    %189 = arith.mulf %188, %187 : vector<5x128xf32>
    %190 = arith.mulf %177, %189 : vector<5x128xf32>
    %191 = arith.truncf %190 : vector<5x128xf32> to vector<5x128xbf16>
    %c0_109 = arith.constant 0 : index
    %c0_110 = arith.constant 0 : index
    %c0_111 = arith.constant 0 : index
    %192 = vector.load %arg20[%c0_109, %c0_110, %c0_111] : memref<1x128x32xbf16, #tpu.memory_space<vmem>>, vector<1x128x32xbf16>
    %193 = vector.shape_cast %192 : vector<1x128x32xbf16> to vector<128x32xbf16>
    %cst_112 = arith.constant dense<0.000000e+00> : vector<5x32xf32>
    %194 = tpu.matmul %191, %193, %cst_112 {dimension_numbers = #tpu.dot_dimension_numbers<[1], [0], [0], [1], [0, 0, 1, 1], [], []>} : vector<5x128xbf16>, vector<128x32xbf16>, vector<5x32xf32> -> vector<5x32xf32>
    %195 = vector.broadcast %18 : vector<1x32xf32> to vector<5x32xf32>
    %196 = arith.addf %194, %195 : vector<5x32xf32>
    %197 = vector.broadcast %20 : vector<1x32xf32> to vector<5x32xf32>
    %198 = arith.mulf %197, %196 : vector<5x32xf32>
    %199 = arith.addf %151, %198 : vector<5x32xf32>
    %c0_113 = arith.constant 0 : index
    %c0_114 = arith.constant 0 : index
    %c0_115 = arith.constant 0 : index
    %200 = vector.load %arg26[%c0_113, %c0_114, %c0_115] : memref<2x5x32xf32, #tpu.memory_space<vmem>>, vector<1x5x32xf32>
    %201 = vector.shape_cast %200 : vector<1x5x32xf32> to vector<5x32xf32>
    %202 = vector.shape_cast %199 : vector<5x32xf32> to vector<1x5x32xf32>
    tpu.vector_store %arg26[%c0_113, %c0_114, %c0_115], %202 {strides = array<i32>} : memref<2x5x32xf32, #tpu.memory_space<vmem>>, vector<1x5x32xf32>,
    %c1 = arith.constant 1 : index
    %c0_116 = arith.constant 0 : index
    %c0_117 = arith.constant 0 : index
    %203 = vector.load %arg26[%c1, %c0_116, %c0_117] : memref<2x5x32xf32, #tpu.memory_space<vmem>>, vector<1x5x32xf32>
    %204 = vector.shape_cast %203 : vector<1x5x32xf32> to vector<5x32xf32>
    %cst_118 = arith.constant dense<0.000000e+00> : vector<5xf32>
    %205 = vector.multi_reduction <add>, %204, %cst_118 [1] : vector<5x32xf32> to vector<5xf32>
    %206 = vector.shape_cast %205 : vector<5xf32> to vector<5x1xf32>
    %cst_119 = arith.constant 3.200000e+01 : f32
    %207 = vector.broadcast %cst_119 : f32 to vector<5x1xf32>
    %208 = arith.divf %206, %207 : vector<5x1xf32>
    %209 = vector.broadcast %208 : vector<5x1xf32> to vector<5x32xf32>
    %210 = arith.subf %204, %209 : vector<5x32xf32>
    %211 = arith.mulf %210, %210 : vector<5x32xf32>
    %cst_120 = arith.constant dense<0.000000e+00> : vector<5xf32>
    %212 = vector.multi_reduction <add>, %211, %cst_120 [1] : vector<5x32xf32> to vector<5xf32>
    %213 = vector.shape_cast %212 : vector<5xf32> to vector<5x1xf32>
    %cst_121 = arith.constant 3.200000e+01 : f32
    %214 = vector.broadcast %cst_121 : f32 to vector<5x1xf32>
    %215 = arith.divf %213, %214 : vector<5x1xf32>
    %cst_122 = arith.constant 9.99999997E-7 : f32
    %216 = vector.broadcast %cst_122 : f32 to vector<5x1xf32>
    %217 = arith.addf %215, %216 : vector<5x1xf32>
    %218 = math.rsqrt %217 : vector<5x1xf32>
    %219 = vector.broadcast %218 : vector<5x1xf32> to vector<5x32xf32>
    %220 = arith.mulf %210, %219 : vector<5x32xf32>
    %221 = vector.broadcast %4 : vector<1x32xf32> to vector<5x32xf32>
    %222 = arith.mulf %220, %221 : vector<5x32xf32>
    %223 = vector.broadcast %6 : vector<1x32xf32> to vector<5x32xf32>
    %224 = arith.addf %222, %223 : vector<5x32xf32>
    %225 = arith.truncf %224 : vector<5x32xf32> to vector<5x32xbf16>
    %cst_123 = arith.constant 0.000000e+00 : f32
    %226 = vector.broadcast %cst_123 : f32 to vector<5x32xf32>
    %c0_i32_124 = arith.constant 0 : i32
    %c0_125 = arith.constant 0 : index
    %227 = arith.index_cast %c0_i32_124 : i32 to index
    %c0_126 = arith.constant 0 : index
    %c0_127 = arith.constant 0 : index
    %228 = vector.load %arg7[%c0_125, %227, %c0_126, %c0_127] : memref<1x2x32x16xbf16, #tpu.memory_space<vmem>>, vector<1x1x32x16xbf16>
    %229 = vector.shape_cast %228 : vector<1x1x32x16xbf16> to vector<32x16xbf16>
    %cst_128 = arith.constant dense<0.000000e+00> : vector<5x16xf32>
    %230 = tpu.matmul %225, %229, %cst_128 {dimension_numbers = #tpu.dot_dimension_numbers<[1], [0], [0], [1], [0, 0, 1, 1], [], []>} : vector<5x32xbf16>, vector<32x16xbf16>, vector<5x16xf32> -> vector<5x16xf32>
    %c0_129 = arith.constant 0 : index
    %231 = arith.index_cast %c0_i32_124 : i32 to index
    %c0_130 = arith.constant 0 : index
    %c0_131 = arith.constant 0 : index
    %232 = vector.load %arg10[%c0_129, %231, %c0_130, %c0_131] : memref<1x2x1x16xf32, #tpu.memory_space<vmem>>, vector<1x1x1x16xf32>
    %233 = vector.shape_cast %232 : vector<1x1x1x16xf32> to vector<1x16xf32>
    %234 = vector.broadcast %233 : vector<1x16xf32> to vector<5x16xf32>
    %235 = arith.addf %230, %234 : vector<5x16xf32>
    %c0_132 = arith.constant 0 : index
    %236 = arith.index_cast %c0_i32_124 : i32 to index
    %c0_133 = arith.constant 0 : index
    %c0_134 = arith.constant 0 : index
    %237 = vector.load %arg8[%c0_132, %236, %c0_133, %c0_134] : memref<1x2x32x16xbf16, #tpu.memory_space<vmem>>, vector<1x1x32x16xbf16>
    %238 = vector.shape_cast %237 : vector<1x1x32x16xbf16> to vector<32x16xbf16>
    %cst_135 = arith.constant dense<0.000000e+00> : vector<5x16xf32>
    %239 = tpu.matmul %225, %238, %cst_135 {dimension_numbers = #tpu.dot_dimension_numbers<[1], [0], [0], [1], [0, 0, 1, 1], [], []>} : vector<5x32xbf16>, vector<32x16xbf16>, vector<5x16xf32> -> vector<5x16xf32>
    %c0_136 = arith.constant 0 : index
    %240 = arith.index_cast %c0_i32_124 : i32 to index
    %c0_137 = arith.constant 0 : index
    %c0_138 = arith.constant 0 : index
    %241 = vector.load %arg11[%c0_136, %240, %c0_137, %c0_138] : memref<1x2x1x16xf32, #tpu.memory_space<vmem>>, vector<1x1x1x16xf32>
    %242 = vector.shape_cast %241 : vector<1x1x1x16xf32> to vector<1x16xf32>
    %243 = vector.broadcast %242 : vector<1x16xf32> to vector<5x16xf32>
    %244 = arith.addf %239, %243 : vector<5x16xf32>
    %c0_139 = arith.constant 0 : index
    %245 = arith.index_cast %c0_i32_124 : i32 to index
    %c0_140 = arith.constant 0 : index
    %c0_141 = arith.constant 0 : index
    %246 = vector.load %arg9[%c0_139, %245, %c0_140, %c0_141] : memref<1x2x32x16xbf16, #tpu.memory_space<vmem>>, vector<1x1x32x16xbf16>
    %247 = vector.shape_cast %246 : vector<1x1x32x16xbf16> to vector<32x16xbf16>
    %cst_142 = arith.constant dense<0.000000e+00> : vector<5x16xf32>
    %248 = tpu.matmul %225, %247, %cst_142 {dimension_numbers = #tpu.dot_dimension_numbers<[1], [0], [0], [1], [0, 0, 1, 1], [], []>} : vector<5x32xbf16>, vector<32x16xbf16>, vector<5x16xf32> -> vector<5x16xf32>
    %c0_143 = arith.constant 0 : index
    %249 = arith.index_cast %c0_i32_124 : i32 to index
    %c0_144 = arith.constant 0 : index
    %c0_145 = arith.constant 0 : index
    %250 = vector.load %arg12[%c0_143, %249, %c0_144, %c0_145] : memref<1x2x1x16xf32, #tpu.memory_space<vmem>>, vector<1x1x1x16xf32>
    %251 = vector.shape_cast %250 : vector<1x1x1x16xf32> to vector<1x16xf32>
    %252 = vector.broadcast %251 : vector<1x16xf32> to vector<5x16xf32>
    %253 = arith.addf %248, %252 : vector<5x16xf32>
    %254 = arith.truncf %235 : vector<5x16xf32> to vector<5x16xbf16>
    %255 = arith.truncf %244 : vector<5x16xf32> to vector<5x16xbf16>
    %cst_146 = arith.constant dense<0.000000e+00> : vector<5x5xf32>
    %256 = tpu.matmul %254, %255, %cst_146 {dimension_numbers = #tpu.dot_dimension_numbers<[1], [1], [0], [0], [0, 0, 1, 0], [], []>} : vector<5x16xbf16>, vector<5x16xbf16>, vector<5x5xf32> -> vector<5x5xf32>
    %cst_147 = arith.constant 2.500000e-01 : f32
    %257 = vector.broadcast %cst_147 : f32 to vector<5x5xf32>
    %258 = arith.mulf %256, %257 : vector<5x5xf32>
    %cst_148 = arith.constant dense<0xFF800000> : vector<5xf32>
    %259 = vector.multi_reduction <maximumf>, %258, %cst_148 [1] : vector<5x5xf32> to vector<5xf32>
    %260 = vector.shape_cast %259 : vector<5xf32> to vector<5x1xf32>
    %261 = vector.broadcast %260 : vector<5x1xf32> to vector<5x5xf32>
    %262 = arith.subf %258, %261 : vector<5x5xf32>
    %263 = math.exp %262 : vector<5x5xf32>
    %cst_149 = arith.constant dense<0.000000e+00> : vector<5xf32>
    %264 = vector.multi_reduction <add>, %263, %cst_149 [1] : vector<5x5xf32> to vector<5xf32>
    %265 = vector.shape_cast %264 : vector<5xf32> to vector<5x1xf32>
    %266 = tpu.reciprocal %265 {approx = true} : vector<5x1xf32> -> vector<5x1xf32>
    %267 = vector.broadcast %266 : vector<5x1xf32> to vector<5x5xf32>
    %268 = arith.mulf %263, %267 : vector<5x5xf32>
    %269 = arith.truncf %268 : vector<5x5xf32> to vector<5x5xbf16>
    %270 = arith.truncf %253 : vector<5x16xf32> to vector<5x16xbf16>
    %cst_150 = arith.constant dense<0.000000e+00> : vector<5x16xf32>
    %271 = tpu.matmul %269, %270, %cst_150 {dimension_numbers = #tpu.dot_dimension_numbers<[1], [0], [0], [1], [0, 0, 1, 1], [], []>} : vector<5x5xbf16>, vector<5x16xbf16>, vector<5x16xf32> -> vector<5x16xf32>
    %272 = arith.truncf %271 : vector<5x16xf32> to vector<5x16xbf16>
    %c0_151 = arith.constant 0 : index
    %273 = arith.index_cast %c0_i32_124 : i32 to index
    %c0_152 = arith.constant 0 : index
    %c0_153 = arith.constant 0 : index
    %274 = vector.load %arg13[%c0_151, %273, %c0_152, %c0_153] : memref<1x2x16x32xbf16, #tpu.memory_space<vmem>>, vector<1x1x16x32xbf16>
    %275 = vector.shape_cast %274 : vector<1x1x16x32xbf16> to vector<16x32xbf16>
    %cst_154 = arith.constant dense<0.000000e+00> : vector<5x32xf32>
    %276 = tpu.matmul %272, %275, %cst_154 {dimension_numbers = #tpu.dot_dimension_numbers<[1], [0], [0], [1], [0, 0, 1, 1], [], []>} : vector<5x16xbf16>, vector<16x32xbf16>, vector<5x32xf32> -> vector<5x32xf32>
    %277 = arith.addf %226, %276 : vector<5x32xf32>
    %c1_i32_155 = arith.constant 1 : i32
    %c0_156 = arith.constant 0 : index
    %278 = arith.index_cast %c1_i32_155 : i32 to index
    %c0_157 = arith.constant 0 : index
    %c0_158 = arith.constant 0 : index
    %279 = vector.load %arg7[%c0_156, %278, %c0_157, %c0_158] : memref<1x2x32x16xbf16, #tpu.memory_space<vmem>>, vector<1x1x32x16xbf16>
    %280 = vector.shape_cast %279 : vector<1x1x32x16xbf16> to vector<32x16xbf16>
    %cst_159 = arith.constant dense<0.000000e+00> : vector<5x16xf32>
    %281 = tpu.matmul %225, %280, %cst_159 {dimension_numbers = #tpu.dot_dimension_numbers<[1], [0], [0], [1], [0, 0, 1, 1], [], []>} : vector<5x32xbf16>, vector<32x16xbf16>, vector<5x16xf32> -> vector<5x16xf32>
    %c0_160 = arith.constant 0 : index
    %282 = arith.index_cast %c1_i32_155 : i32 to index
    %c0_161 = arith.constant 0 : index
    %c0_162 = arith.constant 0 : index
    %283 = vector.load %arg10[%c0_160, %282, %c0_161, %c0_162] : memref<1x2x1x16xf32, #tpu.memory_space<vmem>>, vector<1x1x1x16xf32>
    %284 = vector.shape_cast %283 : vector<1x1x1x16xf32> to vector<1x16xf32>
    %285 = vector.broadcast %284 : vector<1x16xf32> to vector<5x16xf32>
    %286 = arith.addf %281, %285 : vector<5x16xf32>
    %c0_163 = arith.constant 0 : index
    %287 = arith.index_cast %c1_i32_155 : i32 to index
    %c0_164 = arith.constant 0 : index
    %c0_165 = arith.constant 0 : index
    %288 = vector.load %arg8[%c0_163, %287, %c0_164, %c0_165] : memref<1x2x32x16xbf16, #tpu.memory_space<vmem>>, vector<1x1x32x16xbf16>
    %289 = vector.shape_cast %288 : vector<1x1x32x16xbf16> to vector<32x16xbf16>
    %cst_166 = arith.constant dense<0.000000e+00> : vector<5x16xf32>
    %290 = tpu.matmul %225, %289, %cst_166 {dimension_numbers = #tpu.dot_dimension_numbers<[1], [0], [0], [1], [0, 0, 1, 1], [], []>} : vector<5x32xbf16>, vector<32x16xbf16>, vector<5x16xf32> -> vector<5x16xf32>
    %c0_167 = arith.constant 0 : index
    %291 = arith.index_cast %c1_i32_155 : i32 to index
    %c0_168 = arith.constant 0 : index
    %c0_169 = arith.constant 0 : index
    %292 = vector.load %arg11[%c0_167, %291, %c0_168, %c0_169] : memref<1x2x1x16xf32, #tpu.memory_space<vmem>>, vector<1x1x1x16xf32>
    %293 = vector.shape_cast %292 : vector<1x1x1x16xf32> to vector<1x16xf32>
    %294 = vector.broadcast %293 : vector<1x16xf32> to vector<5x16xf32>
    %295 = arith.addf %290, %294 : vector<5x16xf32>
    %c0_170 = arith.constant 0 : index
    %296 = arith.index_cast %c1_i32_155 : i32 to index
    %c0_171 = arith.constant 0 : index
    %c0_172 = arith.constant 0 : index
    %297 = vector.load %arg9[%c0_170, %296, %c0_171, %c0_172] : memref<1x2x32x16xbf16, #tpu.memory_space<vmem>>, vector<1x1x32x16xbf16>
    %298 = vector.shape_cast %297 : vector<1x1x32x16xbf16> to vector<32x16xbf16>
    %cst_173 = arith.constant dense<0.000000e+00> : vector<5x16xf32>
    %299 = tpu.matmul %225, %298, %cst_173 {dimension_numbers = #tpu.dot_dimension_numbers<[1], [0], [0], [1], [0, 0, 1, 1], [], []>} : vector<5x32xbf16>, vector<32x16xbf16>, vector<5x16xf32> -> vector<5x16xf32>
    %c0_174 = arith.constant 0 : index
    %300 = arith.index_cast %c1_i32_155 : i32 to index
    %c0_175 = arith.constant 0 : index
    %c0_176 = arith.constant 0 : index
    %301 = vector.load %arg12[%c0_174, %300, %c0_175, %c0_176] : memref<1x2x1x16xf32, #tpu.memory_space<vmem>>, vector<1x1x1x16xf32>
    %302 = vector.shape_cast %301 : vector<1x1x1x16xf32> to vector<1x16xf32>
    %303 = vector.broadcast %302 : vector<1x16xf32> to vector<5x16xf32>
    %304 = arith.addf %299, %303 : vector<5x16xf32>
    %305 = arith.truncf %286 : vector<5x16xf32> to vector<5x16xbf16>
    %306 = arith.truncf %295 : vector<5x16xf32> to vector<5x16xbf16>
    %cst_177 = arith.constant dense<0.000000e+00> : vector<5x5xf32>
    %307 = tpu.matmul %305, %306, %cst_177 {dimension_numbers = #tpu.dot_dimension_numbers<[1], [1], [0], [0], [0, 0, 1, 0], [], []>} : vector<5x16xbf16>, vector<5x16xbf16>, vector<5x5xf32> -> vector<5x5xf32>
    %cst_178 = arith.constant 2.500000e-01 : f32
    %308 = vector.broadcast %cst_178 : f32 to vector<5x5xf32>
    %309 = arith.mulf %307, %308 : vector<5x5xf32>
    %cst_179 = arith.constant dense<0xFF800000> : vector<5xf32>
    %310 = vector.multi_reduction <maximumf>, %309, %cst_179 [1] : vector<5x5xf32> to vector<5xf32>
    %311 = vector.shape_cast %310 : vector<5xf32> to vector<5x1xf32>
    %312 = vector.broadcast %311 : vector<5x1xf32> to vector<5x5xf32>
    %313 = arith.subf %309, %312 : vector<5x5xf32>
    %314 = math.exp %313 : vector<5x5xf32>
    %cst_180 = arith.constant dense<0.000000e+00> : vector<5xf32>
    %315 = vector.multi_reduction <add>, %314, %cst_180 [1] : vector<5x5xf32> to vector<5xf32>
    %316 = vector.shape_cast %315 : vector<5xf32> to vector<5x1xf32>
    %317 = tpu.reciprocal %316 {approx = true} : vector<5x1xf32> -> vector<5x1xf32>
    %318 = vector.broadcast %317 : vector<5x1xf32> to vector<5x5xf32>
    %319 = arith.mulf %314, %318 : vector<5x5xf32>
    %320 = arith.truncf %319 : vector<5x5xf32> to vector<5x5xbf16>
    %321 = arith.truncf %304 : vector<5x16xf32> to vector<5x16xbf16>
    %cst_181 = arith.constant dense<0.000000e+00> : vector<5x16xf32>
    %322 = tpu.matmul %320, %321, %cst_181 {dimension_numbers = #tpu.dot_dimension_numbers<[1], [0], [0], [1], [0, 0, 1, 1], [], []>} : vector<5x5xbf16>, vector<5x16xbf16>, vector<5x16xf32> -> vector<5x16xf32>
    %323 = arith.truncf %322 : vector<5x16xf32> to vector<5x16xbf16>
    %c0_182 = arith.constant 0 : index
    %324 = arith.index_cast %c1_i32_155 : i32 to index
    %c0_183 = arith.constant 0 : index
    %c0_184 = arith.constant 0 : index
    %325 = vector.load %arg13[%c0_182, %324, %c0_183, %c0_184] : memref<1x2x16x32xbf16, #tpu.memory_space<vmem>>, vector<1x1x16x32xbf16>
    %326 = vector.shape_cast %325 : vector<1x1x16x32xbf16> to vector<16x32xbf16>
    %cst_185 = arith.constant dense<0.000000e+00> : vector<5x32xf32>
    %327 = tpu.matmul %323, %326, %cst_185 {dimension_numbers = #tpu.dot_dimension_numbers<[1], [0], [0], [1], [0, 0, 1, 1], [], []>} : vector<5x16xbf16>, vector<16x32xbf16>, vector<5x32xf32> -> vector<5x32xf32>
    %328 = arith.addf %277, %327 : vector<5x32xf32>
    %c2_i32_186 = arith.constant 2 : i32
    %329 = vector.broadcast %8 : vector<1x32xf32> to vector<5x32xf32>
    %330 = arith.addf %328, %329 : vector<5x32xf32>
    %331 = vector.broadcast %10 : vector<1x32xf32> to vector<5x32xf32>
    %332 = arith.mulf %331, %330 : vector<5x32xf32>
    %333 = arith.addf %204, %332 : vector<5x32xf32>
    %cst_187 = arith.constant dense<0.000000e+00> : vector<5xf32>
    %334 = vector.multi_reduction <add>, %333, %cst_187 [1] : vector<5x32xf32> to vector<5xf32>
    %335 = vector.shape_cast %334 : vector<5xf32> to vector<5x1xf32>
    %cst_188 = arith.constant 3.200000e+01 : f32
    %336 = vector.broadcast %cst_188 : f32 to vector<5x1xf32>
    %337 = arith.divf %335, %336 : vector<5x1xf32>
    %338 = vector.broadcast %337 : vector<5x1xf32> to vector<5x32xf32>
    %339 = arith.subf %333, %338 : vector<5x32xf32>
    %340 = arith.mulf %339, %339 : vector<5x32xf32>
    %cst_189 = arith.constant dense<0.000000e+00> : vector<5xf32>
    %341 = vector.multi_reduction <add>, %340, %cst_189 [1] : vector<5x32xf32> to vector<5xf32>
    %342 = vector.shape_cast %341 : vector<5xf32> to vector<5x1xf32>
    %cst_190 = arith.constant 3.200000e+01 : f32
    %343 = vector.broadcast %cst_190 : f32 to vector<5x1xf32>
    %344 = arith.divf %342, %343 : vector<5x1xf32>
    %cst_191 = arith.constant 9.99999997E-7 : f32
    %345 = vector.broadcast %cst_191 : f32 to vector<5x1xf32>
    %346 = arith.addf %344, %345 : vector<5x1xf32>
    %347 = math.rsqrt %346 : vector<5x1xf32>
    %348 = vector.broadcast %347 : vector<5x1xf32> to vector<5x32xf32>
    %349 = arith.mulf %339, %348 : vector<5x32xf32>
    %350 = vector.broadcast %12 : vector<1x32xf32> to vector<5x32xf32>
    %351 = arith.mulf %349, %350 : vector<5x32xf32>
    %352 = vector.broadcast %14 : vector<1x32xf32> to vector<5x32xf32>
    %353 = arith.addf %351, %352 : vector<5x32xf32>
    %354 = arith.truncf %353 : vector<5x32xf32> to vector<5x32xbf16>
    %c0_192 = arith.constant 0 : index
    %c0_193 = arith.constant 0 : index
    %c0_194 = arith.constant 0 : index
    %355 = vector.load %arg18[%c0_192, %c0_193, %c0_194] : memref<1x32x128xbf16, #tpu.memory_space<vmem>>, vector<1x32x128xbf16>
    %356 = vector.shape_cast %355 : vector<1x32x128xbf16> to vector<32x128xbf16>
    %cst_195 = arith.constant dense<0.000000e+00> : vector<5x128xf32>
    %357 = tpu.matmul %354, %356, %cst_195 {dimension_numbers = #tpu.dot_dimension_numbers<[1], [0], [0], [1], [0, 0, 1, 1], [], []>} : vector<5x32xbf16>, vector<32x128xbf16>, vector<5x128xf32> -> vector<5x128xf32>
    %358 = vector.broadcast %16 : vector<1x128xf32> to vector<5x128xf32>
    %359 = arith.addf %357, %358 : vector<5x128xf32>
    %360 = arith.mulf %359, %359 : vector<5x128xf32>
    %361 = arith.mulf %359, %360 : vector<5x128xf32>
    %cst_196 = arith.constant 4.471500e-02 : f32
    %362 = vector.broadcast %cst_196 : f32 to vector<5x128xf32>
    %363 = arith.mulf %362, %361 : vector<5x128xf32>
    %364 = arith.addf %359, %363 : vector<5x128xf32>
    %cst_197 = arith.constant 0.797884583 : f32
    %365 = vector.broadcast %cst_197 : f32 to vector<5x128xf32>
    %366 = arith.mulf %365, %364 : vector<5x128xf32>
    %367 = math.tanh %366 : vector<5x128xf32>
    %cst_198 = arith.constant 1.000000e+00 : f32
    %368 = vector.broadcast %cst_198 : f32 to vector<5x128xf32>
    %369 = arith.addf %368, %367 : vector<5x128xf32>
    %cst_199 = arith.constant 5.000000e-01 : f32
    %370 = vector.broadcast %cst_199 : f32 to vector<5x128xf32>
    %371 = arith.mulf %370, %369 : vector<5x128xf32>
    %372 = arith.mulf %359, %371 : vector<5x128xf32>
    %373 = arith.truncf %372 : vector<5x128xf32> to vector<5x128xbf16>
    %c0_200 = arith.constant 0 : index
    %c0_201 = arith.constant 0 : index
    %c0_202 = arith.constant 0 : index
    %374 = vector.load %arg20[%c0_200, %c0_201, %c0_202] : memref<1x128x32xbf16, #tpu.memory_space<vmem>>, vector<1x128x32xbf16>
    %375 = vector.shape_cast %374 : vector<1x128x32xbf16> to vector<128x32xbf16>
    %cst_203 = arith.constant dense<0.000000e+00> : vector<5x32xf32>
    %376 = tpu.matmul %373, %375, %cst_203 {dimension_numbers = #tpu.dot_dimension_numbers<[1], [0], [0], [1], [0, 0, 1, 1], [], []>} : vector<5x128xbf16>, vector<128x32xbf16>, vector<5x32xf32> -> vector<5x32xf32>
    %377 = vector.broadcast %18 : vector<1x32xf32> to vector<5x32xf32>
    %378 = arith.addf %376, %377 : vector<5x32xf32>
    %379 = vector.broadcast %20 : vector<1x32xf32> to vector<5x32xf32>
    %380 = arith.mulf %379, %378 : vector<5x32xf32>
    %381 = arith.addf %333, %380 : vector<5x32xf32>
    %c1_204 = arith.constant 1 : index
    %c0_205 = arith.constant 0 : index
    %c0_206 = arith.constant 0 : index
    %382 = vector.load %arg26[%c1_204, %c0_205, %c0_206] : memref<2x5x32xf32, #tpu.memory_space<vmem>>, vector<1x5x32xf32>
    %383 = vector.shape_cast %382 : vector<1x5x32xf32> to vector<5x32xf32>
    %384 = vector.shape_cast %381 : vector<5x32xf32> to vector<1x5x32xf32>
    tpu.vector_store %arg26[%c1_204, %c0_205, %c0_206], %384 {strides = array<i32>} : memref<2x5x32xf32, #tpu.memory_space<vmem>>, vector<1x5x32xf32>,
    %c1_i32_207 = arith.constant 1 : i32
    %385 = arith.cmpi eq, %arg1, %c1_i32_207 : i32
    %386 = arith.extui %385 : i1 to i32
    %c0_i32_208 = arith.constant 0 : i32
    %387 = arith.cmpi ne, %386, %c0_i32_208 : i32
    scf.if %387 {
      %c0_209 = arith.constant 0 : index
      %c0_210 = arith.constant 0 : index
      %c0_211 = arith.constant 0 : index
      %388 = vector.load %arg26[%c0_209, %c0_210, %c0_211] : memref<2x5x32xf32, #tpu.memory_space<vmem>>, vector<1x5x32xf32>
      %389 = vector.shape_cast %388 : vector<1x5x32xf32> to vector<5x32xf32>
      %c1_212 = arith.constant 1 : index
      %c0_213 = arith.constant 0 : index
      %c0_214 = arith.constant 0 : index
      %390 = vector.load %arg26[%c1_212, %c0_213, %c0_214] : memref<2x5x32xf32, #tpu.memory_space<vmem>>, vector<1x5x32xf32>
      %391 = vector.shape_cast %390 : vector<1x5x32xf32> to vector<5x32xf32>
      %392 = vector.extract_strided_slice %389 {offsets = [0, 0], sizes = [1, 32], strides = [1, 1]} : vector<5x32xf32> to vector<1x32xf32>
      %c0_215 = arith.constant 0 : index
      %c0_216 = arith.constant 0 : index
      %393 = vector.load %arg23[%c0_215, %c0_216] : memref<1x32xf32, #tpu.memory_space<vmem>>, vector<1x32xf32>
      %c0_217 = arith.constant 0 : index
      %c0_218 = arith.constant 0 : index
      %394 = vector.load %arg24[%c0_217, %c0_218] : memref<1x32xf32, #tpu.memory_space<vmem>>, vector<1x32xf32>
      %cst_219 = arith.constant dense<0.000000e+00> : vector<1xf32>
      %395 = vector.multi_reduction <add>, %392, %cst_219 [1] : vector<1x32xf32> to vector<1xf32>
      %396 = vector.shape_cast %395 : vector<1xf32> to vector<1x1xf32>
      %cst_220 = arith.constant 3.200000e+01 : f32
      %397 = vector.broadcast %cst_220 : f32 to vector<1x1xf32>
      %398 = arith.divf %396, %397 : vector<1x1xf32>
      %399 = vector.broadcast %398 : vector<1x1xf32> to vector<1x32xf32>
      %400 = arith.subf %392, %399 : vector<1x32xf32>
      %401 = arith.mulf %400, %400 : vector<1x32xf32>
      %cst_221 = arith.constant dense<0.000000e+00> : vector<1xf32>
      %402 = vector.multi_reduction <add>, %401, %cst_221 [1] : vector<1x32xf32> to vector<1xf32>
      %403 = vector.shape_cast %402 : vector<1xf32> to vector<1x1xf32>
      %cst_222 = arith.constant 3.200000e+01 : f32
      %404 = vector.broadcast %cst_222 : f32 to vector<1x1xf32>
      %405 = arith.divf %403, %404 : vector<1x1xf32>
      %cst_223 = arith.constant 9.99999997E-7 : f32
      %406 = vector.broadcast %cst_223 : f32 to vector<1x1xf32>
      %407 = arith.addf %405, %406 : vector<1x1xf32>
      %408 = math.rsqrt %407 : vector<1x1xf32>
      %409 = vector.broadcast %408 : vector<1x1xf32> to vector<1x32xf32>
      %410 = arith.mulf %400, %409 : vector<1x32xf32>
      %411 = arith.mulf %410, %393 : vector<1x32xf32>
      %412 = arith.addf %411, %394 : vector<1x32xf32>
      %413 = vector.extract_strided_slice %391 {offsets = [0, 0], sizes = [1, 32], strides = [1, 1]} : vector<5x32xf32> to vector<1x32xf32>
      %c0_224 = arith.constant 0 : index
      %c0_225 = arith.constant 0 : index
      %414 = vector.load %arg23[%c0_224, %c0_225] : memref<1x32xf32, #tpu.memory_space<vmem>>, vector<1x32xf32>
      %c0_226 = arith.constant 0 : index
      %c0_227 = arith.constant 0 : index
      %415 = vector.load %arg24[%c0_226, %c0_227] : memref<1x32xf32, #tpu.memory_space<vmem>>, vector<1x32xf32>
      %cst_228 = arith.constant dense<0.000000e+00> : vector<1xf32>
      %416 = vector.multi_reduction <add>, %413, %cst_228 [1] : vector<1x32xf32> to vector<1xf32>
      %417 = vector.shape_cast %416 : vector<1xf32> to vector<1x1xf32>
      %cst_229 = arith.constant 3.200000e+01 : f32
      %418 = vector.broadcast %cst_229 : f32 to vector<1x1xf32>
      %419 = arith.divf %417, %418 : vector<1x1xf32>
      %420 = vector.broadcast %419 : vector<1x1xf32> to vector<1x32xf32>
      %421 = arith.subf %413, %420 : vector<1x32xf32>
      %422 = arith.mulf %421, %421 : vector<1x32xf32>
      %cst_230 = arith.constant dense<0.000000e+00> : vector<1xf32>
      %423 = vector.multi_reduction <add>, %422, %cst_230 [1] : vector<1x32xf32> to vector<1xf32>
      %424 = vector.shape_cast %423 : vector<1xf32> to vector<1x1xf32>
      %cst_231 = arith.constant 3.200000e+01 : f32
      %425 = vector.broadcast %cst_231 : f32 to vector<1x1xf32>
      %426 = arith.divf %424, %425 : vector<1x1xf32>
      %cst_232 = arith.constant 9.99999997E-7 : f32
      %427 = vector.broadcast %cst_232 : f32 to vector<1x1xf32>
      %428 = arith.addf %426, %427 : vector<1x1xf32>
      %429 = math.rsqrt %428 : vector<1x1xf32>
      %430 = vector.broadcast %429 : vector<1x1xf32> to vector<1x32xf32>
      %431 = arith.mulf %421, %430 : vector<1x32xf32>
      %432 = arith.mulf %431, %414 : vector<1x32xf32>
      %433 = arith.addf %432, %415 : vector<1x32xf32>
      %434 = arith.subf %412, %433 : vector<1x32xf32>
      %435 = math.absf %434 : vector<1x32xf32>
      %cst_233 = arith.constant dense<0.000000e+00> : vector<1xf32>
      %436 = vector.multi_reduction <add>, %435, %cst_233 [1] : vector<1x32xf32> to vector<1xf32>
      %437 = vector.shape_cast %436 : vector<1xf32> to vector<1x1xf32>
      %438 = vector.shape_cast %437 : vector<1x1xf32> to vector<1x1x1xf32>
      %c0_234 = arith.constant 0 : index
      %c0_235 = arith.constant 0 : index
      %c0_236 = arith.constant 0 : index
      %439 = vector.load %arg25[%c0_234, %c0_235, %c0_236] : memref<1x1x1xf32, #tpu.memory_space<vmem>>, vector<1x1x1xf32>
      tpu.vector_store %arg25[%c0_234, %c0_235, %c0_236], %438 {strides = array<i32>} : memref<1x1x1xf32, #tpu.memory_space<vmem>>, vector<1x1x1xf32>,
    } else {
    }
    return
  }
  func.func @transform_0(%arg0: i32, %arg1: i32) -> (i32, i32, i32, i32) {
    %c0_i32 = arith.constant 0 : i32
    %c0_i32_0 = arith.constant 0 : i32
    %c0_i32_1 = arith.constant 0 : i32
    %c0_i32_2 = arith.constant 0 : i32
    return %arg0, %c0_i32, %c0_i32_0, %c0_i32_1 : i32, i32, i32, i32
  }
  func.func @transform_1(%arg0: i32, %arg1: i32) -> (i32, i32) {
    %c0_i32 = arith.constant 0 : i32
    %c0_i32_0 = arith.constant 0 : i32
    %c0_i32_1 = arith.constant 0 : i32
    return %c0_i32, %c0_i32_0 : i32, i32
  }
  func.func @transform_2(%arg0: i32, %arg1: i32) -> (i32, i32) {
    %c0_i32 = arith.constant 0 : i32
    %c0_i32_0 = arith.constant 0 : i32
    %c0_i32_1 = arith.constant 0 : i32
    return %c0_i32, %c0_i32_0 : i32, i32
  }
  func.func @transform_3(%arg0: i32, %arg1: i32) -> (i32, i32, i32) {
    %c0_i32 = arith.constant 0 : i32
    %c0_i32_0 = arith.constant 0 : i32
    %c0_i32_1 = arith.constant 0 : i32
    return %arg1, %c0_i32, %c0_i32_0 : i32, i32, i32
  }
  func.func @transform_4(%arg0: i32, %arg1: i32) -> (i32, i32, i32) {
    %c0_i32 = arith.constant 0 : i32
    %c0_i32_0 = arith.constant 0 : i32
    %c0_i32_1 = arith.constant 0 : i32
    return %arg1, %c0_i32, %c0_i32_0 : i32, i32, i32
  }
  func.func @transform_5(%arg0: i32, %arg1: i32) -> (i32, i32, i32, i32) {
    %c0_i32 = arith.constant 0 : i32
    %c0_i32_0 = arith.constant 0 : i32
    %c0_i32_1 = arith.constant 0 : i32
    %c0_i32_2 = arith.constant 0 : i32
    return %arg1, %c0_i32, %c0_i32_0, %c0_i32_1 : i32, i32, i32, i32
  }
  func.func @transform_6(%arg0: i32, %arg1: i32) -> (i32, i32, i32, i32) {
    %c0_i32 = arith.constant 0 : i32
    %c0_i32_0 = arith.constant 0 : i32
    %c0_i32_1 = arith.constant 0 : i32
    %c0_i32_2 = arith.constant 0 : i32
    return %arg1, %c0_i32, %c0_i32_0, %c0_i32_1 : i32, i32, i32, i32
  }
  func.func @transform_7(%arg0: i32, %arg1: i32) -> (i32, i32, i32, i32) {
    %c0_i32 = arith.constant 0 : i32
    %c0_i32_0 = arith.constant 0 : i32
    %c0_i32_1 = arith.constant 0 : i32
    %c0_i32_2 = arith.constant 0 : i32
    return %arg1, %c0_i32, %c0_i32_0, %c0_i32_1 : i32, i32, i32, i32
  }
  func.func @transform_8(%arg0: i32, %arg1: i32) -> (i32, i32, i32, i32) {
    %c0_i32 = arith.constant 0 : i32
    %c0_i32_0 = arith.constant 0 : i32
    %c0_i32_1 = arith.constant 0 : i32
    %c0_i32_2 = arith.constant 0 : i32
    return %arg1, %c0_i32, %c0_i32_0, %c0_i32_1 : i32, i32, i32, i32
  }
  func.func @transform_9(%arg0: i32, %arg1: i32) -> (i32, i32, i32, i32) {
    %c0_i32 = arith.constant 0 : i32
    %c0_i32_0 = arith.constant 0 : i32
    %c0_i32_1 = arith.constant 0 : i32
    %c0_i32_2 = arith.constant 0 : i32
    return %arg1, %c0_i32, %c0_i32_0, %c0_i32_1 : i32, i32, i32, i32
  }
  func.func @transform_10(%arg0: i32, %arg1: i32) -> (i32, i32, i32, i32) {
    %c0_i32 = arith.constant 0 : i32
    %c0_i32_0 = arith.constant 0 : i32
    %c0_i32_1 = arith.constant 0 : i32
    %c0_i32_2 = arith.constant 0 : i32
    return %arg1, %c0_i32, %c0_i32_0, %c0_i32_1 : i32, i32, i32, i32
  }
  func.func @transform_11(%arg0: i32, %arg1: i32) -> (i32, i32, i32, i32) {
    %c0_i32 = arith.constant 0 : i32
    %c0_i32_0 = arith.constant 0 : i32
    %c0_i32_1 = arith.constant 0 : i32
    %c0_i32_2 = arith.constant 0 : i32
    return %arg1, %c0_i32, %c0_i32_0, %c0_i32_1 : i32, i32, i32, i32
  }
  func.func @transform_12(%arg0: i32, %arg1: i32) -> (i32, i32, i32) {
    %c0_i32 = arith.constant 0 : i32
    %c0_i32_0 = arith.constant 0 : i32
    %c0_i32_1 = arith.constant 0 : i32
    return %arg1, %c0_i32, %c0_i32_0 : i32, i32, i32
  }
  func.func @transform_13(%arg0: i32, %arg1: i32) -> (i32, i32, i32) {
    %c0_i32 = arith.constant 0 : i32
    %c0_i32_0 = arith.constant 0 : i32
    %c0_i32_1 = arith.constant 0 : i32
    return %arg1, %c0_i32, %c0_i32_0 : i32, i32, i32
  }
  func.func @transform_14(%arg0: i32, %arg1: i32) -> (i32, i32, i32) {
    %c0_i32 = arith.constant 0 : i32
    %c0_i32_0 = arith.constant 0 : i32
    %c0_i32_1 = arith.constant 0 : i32
    return %arg1, %c0_i32, %c0_i32_0 : i32, i32, i32
  }
  func.func @transform_15(%arg0: i32, %arg1: i32) -> (i32, i32, i32) {
    %c0_i32 = arith.constant 0 : i32
    %c0_i32_0 = arith.constant 0 : i32
    %c0_i32_1 = arith.constant 0 : i32
    return %arg1, %c0_i32, %c0_i32_0 : i32, i32, i32
  }
  func.func @transform_16(%arg0: i32, %arg1: i32) -> (i32, i32, i32) {
    %c0_i32 = arith.constant 0 : i32
    %c0_i32_0 = arith.constant 0 : i32
    %c0_i32_1 = arith.constant 0 : i32
    return %arg1, %c0_i32, %c0_i32_0 : i32, i32, i32
  }
  func.func @transform_17(%arg0: i32, %arg1: i32) -> (i32, i32, i32) {
    %c0_i32 = arith.constant 0 : i32
    %c0_i32_0 = arith.constant 0 : i32
    %c0_i32_1 = arith.constant 0 : i32
    return %arg1, %c0_i32, %c0_i32_0 : i32, i32, i32
  }
  func.func @transform_18(%arg0: i32, %arg1: i32) -> (i32, i32, i32) {
    %c0_i32 = arith.constant 0 : i32
    %c0_i32_0 = arith.constant 0 : i32
    %c0_i32_1 = arith.constant 0 : i32
    return %arg1, %c0_i32, %c0_i32_0 : i32, i32, i32
  }
  func.func @transform_19(%arg0: i32, %arg1: i32) -> (i32, i32, i32) {
    %c0_i32 = arith.constant 0 : i32
    %c0_i32_0 = arith.constant 0 : i32
    %c0_i32_1 = arith.constant 0 : i32
    return %arg1, %c0_i32, %c0_i32_0 : i32, i32, i32
  }
  func.func @transform_20(%arg0: i32, %arg1: i32) -> (i32, i32, i32) {
    %c0_i32 = arith.constant 0 : i32
    %c0_i32_0 = arith.constant 0 : i32
    %c0_i32_1 = arith.constant 0 : i32
    return %arg1, %c0_i32, %c0_i32_0 : i32, i32, i32
  }
  func.func @transform_21(%arg0: i32, %arg1: i32) -> (i32, i32) {
    %c0_i32 = arith.constant 0 : i32
    %c0_i32_0 = arith.constant 0 : i32
    %c0_i32_1 = arith.constant 0 : i32
    return %c0_i32, %c0_i32_0 : i32, i32
  }
  func.func @transform_22(%arg0: i32, %arg1: i32) -> (i32, i32) {
    %c0_i32 = arith.constant 0 : i32
    %c0_i32_0 = arith.constant 0 : i32
    %c0_i32_1 = arith.constant 0 : i32
    return %c0_i32, %c0_i32_0 : i32, i32
  }
  func.func @transform_23(%arg0: i32, %arg1: i32) -> (i32, i32, i32) {
    %c0_i32 = arith.constant 0 : i32
    %c0_i32_0 = arith.constant 0 : i32
    %c0_i32_1 = arith.constant 0 : i32
    return %arg0, %c0_i32, %c0_i32_0 : i32, i32, i32
  }
}

</mosaic_0001>

<llo_original>
// kernel: semantic_loss.1
$region0: #{semantic_loss.1}
  #allocation0 [shape = 'u32[]', space=smem, size = 0x4, offset = 0x4, fixed_abs, tag = 'smem constant byte address 0x4 - core index']
  #allocation1 [shape = 'u32[144,128]{1,0:T(1,128)}', space=vmem, size = 0x12000, scoped, tag = 'internal scratch']
  #allocation2 [shape = 'f32[2,5,32]{2,1,0:T(8,128)}', space=vmem, size = 0x2000, scoped, tag = 'scratch operand']
  %s0 = inlined_call_operand.vmem [shape: bf16[2,2,5,588], index: 0, kind: input, shape index: {}]
  %s1 = inlined_call_operand.vmem [shape: bf16[588,32], index: 1, kind: input, shape index: {}]
  %s2 = inlined_call_operand.vmem [shape: f32[5,32], index: 2, kind: input, shape index: {}]
  %s3 = inlined_call_operand.vmem [shape: f32[2,1,32], index: 3, kind: input, shape index: {}]
  %s4 = inlined_call_operand.vmem [shape: f32[2,1,32], index: 4, kind: input, shape index: {}]
  %s5 = inlined_call_operand.vmem [shape: bf16[2,2,32,16], index: 5, kind: input, shape index: {}]
  %s6 = inlined_call_operand.vmem [shape: bf16[2,2,32,16], index: 6, kind: input, shape index: {}]
  %s7 = inlined_call_operand.vmem [shape: bf16[2,2,32,16], index: 7, kind: input, shape index: {}]
  %s8 = inlined_call_operand.vmem [shape: f32[2,2,1,16], index: 8, kind: input, shape index: {}]
  %s9 = inlined_call_operand.vmem [shape: f32[2,2,1,16], index: 9, kind: input, shape index: {}]
  %s10 = inlined_call_operand.vmem [shape: f32[2,2,1,16], index: 10, kind: input, shape index: {}]
  %s11 = inlined_call_operand.vmem [shape: bf16[2,2,16,32], index: 11, kind: input, shape index: {}]
  %s12 = inlined_call_operand.vmem [shape: f32[2,1,32], index: 12, kind: input, shape index: {}]
  %s13 = inlined_call_operand.vmem [shape: f32[2,1,32], index: 13, kind: input, shape index: {}]
  %s14 = inlined_call_operand.vmem [shape: f32[2,1,32], index: 14, kind: input, shape index: {}]
  %s15 = inlined_call_operand.vmem [shape: f32[2,1,32], index: 15, kind: input, shape index: {}]
  %s16 = inlined_call_operand.vmem [shape: bf16[2,32,128], index: 16, kind: input, shape index: {}]
  %s17 = inlined_call_operand.vmem [shape: f32[2,1,128], index: 17, kind: input, shape index: {}]
  %s18 = inlined_call_operand.vmem [shape: bf16[2,128,32], index: 18, kind: input, shape index: {}]
  %s19 = inlined_call_operand.vmem [shape: f32[2,1,32], index: 19, kind: input, shape index: {}]
  %s20 = inlined_call_operand.vmem [shape: f32[2,1,32], index: 20, kind: input, shape index: {}]
  %s21 = inlined_call_operand.vmem [shape: f32[1,32], index: 21, kind: input, shape index: {}]
  %s22 = inlined_call_operand.vmem [shape: f32[1,32], index: 22, kind: input, shape index: {}]
  %s23 = inlined_call_operand.vmem [shape: f32[2,1,1], index: 23, kind: output, shape index: {}]
  %s24 = sld [smem:[#allocation0]]
  $region133: #{semantic_loss.1} parent=0
    _
  %s26 = ssub.s32 1, %s24
  %s27 = scalar_select 0, %s26, %s24
  loop: start=0, step=1, limit=6
  $region2: #{semantic_loss.1} parent=0 // loop_pre_header
    _
  $region3: #{semantic_loss.1} parent=0 // loop_header
    %s29 = sphi 0, %s33
    %p30 = scmp.ge.s32.totalorder %s29, 6
    %s36 = sphi 0, %s48
    %s37 = sphi 0, %s44
    %s38 = sphi 0, %s36
    %s39 = sphi 0, %s37
    %s40 = sphi 0, %s38
    %s41 = sphi 0, %s39
    %s51 = sphi 0, %s53
    %s54 = sphi 0, %s51
    %s55 = sphi 0, %s54
    %s71 = sphi 0, %s55
    %s75 = sphi 0, %s75
    %s77 = sphi 0, %s75
    %s78 = sphi 0, %s77
    %s92 = sphi 0, %s78
    %s96 = sphi 0, %s96
    %s98 = sphi 0, %s96
    %s99 = sphi 0, %s98
    %s113 = sphi 0, %s99
    %s119 = sphi 0, %s121
    %s122 = sphi 0, %s119
    %s123 = sphi 0, %s122
    %s139 = sphi 0, %s123
    %s145 = sphi 0, %s147
    %s148 = sphi 0, %s145
    %s149 = sphi 0, %s148
    %s165 = sphi 0, %s149
    %s171 = sphi 0, %s173
    %s174 = sphi 0, %s171
    %s175 = sphi 0, %s174
    %s191 = sphi 0, %s175
    %s197 = sphi 0, %s199
    %s200 = sphi 0, %s197
    %s201 = sphi 0, %s200
    %s217 = sphi 0, %s201
    %s223 = sphi 0, %s225
    %s226 = sphi 0, %s223
    %s227 = sphi 0, %s226
    %s243 = sphi 0, %s227
    %s249 = sphi 0, %s251
    %s252 = sphi 0, %s249
    %s253 = sphi 0, %s252
    %s269 = sphi 0, %s253
    %s275 = sphi 0, %s277
    %s278 = sphi 0, %s275
    %s279 = sphi 0, %s278
    %s295 = sphi 0, %s279
    %s301 = sphi 0, %s303
    %s304 = sphi 0, %s301
    %s305 = sphi 0, %s304
    %s321 = sphi 0, %s305
    %s327 = sphi 0, %s329
    %s330 = sphi 0, %s327
    %s331 = sphi 0, %s330
    %s347 = sphi 0, %s331
    %s353 = sphi 0, %s355
    %s356 = sphi 0, %s353
    %s357 = sphi 0, %s356
    %s373 = sphi 0, %s357
    %s379 = sphi 0, %s381
    %s382 = sphi 0, %s379
    %s383 = sphi 0, %s382
    %s399 = sphi 0, %s383
    %s405 = sphi 0, %s407
    %s408 = sphi 0, %s405
    %s409 = sphi 0, %s408
    %s425 = sphi 0, %s409
    %s431 = sphi 0, %s433
    %s434 = sphi 0, %s431
    %s435 = sphi 0, %s434
    %s451 = sphi 0, %s435
    %s457 = sphi 0, %s459
    %s460 = sphi 0, %s457
    %s461 = sphi 0, %s460
    %s477 = sphi 0, %s461
    %s483 = sphi 0, %s485
    %s486 = sphi 0, %s483
    %s487 = sphi 0, %s486
    %s503 = sphi 0, %s487
    %s509 = sphi 0, %s511
    %s512 = sphi 0, %s509
    %s513 = sphi 0, %s512
    %s529 = sphi 0, %s513
    %s535 = sphi 0, %s537
    %s538 = sphi 0, %s535
    %s539 = sphi 0, %s538
    %s555 = sphi 0, %s539
    %s561 = sphi 0, %s563
    %s564 = sphi 0, %s561
    %s565 = sphi 0, %s564
    %s581 = sphi 0, %s565
    %s585 = sphi 0, %s585
    %s587 = sphi 0, %s585
    %s588 = sphi 0, %s587
    %s602 = sphi 0, %s588
    %s606 = sphi 0, %s606
    %s608 = sphi 0, %s606
    %s609 = sphi 0, %s608
    %s623 = sphi 0, %s609
    %s629 = sphi 0, %s631
    %s632 = sphi 0, %s629
    %s633 = sphi 0, %s632
    %s649 = sphi 0, %s633
  $region4: #{semantic_loss.1} parent=0 // loop_header_branch
    %32 = sbr.rel (%p30) target = $region8
  $region5: #{semantic_loss.1} parent=0 // loop_body
    %s34 = ssub.s32 %s29, 1
    %s35 = ssub.s32 %s29, 2
    %s42 = sadd.s32 1, %s37
    %p43 = scmp.ge.s32.totalorder %s42, 2
    %s44 = scalar_select %p43, 0, %s42
    %s45 = sadd.s32 1, %s36
    %s46 = scalar_select %p43, %s45, %s36
    %p47 = scmp.ge.s32.totalorder %s46, 2
    %s48 = scalar_select %p47, 0, %s46
    %s49 = ssub.s32 %s36, %s48
    %p50 = scmp.eq.s32.totalorder %s49, 0
    %s52 = sadd.s32 %s51, 1
    %s53 = scalar_select %p50, %s51, %s52
    %p56 = pneg %p50
    %p57 = scmp.eq.s32.totalorder %s29, 3
    %p58 = por %p56, %p57
    %p59 = scmp.ne.s32.totalorder %s51, %s54
    %p60 = scmp.eq.s32.totalorder %s29, 0
    %p61 = por %p59, %p60
    %p62 = scmp.ne.s32.totalorder %s51, %s54
    %p63 = scmp.eq.s32.totalorder %s34, 3
    %p64 = por %p62, %p63
    %p65 = scmp.ne.s32.totalorder %s54, %s55
    %p66 = scmp.eq.s32.totalorder %s34, 0
    %p67 = por %p65, %p66
    %p68 = scmp.ne.s32.totalorder %s54, %s55
    %p69 = scmp.eq.s32.totalorder %s35, 3
    %p70 = por %p68, %p69
    %p72 = scmp.ne.s32.totalorder %s55, %s71
    %p73 = scmp.eq.s32.totalorder %s35, 0
    %p74 = por %p72, %p73
    %s76 = sadd.s32 %s75, 1
    %p79 = scmp.eq.s32.totalorder %s29, 3
    %p80 = scmp.ne.s32.totalorder %s75, %s77
    %p81 = scmp.eq.s32.totalorder %s29, 0
    %p82 = por %p80, %p81
    %p83 = scmp.ne.s32.totalorder %s75, %s77
    %p84 = scmp.eq.s32.totalorder %s34, 3
    %p85 = por %p83, %p84
    %p86 = scmp.ne.s32.totalorder %s77, %s78
    %p87 = scmp.eq.s32.totalorder %s34, 0
    %p88 = por %p86, %p87
    %p89 = scmp.ne.s32.totalorder %s77, %s78
    %p90 = scmp.eq.s32.totalorder %s35, 3
    %p91 = por %p89, %p90
    %p93 = scmp.ne.s32.totalorder %s78, %s92
    %p94 = scmp.eq.s32.totalorder %s35, 0
    %p95 = por %p93, %p94
    %s97 = sadd.s32 %s96, 1
    %p100 = scmp.eq.s32.totalorder %s29, 3
    %p101 = scmp.ne.s32.totalorder %s96, %s98
    %p102 = scmp.eq.s32.totalorder %s29, 0
    %p103 = por %p101, %p102
    %p104 = scmp.ne.s32.totalorder %s96, %s98
    %p105 = scmp.eq.s32.totalorder %s34, 3
    %p106 = por %p104, %p105
    %p107 = scmp.ne.s32.totalorder %s98, %s99
    %p108 = scmp.eq.s32.totalorder %s34, 0
    %p109 = por %p107, %p108
    %p110 = scmp.ne.s32.totalorder %s98, %s99
    %p111 = scmp.eq.s32.totalorder %s35, 3
    %p112 = por %p110, %p111
    %p114 = scmp.ne.s32.totalorder %s99, %s113
    %p115 = scmp.eq.s32.totalorder %s35, 0
    %p116 = por %p114, %p115
    %s117 = ssub.s32 %s37, %s44
    %p118 = scmp.eq.s32.totalorder %s117, 0
    %s120 = sadd.s32 %s119, 1
    %s121 = scalar_select %p118, %s119, %s120
    %p124 = pneg %p118
    %p125 = scmp.eq.s32.totalorder %s29, 3
    %p126 = por %p124, %p125
    %p127 = scmp.ne.s32.totalorder %s119, %s122
    %p128 = scmp.eq.s32.totalorder %s29, 0
    %p129 = por %p127, %p128
    %p130 = scmp.ne.s32.totalorder %s119, %s122
    %p131 = scmp.eq.s32.totalorder %s34, 3
    %p132 = por %p130, %p131
    %p133 = scmp.ne.s32.totalorder %s122, %s123
    %p134 = scmp.eq.s32.totalorder %s34, 0
    %p135 = por %p133, %p134
    %p136 = scmp.ne.s32.totalorder %s122, %s123
    %p137 = scmp.eq.s32.totalorder %s35, 3
    %p138 = por %p136, %p137
    %p140 = scmp.ne.s32.totalorder %s123, %s139
    %p141 = scmp.eq.s32.totalorder %s35, 0
    %p142 = por %p140, %p141
    %s143 = ssub.s32 %s37, %s44
    %p144 = scmp.eq.s32.totalorder %s143, 0
    %s146 = sadd.s32 %s145, 1
    %s147 = scalar_select %p144, %s145, %s146
    %p150 = pneg %p144
    %p151 = scmp.eq.s32.totalorder %s29, 3
    %p152 = por %p150, %p151
    %p153 = scmp.ne.s32.totalorder %s145, %s148
    %p154 = scmp.eq.s32.totalorder %s29, 0
    %p155 = por %p153, %p154
    %p156 = scmp.ne.s32.totalorder %s145, %s148
    %p157 = scmp.eq.s32.totalorder %s34, 3
    %p158 = por %p156, %p157
    %p159 = scmp.ne.s32.totalorder %s148, %s149
    %p160 = scmp.eq.s32.totalorder %s34, 0
    %p161 = por %p159, %p160
    %p162 = scmp.ne.s32.totalorder %s148, %s149
    %p163 = scmp.eq.s32.totalorder %s35, 3
    %p164 = por %p162, %p163
    %p166 = scmp.ne.s32.totalorder %s149, %s165
    %p167 = scmp.eq.s32.totalorder %s35, 0
    %p168 = por %p166, %p167
    %s169 = ssub.s32 %s37, %s44
    %p170 = scmp.eq.s32.totalorder %s169, 0
    %s172 = sadd.s32 %s171, 1
    %s173 = scalar_select %p170, %s171, %s172
    %p176 = pneg %p170
    %p177 = scmp.eq.s32.totalorder %s29, 3
    %p178 = por %p176, %p177
    %p179 = scmp.ne.s32.totalorder %s171, %s174
    %p180 = scmp.eq.s32.totalorder %s29, 0
    %p181 = por %p179, %p180
    %p182 = scmp.ne.s32.totalorder %s171, %s174
    %p183 = scmp.eq.s32.totalorder %s34, 3
    %p184 = por %p182, %p183
    %p185 = scmp.ne.s32.totalorder %s174, %s175
    %p186 = scmp.eq.s32.totalorder %s34, 0
    %p187 = por %p185, %p186
    %p188 = scmp.ne.s32.totalorder %s174, %s175
    %p189 = scmp.eq.s32.totalorder %s35, 3
    %p190 = por %p188, %p189
    %p192 = scmp.ne.s32.totalorder %s175, %s191
    %p193 = scmp.eq.s32.totalorder %s35, 0
    %p194 = por %p192, %p193
    %s195 = ssub.s32 %s37, %s44
    %p196 = scmp.eq.s32.totalorder %s195, 0
    %s198 = sadd.s32 %s197, 1
    %s199 = scalar_select %p196, %s197, %s198
    %p202 = pneg %p196
    %p203 = scmp.eq.s32.totalorder %s29, 3
    %p204 = por %p202, %p203
    %p205 = scmp.ne.s32.totalorder %s197, %s200
    %p206 = scmp.eq.s32.totalorder %s29, 0
    %p207 = por %p205, %p206
    %p208 = scmp.ne.s32.totalorder %s197, %s200
    %p209 = scmp.eq.s32.totalorder %s34, 3
    %p210 = por %p208, %p209
    %p211 = scmp.ne.s32.totalorder %s200, %s201
    %p212 = scmp.eq.s32.totalorder %s34, 0
    %p213 = por %p211, %p212
    %p214 = scmp.ne.s32.totalorder %s200, %s201
    %p215 = scmp.eq.s32.totalorder %s35, 3
    %p216 = por %p214, %p215
    %p218 = scmp.ne.s32.totalorder %s201, %s217
    %p219 = scmp.eq.s32.totalorder %s35, 0
    %p220 = por %p218, %p219
    %s221 = ssub.s32 %s37, %s44
    %p222 = scmp.eq.s32.totalorder %s221, 0
    %s224 = sadd.s32 %s223, 1
    %s225 = scalar_select %p222, %s223, %s224
    %p228 = pneg %p222
    %p229 = scmp.eq.s32.totalorder %s29, 3
    %p230 = por %p228, %p229
    %p231 = scmp.ne.s32.totalorder %s223, %s226
    %p232 = scmp.eq.s32.totalorder %s29, 0
    %p233 = por %p231, %p232
    %p234 = scmp.ne.s32.totalorder %s223, %s226
    %p235 = scmp.eq.s32.totalorder %s34, 3
    %p236 = por %p234, %p235
    %p237 = scmp.ne.s32.totalorder %s226, %s227
    %p238 = scmp.eq.s32.totalorder %s34, 0
    %p239 = por %p237, %p238
    %p240 = scmp.ne.s32.totalorder %s226, %s227
    %p241 = scmp.eq.s32.totalorder %s35, 3
    %p242 = por %p240, %p241
    %p244 = scmp.ne.s32.totalorder %s227, %s243
    %p245 = scmp.eq.s32.totalorder %s35, 0
    %p246 = por %p244, %p245
    %s247 = ssub.s32 %s37, %s44
    %p248 = scmp.eq.s32.totalorder %s247, 0
    %s250 = sadd.s32 %s249, 1
    %s251 = scalar_select %p248, %s249, %s250
    %p254 = pneg %p248
    %p255 = scmp.eq.s32.totalorder %s29, 3
    %p256 = por %p254, %p255
    %p257 = scmp.ne.s32.totalorder %s249, %s252
    %p258 = scmp.eq.s32.totalorder %s29, 0
    %p259 = por %p257, %p258
    %p260 = scmp.ne.s32.totalorder %s249, %s252
    %p261 = scmp.eq.s32.totalorder %s34, 3
    %p262 = por %p260, %p261
    %p263 = scmp.ne.s32.totalorder %s252, %s253
    %p264 = scmp.eq.s32.totalorder %s34, 0
    %p265 = por %p263, %p264
    %p266 = scmp.ne.s32.totalorder %s252, %s253
    %p267 = scmp.eq.s32.totalorder %s35, 3
    %p268 = por %p266, %p267
    %p270 = scmp.ne.s32.totalorder %s253, %s269
    %p271 = scmp.eq.s32.totalorder %s35, 0
    %p272 = por %p270, %p271
    %s273 = ssub.s32 %s37, %s44
    %p274 = scmp.eq.s32.totalorder %s273, 0
    %s276 = sadd.s32 %s275, 1
    %s277 = scalar_select %p274, %s275, %s276
    %p280 = pneg %p274
    %p281 = scmp.eq.s32.totalorder %s29, 3
    %p282 = por %p280, %p281
    %p283 = scmp.ne.s32.totalorder %s275, %s278
    %p284 = scmp.eq.s32.totalorder %s29, 0
    %p285 = por %p283, %p284
    %p286 = scmp.ne.s32.totalorder %s275, %s278
    %p287 = scmp.eq.s32.totalorder %s34, 3
    %p288 = por %p286, %p287
    %p289 = scmp.ne.s32.totalorder %s278, %s279
    %p290 = scmp.eq.s32.totalorder %s34, 0
    %p291 = por %p289, %p290
    %p292 = scmp.ne.s32.totalorder %s278, %s279
    %p293 = scmp.eq.s32.totalorder %s35, 3
    %p294 = por %p292, %p293
    %p296 = scmp.ne.s32.totalorder %s279, %s295
    %p297 = scmp.eq.s32.totalorder %s35, 0
    %p298 = por %p296, %p297
    %s299 = ssub.s32 %s37, %s44
    %p300 = scmp.eq.s32.totalorder %s299, 0
    %s302 = sadd.s32 %s301, 1
    %s303 = scalar_select %p300, %s301, %s302
    %p306 = pneg %p300
    %p307 = scmp.eq.s32.totalorder %s29, 3
    %p308 = por %p306, %p307
    %p309 = scmp.ne.s32.totalorder %s301, %s304
    %p310 = scmp.eq.s32.totalorder %s29, 0
    %p311 = por %p309, %p310
    %p312 = scmp.ne.s32.totalorder %s301, %s304
    %p313 = scmp.eq.s32.totalorder %s34, 3
    %p314 = por %p312, %p313
    %p315 = scmp.ne.s32.totalorder %s304, %s305
    %p316 = scmp.eq.s32.totalorder %s34, 0
    %p317 = por %p315, %p316
    %p318 = scmp.ne.s32.totalorder %s304, %s305
    %p319 = scmp.eq.s32.totalorder %s35, 3
    %p320 = por %p318, %p319
    %p322 = scmp.ne.s32.totalorder %s305, %s321
    %p323 = scmp.eq.s32.totalorder %s35, 0
    %p324 = por %p322, %p323
    %s325 = ssub.s32 %s37, %s44
    %p326 = scmp.eq.s32.totalorder %s325, 0
    %s328 = sadd.s32 %s327, 1
    %s329 = scalar_select %p326, %s327, %s328
    %p332 = pneg %p326
    %p333 = scmp.eq.s32.totalorder %s29, 3
    %p334 = por %p332, %p333
    %p335 = scmp.ne.s32.totalorder %s327, %s330
    %p336 = scmp.eq.s32.totalorder %s29, 0
    %p337 = por %p335, %p336
    %p338 = scmp.ne.s32.totalorder %s327, %s330
    %p339 = scmp.eq.s32.totalorder %s34, 3
    %p340 = por %p338, %p339
    %p341 = scmp.ne.s32.totalorder %s330, %s331
    %p342 = scmp.eq.s32.totalorder %s34, 0
    %p343 = por %p341, %p342
    %p344 = scmp.ne.s32.totalorder %s330, %s331
    %p345 = scmp.eq.s32.totalorder %s35, 3
    %p346 = por %p344, %p345
    %p348 = scmp.ne.s32.totalorder %s331, %s347
    %p349 = scmp.eq.s32.totalorder %s35, 0
    %p350 = por %p348, %p349
    %s351 = ssub.s32 %s37, %s44
    %p352 = scmp.eq.s32.totalorder %s351, 0
    %s354 = sadd.s32 %s353, 1
    %s355 = scalar_select %p352, %s353, %s354
    %p358 = pneg %p352
    %p359 = scmp.eq.s32.totalorder %s29, 3
    %p360 = por %p358, %p359
    %p361 = scmp.ne.s32.totalorder %s353, %s356
    %p362 = scmp.eq.s32.totalorder %s29, 0
    %p363 = por %p361, %p362
    %p364 = scmp.ne.s32.totalorder %s353, %s356
    %p365 = scmp.eq.s32.totalorder %s34, 3
    %p366 = por %p364, %p365
    %p367 = scmp.ne.s32.totalorder %s356, %s357
    %p368 = scmp.eq.s32.totalorder %s34, 0
    %p369 = por %p367, %p368
    %p370 = scmp.ne.s32.totalorder %s356, %s357
    %p371 = scmp.eq.s32.totalorder %s35, 3
    %p372 = por %p370, %p371
    %p374 = scmp.ne.s32.totalorder %s357, %s373
    %p375 = scmp.eq.s32.totalorder %s35, 0
    %p376 = por %p374, %p375
    %s377 = ssub.s32 %s37, %s44
    %p378 = scmp.eq.s32.totalorder %s377, 0
    %s380 = sadd.s32 %s379, 1
    %s381 = scalar_select %p378, %s379, %s380
    %p384 = pneg %p378
    %p385 = scmp.eq.s32.totalorder %s29, 3
    %p386 = por %p384, %p385
    %p387 = scmp.ne.s32.totalorder %s379, %s382
    %p388 = scmp.eq.s32.totalorder %s29, 0
    %p389 = por %p387, %p388
    %p390 = scmp.ne.s32.totalorder %s379, %s382
    %p391 = scmp.eq.s32.totalorder %s34, 3
    %p392 = por %p390, %p391
    %p393 = scmp.ne.s32.totalorder %s382, %s383
    %p394 = scmp.eq.s32.totalorder %s34, 0
    %p395 = por %p393, %p394
    %p396 = scmp.ne.s32.totalorder %s382, %s383
    %p397 = scmp.eq.s32.totalorder %s35, 3
    %p398 = por %p396, %p397
    %p400 = scmp.ne.s32.totalorder %s383, %s399
    %p401 = scmp.eq.s32.totalorder %s35, 0
    %p402 = por %p400, %p401
    %s403 = ssub.s32 %s37, %s44
    %p404 = scmp.eq.s32.totalorder %s403, 0
    %s406 = sadd.s32 %s405, 1
    %s407 = scalar_select %p404, %s405, %s406
    %p410 = pneg %p404
    %p411 = scmp.eq.s32.totalorder %s29, 3
    %p412 = por %p410, %p411
    %p413 = scmp.ne.s32.totalorder %s405, %s408
    %p414 = scmp.eq.s32.totalorder %s29, 0
    %p415 = por %p413, %p414
    %p416 = scmp.ne.s32.totalorder %s405, %s408
    %p417 = scmp.eq.s32.totalorder %s34, 3
    %p418 = por %p416, %p417
    %p419 = scmp.ne.s32.totalorder %s408, %s409
    %p420 = scmp.eq.s32.totalorder %s34, 0
    %p421 = por %p419, %p420
    %p422 = scmp.ne.s32.totalorder %s408, %s409
    %p423 = scmp.eq.s32.totalorder %s35, 3
    %p424 = por %p422, %p423
    %p426 = scmp.ne.s32.totalorder %s409, %s425
    %p427 = scmp.eq.s32.totalorder %s35, 0
    %p428 = por %p426, %p427
    %s429 = ssub.s32 %s37, %s44
    %p430 = scmp.eq.s32.totalorder %s429, 0
    %s432 = sadd.s32 %s431, 1
    %s433 = scalar_select %p430, %s431, %s432
    %p436 = pneg %p430
    %p437 = scmp.eq.s32.totalorder %s29, 3
    %p438 = por %p436, %p437
    %p439 = scmp.ne.s32.totalorder %s431, %s434
    %p440 = scmp.eq.s32.totalorder %s29, 0
    %p441 = por %p439, %p440
    %p442 = scmp.ne.s32.totalorder %s431, %s434
    %p443 = scmp.eq.s32.totalorder %s34, 3
    %p444 = por %p442, %p443
    %p445 = scmp.ne.s32.totalorder %s434, %s435
    %p446 = scmp.eq.s32.totalorder %s34, 0
    %p447 = por %p445, %p446
    %p448 = scmp.ne.s32.totalorder %s434, %s435
    %p449 = scmp.eq.s32.totalorder %s35, 3
    %p450 = por %p448, %p449
    %p452 = scmp.ne.s32.totalorder %s435, %s451
    %p453 = scmp.eq.s32.totalorder %s35, 0
    %p454 = por %p452, %p453
    %s455 = ssub.s32 %s37, %s44
    %p456 = scmp.eq.s32.totalorder %s455, 0
    %s458 = sadd.s32 %s457, 1
    %s459 = scalar_select %p456, %s457, %s458
    %p462 = pneg %p456
    %p463 = scmp.eq.s32.totalorder %s29, 3
    %p464 = por %p462, %p463
    %p465 = scmp.ne.s32.totalorder %s457, %s460
    %p466 = scmp.eq.s32.totalorder %s29, 0
    %p467 = por %p465, %p466
    %p468 = scmp.ne.s32.totalorder %s457, %s460
    %p469 = scmp.eq.s32.totalorder %s34, 3
    %p470 = por %p468, %p469
    %p471 = scmp.ne.s32.totalorder %s460, %s461
    %p472 = scmp.eq.s32.totalorder %s34, 0
    %p473 = por %p471, %p472
    %p474 = scmp.ne.s32.totalorder %s460, %s461
    %p475 = scmp.eq.s32.totalorder %s35, 3
    %p476 = por %p474, %p475
    %p478 = scmp.ne.s32.totalorder %s461, %s477
    %p479 = scmp.eq.s32.totalorder %s35, 0
    %p480 = por %p478, %p479
    %s481 = ssub.s32 %s37, %s44
    %p482 = scmp.eq.s32.totalorder %s481, 0
    %s484 = sadd.s32 %s483, 1
    %s485 = scalar_select %p482, %s483, %s484
    %p488 = pneg %p482
    %p489 = scmp.eq.s32.totalorder %s29, 3
    %p490 = por %p488, %p489
    %p491 = scmp.ne.s32.totalorder %s483, %s486
    %p492 = scmp.eq.s32.totalorder %s29, 0
    %p493 = por %p491, %p492
    %p494 = scmp.ne.s32.totalorder %s483, %s486
    %p495 = scmp.eq.s32.totalorder %s34, 3
    %p496 = por %p494, %p495
    %p497 = scmp.ne.s32.totalorder %s486, %s487
    %p498 = scmp.eq.s32.totalorder %s34, 0
    %p499 = por %p497, %p498
    %p500 = scmp.ne.s32.totalorder %s486, %s487
    %p501 = scmp.eq.s32.totalorder %s35, 3
    %p502 = por %p500, %p501
    %p504 = scmp.ne.s32.totalorder %s487, %s503
    %p505 = scmp.eq.s32.totalorder %s35, 0
    %p506 = por %p504, %p505
    %s507 = ssub.s32 %s37, %s44
    %p508 = scmp.eq.s32.totalorder %s507, 0
    %s510 = sadd.s32 %s509, 1
    %s511 = scalar_select %p508, %s509, %s510
    %p514 = pneg %p508
    %p515 = scmp.eq.s32.totalorder %s29, 3
    %p516 = por %p514, %p515
    %p517 = scmp.ne.s32.totalorder %s509, %s512
    %p518 = scmp.eq.s32.totalorder %s29, 0
    %p519 = por %p517, %p518
    %p520 = scmp.ne.s32.totalorder %s509, %s512
    %p521 = scmp.eq.s32.totalorder %s34, 3
    %p522 = por %p520, %p521
    %p523 = scmp.ne.s32.totalorder %s512, %s513
    %p524 = scmp.eq.s32.totalorder %s34, 0
    %p525 = por %p523, %p524
    %p526 = scmp.ne.s32.totalorder %s512, %s513
    %p527 = scmp.eq.s32.totalorder %s35, 3
    %p528 = por %p526, %p527
    %p530 = scmp.ne.s32.totalorder %s513, %s529
    %p531 = scmp.eq.s32.totalorder %s35, 0
    %p532 = por %p530, %p531
    %s533 = ssub.s32 %s37, %s44
    %p534 = scmp.eq.s32.totalorder %s533, 0
    %s536 = sadd.s32 %s535, 1
    %s537 = scalar_select %p534, %s535, %s536
    %p540 = pneg %p534
    %p541 = scmp.eq.s32.totalorder %s29, 3
    %p542 = por %p540, %p541
    %p543 = scmp.ne.s32.totalorder %s535, %s538
    %p544 = scmp.eq.s32.totalorder %s29, 0
    %p545 = por %p543, %p544
    %p546 = scmp.ne.s32.totalorder %s535, %s538
    %p547 = scmp.eq.s32.totalorder %s34, 3
    %p548 = por %p546, %p547
    %p549 = scmp.ne.s32.totalorder %s538, %s539
    %p550 = scmp.eq.s32.totalorder %s34, 0
    %p551 = por %p549, %p550
    %p552 = scmp.ne.s32.totalorder %s538, %s539
    %p553 = scmp.eq.s32.totalorder %s35, 3
    %p554 = por %p552, %p553
    %p556 = scmp.ne.s32.totalorder %s539, %s555
    %p557 = scmp.eq.s32.totalorder %s35, 0
    %p558 = por %p556, %p557
    %s559 = ssub.s32 %s37, %s44
    %p560 = scmp.eq.s32.totalorder %s559, 0
    %s562 = sadd.s32 %s561, 1
    %s563 = scalar_select %p560, %s561, %s562
    %p566 = pneg %p560
    %p567 = scmp.eq.s32.totalorder %s29, 3
    %p568 = por %p566, %p567
    %p569 = scmp.ne.s32.totalorder %s561, %s564
    %p570 = scmp.eq.s32.totalorder %s29, 0
    %p571 = por %p569, %p570
    %p572 = scmp.ne.s32.totalorder %s561, %s564
    %p573 = scmp.eq.s32.totalorder %s34, 3
    %p574 = por %p572, %p573
    %p575 = scmp.ne.s32.totalorder %s564, %s565
    %p576 = scmp.eq.s32.totalorder %s34, 0
    %p577 = por %p575, %p576
    %p578 = scmp.ne.s32.totalorder %s564, %s565
    %p579 = scmp.eq.s32.totalorder %s35, 3
    %p580 = por %p578, %p579
    %p582 = scmp.ne.s32.totalorder %s565, %s581
    %p583 = scmp.eq.s32.totalorder %s35, 0
    %p584 = por %p582, %p583
    %s586 = sadd.s32 %s585, 1
    %p589 = scmp.eq.s32.totalorder %s29, 3
    %p590 = scmp.ne.s32.totalorder %s585, %s587
    %p591 = scmp.eq.s32.totalorder %s29, 0
    %p592 = por %p590, %p591
    %p593 = scmp.ne.s32.totalorder %s585, %s587
    %p594 = scmp.eq.s32.totalorder %s34, 3
    %p595 = por %p593, %p594
    %p596 = scmp.ne.s32.totalorder %s587, %s588
    %p597 = scmp.eq.s32.totalorder %s34, 0
    %p598 = por %p596, %p597
    %p599 = scmp.ne.s32.totalorder %s587, %s588
    %p600 = scmp.eq.s32.totalorder %s35, 3
    %p601 = por %p599, %p600
    %p603 = scmp.ne.s32.totalorder %s588, %s602
    %p604 = scmp.eq.s32.totalorder %s35, 0
    %p605 = por %p603, %p604
    %s607 = sadd.s32 %s606, 1
    %p610 = scmp.eq.s32.totalorder %s29, 3
    %p611 = scmp.ne.s32.totalorder %s606, %s608
    %p612 = scmp.eq.s32.totalorder %s29, 0
    %p613 = por %p611, %p612
    %p614 = scmp.ne.s32.totalorder %s606, %s608
    %p615 = scmp.eq.s32.totalorder %s34, 3
    %p616 = por %p614, %p615
    %p617 = scmp.ne.s32.totalorder %s608, %s609
    %p618 = scmp.eq.s32.totalorder %s34, 0
    %p619 = por %p617, %p618
    %p620 = scmp.ne.s32.totalorder %s608, %s609
    %p621 = scmp.eq.s32.totalorder %s35, 3
    %p622 = por %p620, %p621
    %p624 = scmp.ne.s32.totalorder %s609, %s623
    %p625 = scmp.eq.s32.totalorder %s35, 0
    %p626 = por %p624, %p625
    %s627 = ssub.s32 %s36, %s48
    %p628 = scmp.eq.s32.totalorder %s627, 0
    %s630 = sadd.s32 %s629, 1
    %s631 = scalar_select %p628, %s629, %s630
    %p634 = pneg %p628
    %p635 = scmp.eq.s32.totalorder %s29, 3
    %p636 = por %p634, %p635
    %p637 = scmp.ne.s32.totalorder %s629, %s632
    %p638 = scmp.eq.s32.totalorder %s29, 0
    %p639 = por %p637, %p638
    %p640 = scmp.ne.s32.totalorder %s629, %s632
    %p641 = scmp.eq.s32.totalorder %s34, 3
    %p642 = por %p640, %p641
    %p643 = scmp.ne.s32.totalorder %s632, %s633
    %p644 = scmp.eq.s32.totalorder %s34, 0
    %p645 = por %p643, %p644
    %p646 = scmp.ne.s32.totalorder %s632, %s633
    %p647 = scmp.eq.s32.totalorder %s35, 3
    %p648 = por %p646, %p647
    %p650 = scmp.ne.s32.totalorder %s633, %s649
    %p651 = scmp.eq.s32.totalorder %s35, 0
    %p652 = por %p650, %p651
    %p653 = scmp.le.s32.totalorder 1, %s29
    %p654 = scmp.lt.s32.totalorder %s29, 5
    %p655 = pnand %p653, %p654
    %p656 = pneg %p655
    // Predicated region
    $region9: #{semantic_loss.1} parent=5 // pred_check
      _
    $region10: #{semantic_loss.1} parent=5 // pred_check_branch
      %658 = sbr.rel (%p655) target = $region12
    $region11: #{semantic_loss.1} parent=5 // pred_region
      %s659 = ssub.s32 %s29, 1
      // Predicated region
      $region13: #{semantic_loss.1} parent=11 // pred_check
        %p660 = pneg %p88
      $region14: #{semantic_loss.1} parent=11 // pred_check_branch
        %662 = sbr.rel (%p660) target = $region16
      $region15: #{semantic_loss.1} parent=11 // pred_region
        _
      $region16: #{semantic_loss.1} parent=11 // pred_fallthru
        _
      // Predicated region
      $region17: #{semantic_loss.1} parent=11 // pred_check
        %p663 = pneg %p109
      $region18: #{semantic_loss.1} parent=11 // pred_check_branch
        %665 = sbr.rel (%p663) target = $region20
      $region19: #{semantic_loss.1} parent=11 // pred_region
        _
      $region20: #{semantic_loss.1} parent=11 // pred_fallthru
        _
      // Predicated region
      $region21: #{semantic_loss.1} parent=11 // pred_check
        %p666 = pneg %p598
      $region22: #{semantic_loss.1} parent=11 // pred_check_branch
        %668 = sbr.rel (%p666) target = $region24
      $region23: #{semantic_loss.1} parent=11 // pred_region
        _
      $region24: #{semantic_loss.1} parent=11 // pred_fallthru
        _
      // Predicated region
      $region25: #{semantic_loss.1} parent=11 // pred_check
        %p669 = pneg %p619
      $region26: #{semantic_loss.1} parent=11 // pred_check_branch
        %671 = sbr.rel (%p669) target = $region28
      $region27: #{semantic_loss.1} parent=11 // pred_region
        _
      $region28: #{semantic_loss.1} parent=11 // pred_fallthru
        _
    $region12: #{semantic_loss.1} parent=5 // pred_fallthru
      _
    %p672 = scmp.lt.s32.totalorder %s29, 4
    // Predicated region
    $region29: #{semantic_loss.1} parent=5 // pred_check
      %p673 = pneg %p672
    $region30: #{semantic_loss.1} parent=5 // pred_check_branch
      %675 = sbr.rel (%p673) target = $region32
    $region31: #{semantic_loss.1} parent=5 // pred_region
      // Predicated region
      $region33: #{semantic_loss.1} parent=31 // pred_check
        %p676 = pneg %p61
      $region34: #{semantic_loss.1} parent=31 // pred_check_branch
        %678 = sbr.rel (%p676) target = $region36
      $region35: #{semantic_loss.1} parent=31 // pred_region
        %p679 = scmp.lt.s32.totalorder %s36, 1
        %s680 = scalar_select %p679, %s36, 1
        %s681 = smul.addr %s680, 10
        %s682 = smul.addr %s681, 4
        %s683 = scalar_lea.vmem %s0, %s682
      $region36: #{semantic_loss.1} parent=31 // pred_fallthru
        _
      // Predicated region
      $region37: #{semantic_loss.1} parent=31 // pred_check
        %p684 = pneg %p129
      $region38: #{semantic_loss.1} parent=31 // pred_check_branch
        %686 = sbr.rel (%p684) target = $region40
      $region39: #{semantic_loss.1} parent=31 // pred_region
        %p687 = scmp.lt.s32.totalorder %s37, 1
        %s688 = scalar_select %p687, %s37, 1
        %s689 = scalar_lea.vmem %s3, %s688
      $region40: #{semantic_loss.1} parent=31 // pred_fallthru
        _
      // Predicated region
      $region41: #{semantic_loss.1} parent=31 // pred_check
        %p690 = pneg %p155
      $region42: #{semantic_loss.1} parent=31 // pred_check_branch
        %692 = sbr.rel (%p690) target = $region44
      $region43: #{semantic_loss.1} parent=31 // pred_region
        %p693 = scmp.lt.s32.totalorder %s37, 1
        %s694 = scalar_select %p693, %s37, 1
        %s695 = scalar_lea.vmem %s4, %s694
      $region44: #{semantic_loss.1} parent=31 // pred_fallthru
        _
      // Predicated region
      $region45: #{semantic_loss.1} parent=31 // pred_check
        %p696 = pneg %p181
      $region46: #{semantic_loss.1} parent=31 // pred_check_branch
        %698 = sbr.rel (%p696) target = $region48
      $region47: #{semantic_loss.1} parent=31 // pred_region
        %p699 = scmp.lt.s32.totalorder %s37, 1
        %s700 = scalar_select %p699, %s37, 1
        %s701 = smul.addr %s700, 8
        %s702 = smul.addr %s701, 4
        %s703 = scalar_lea.vmem %s5, %s702
      $region48: #{semantic_loss.1} parent=31 // pred_fallthru
        _
      // Predicated region
      $region49: #{semantic_loss.1} parent=31 // pred_check
        %p704 = pneg %p207
      $region50: #{semantic_loss.1} parent=31 // pred_check_branch
        %706 = sbr.rel (%p704) target = $region52
      $region51: #{semantic_loss.1} parent=31 // pred_region
        %p707 = scmp.lt.s32.totalorder %s37, 1
        %s708 = scalar_select %p707, %s37, 1
        %s709 = smul.addr %s708, 8
        %s710 = smul.addr %s709, 4
        %s711 = scalar_lea.vmem %s6, %s710
      $region52: #{semantic_loss.1} parent=31 // pred_fallthru
        _
      // Predicated region
      $region53: #{semantic_loss.1} parent=31 // pred_check
        %p712 = pneg %p233
      $region54: #{semantic_loss.1} parent=31 // pred_check_branch
        %714 = sbr.rel (%p712) target = $region56
      $region55: #{semantic_loss.1} parent=31 // pred_region
        %p715 = scmp.lt.s32.totalorder %s37, 1
        %s716 = scalar_select %p715, %s37, 1
        %s717 = smul.addr %s716, 8
        %s718 = smul.addr %s717, 4
        %s719 = scalar_lea.vmem %s7, %s718
      $region56: #{semantic_loss.1} parent=31 // pred_fallthru
        _
      // Predicated region
      $region57: #{semantic_loss.1} parent=31 // pred_check
        %p720 = pneg %p259
      $region58: #{semantic_loss.1} parent=31 // pred_check_branch
        %722 = sbr.rel (%p720) target = $region60
      $region59: #{semantic_loss.1} parent=31 // pred_region
        %p723 = scmp.lt.s32.totalorder %s37, 1
        %s724 = scalar_select %p723, %s37, 1
        %s725 = smul.addr %s724, 2
        %s726 = scalar_lea.vmem %s8, %s725
      $region60: #{semantic_loss.1} parent=31 // pred_fallthru
        _
      // Predicated region
      $region61: #{semantic_loss.1} parent=31 // pred_check
        %p727 = pneg %p285
      $region62: #{semantic_loss.1} parent=31 // pred_check_branch
        %729 = sbr.rel (%p727) target = $region64
      $region63: #{semantic_loss.1} parent=31 // pred_region
        %p730 = scmp.lt.s32.totalorder %s37, 1
        %s731 = scalar_select %p730, %s37, 1
        %s732 = smul.addr %s731, 2
        %s733 = scalar_lea.vmem %s9, %s732
      $region64: #{semantic_loss.1} parent=31 // pred_fallthru
        _
      // Predicated region
      $region65: #{semantic_loss.1} parent=31 // pred_check
        %p734 = pneg %p311
      $region66: #{semantic_loss.1} parent=31 // pred_check_branch
        %736 = sbr.rel (%p734) target = $region68
      $region67: #{semantic_loss.1} parent=31 // pred_region
        %p737 = scmp.lt.s32.totalorder %s37, 1
        %s738 = scalar_select %p737, %s37, 1
        %s739 = smul.addr %s738, 2
        %s740 = scalar_lea.vmem %s10, %s739
      $region68: #{semantic_loss.1} parent=31 // pred_fallthru
        _
      // Predicated region
      $region69: #{semantic_loss.1} parent=31 // pred_check
        %p741 = pneg %p337
      $region70: #{semantic_loss.1} parent=31 // pred_check_branch
        %743 = sbr.rel (%p741) target = $region72
      $region71: #{semantic_loss.1} parent=31 // pred_region
        %p744 = scmp.lt.s32.totalorder %s37, 1
        %s745 = scalar_select %p744, %s37, 1
        %s746 = smul.addr %s745, 4
        %s747 = smul.addr %s746, 4
        %s748 = scalar_lea.vmem %s11, %s747
      $region72: #{semantic_loss.1} parent=31 // pred_fallthru
        _
      // Predicated region
      $region73: #{semantic_loss.1} parent=31 // pred_check
        %p749 = pneg %p363
      $region74: #{semantic_loss.1} parent=31 // pred_check_branch
        %751 = sbr.rel (%p749) target = $region76
      $region75: #{semantic_loss.1} parent=31 // pred_region
        %p752 = scmp.lt.s32.totalorder %s37, 1
        %s753 = scalar_select %p752, %s37, 1
        %s754 = scalar_lea.vmem %s12, %s753
      $region76: #{semantic_loss.1} parent=31 // pred_fallthru
        _
      // Predicated region
      $region77: #{semantic_loss.1} parent=31 // pred_check
        %p755 = pneg %p389
      $region78: #{semantic_loss.1} parent=31 // pred_check_branch
        %757 = sbr.rel (%p755) target = $region80
      $region79: #{semantic_loss.1} parent=31 // pred_region
        %p758 = scmp.lt.s32.totalorder %s37, 1
        %s759 = scalar_select %p758, %s37, 1
        %s760 = scalar_lea.vmem %s13, %s759
      $region80: #{semantic_loss.1} parent=31 // pred_fallthru
        _
      // Predicated region
      $region81: #{semantic_loss.1} parent=31 // pred_check
        %p761 = pneg %p415
      $region82: #{semantic_loss.1} parent=31 // pred_check_branch
        %763 = sbr.rel (%p761) target = $region84
      $region83: #{semantic_loss.1} parent=31 // pred_region
        %p764 = scmp.lt.s32.totalorder %s37, 1
        %s765 = scalar_select %p764, %s37, 1
        %s766 = scalar_lea.vmem %s14, %s765
      $region84: #{semantic_loss.1} parent=31 // pred_fallthru
        _
      // Predicated region
      $region85: #{semantic_loss.1} parent=31 // pred_check
        %p767 = pneg %p441
      $region86: #{semantic_loss.1} parent=31 // pred_check_branch
        %769 = sbr.rel (%p767) target = $region88
      $region87: #{semantic_loss.1} parent=31 // pred_region
        %p770 = scmp.lt.s32.totalorder %s37, 1
        %s771 = scalar_select %p770, %s37, 1
        %s772 = scalar_lea.vmem %s15, %s771
      $region88: #{semantic_loss.1} parent=31 // pred_fallthru
        _
      // Predicated region
      $region89: #{semantic_loss.1} parent=31 // pred_check
        %p773 = pneg %p467
      $region90: #{semantic_loss.1} parent=31 // pred_check_branch
        %775 = sbr.rel (%p773) target = $region92
      $region91: #{semantic_loss.1} parent=31 // pred_region
        %p776 = scmp.lt.s32.totalorder %s37, 1
        %s777 = scalar_select %p776, %s37, 1
        %s778 = smul.addr %s777, 4
        %s779 = smul.addr %s778, 4
        %s780 = scalar_lea.vmem %s16, %s779
      $region92: #{semantic_loss.1} parent=31 // pred_fallthru
        _
      // Predicated region
      $region93: #{semantic_loss.1} parent=31 // pred_check
        %p781 = pneg %p493
      $region94: #{semantic_loss.1} parent=31 // pred_check_branch
        %783 = sbr.rel (%p781) target = $region96
      $region95: #{semantic_loss.1} parent=31 // pred_region
        %p784 = scmp.lt.s32.totalorder %s37, 1
        %s785 = scalar_select %p784, %s37, 1
        %s786 = scalar_lea.vmem %s17, %s785
      $region96: #{semantic_loss.1} parent=31 // pred_fallthru
        _
      // Predicated region
      $region97: #{semantic_loss.1} parent=31 // pred_check
        %p787 = pneg %p519
      $region98: #{semantic_loss.1} parent=31 // pred_check_branch
        %789 = sbr.rel (%p787) target = $region100
      $region99: #{semantic_loss.1} parent=31 // pred_region
        %p790 = scmp.lt.s32.totalorder %s37, 1
        %s791 = scalar_select %p790, %s37, 1
        %s792 = smul.addr %s791, 16
        %s793 = smul.addr %s792, 4
        %s794 = scalar_lea.vmem %s18, %s793
      $region100: #{semantic_loss.1} parent=31 // pred_fallthru
        _
      // Predicated region
      $region101: #{semantic_loss.1} parent=31 // pred_check
        %p795 = pneg %p545
      $region102: #{semantic_loss.1} parent=31 // pred_check_branch
        %797 = sbr.rel (%p795) target = $region104
      $region103: #{semantic_loss.1} parent=31 // pred_region
        %p798 = scmp.lt.s32.totalorder %s37, 1
        %s799 = scalar_select %p798, %s37, 1
        %s800 = scalar_lea.vmem %s19, %s799
      $region104: #{semantic_loss.1} parent=31 // pred_fallthru
        _
      // Predicated region
      $region105: #{semantic_loss.1} parent=31 // pred_check
        %p801 = pneg %p571
      $region106: #{semantic_loss.1} parent=31 // pred_check_branch
        %803 = sbr.rel (%p801) target = $region108
      $region107: #{semantic_loss.1} parent=31 // pred_region
        %p804 = scmp.lt.s32.totalorder %s37, 1
        %s805 = scalar_select %p804, %s37, 1
        %s806 = scalar_lea.vmem %s20, %s805
      $region108: #{semantic_loss.1} parent=31 // pred_fallthru
        _
    $region32: #{semantic_loss.1} parent=5 // pred_fallthru
      _
    %p807 = scmp.le.s32.totalorder 1, %s29
    %p808 = scmp.lt.s32.totalorder %s29, 5
    %p809 = pnand %p807, %p808
    %p810 = pneg %p809
    // Predicated region
    $region109: #{semantic_loss.1} parent=5 // pred_check
      _
    $region110: #{semantic_loss.1} parent=5 // pred_check_branch
      %812 = sbr.rel (%p809) target = $region112
    $region111: #{semantic_loss.1} parent=5 // pred_region
      %s813 = ssub.s32 %s29, 1
      %p814 = scmp.lt.s32.totalorder %s38, 1
      %s815 = scalar_select %p814, %s38, 1
      %s816 = smul.addr %s815, 10
      %s817 = smul.addr %s816, 4
      %s818 = scalar_lea.vmem %s0, %s817
      %p819 = pneg %p67
      %p820 = pneg %p64
      %p821 = pneg %p88
      %p822 = pneg %p85
      %p823 = pneg %p109
      %p824 = pneg %p106
      %p825 = scmp.lt.s32.totalorder %s39, 1
      %s826 = scalar_select %p825, %s39, 1
      %s827 = scalar_lea.vmem %s3, %s826
      %p828 = pneg %p135
      %p829 = pneg %p132
      %p830 = scmp.lt.s32.totalorder %s39, 1
      %s831 = scalar_select %p830, %s39, 1
      %s832 = scalar_lea.vmem %s4, %s831
      %p833 = pneg %p161
      %p834 = pneg %p158
      %p835 = scmp.lt.s32.totalorder %s39, 1
      %s836 = scalar_select %p835, %s39, 1
      %s837 = smul.addr %s836, 8
      %s838 = smul.addr %s837, 4
      %s839 = scalar_lea.vmem %s5, %s838
      %p840 = pneg %p187
      %p841 = pneg %p184
      %p842 = scmp.lt.s32.totalorder %s39, 1
      %s843 = scalar_select %p842, %s39, 1
      %s844 = smul.addr %s843, 8
      %s845 = smul.addr %s844, 4
      %s846 = scalar_lea.vmem %s6, %s845
      %p847 = pneg %p213
      %p848 = pneg %p210
      %p849 = scmp.lt.s32.totalorder %s39, 1
      %s850 = scalar_select %p849, %s39, 1
      %s851 = smul.addr %s850, 8
      %s852 = smul.addr %s851, 4
      %s853 = scalar_lea.vmem %s7, %s852
      %p854 = pneg %p239
      %p855 = pneg %p236
      %p856 = scmp.lt.s32.totalorder %s39, 1
      %s857 = scalar_select %p856, %s39, 1
      %s858 = smul.addr %s857, 2
      %s859 = scalar_lea.vmem %s8, %s858
      %p860 = pneg %p265
      %p861 = pneg %p262
      %p862 = scmp.lt.s32.totalorder %s39, 1
      %s863 = scalar_select %p862, %s39, 1
      %s864 = smul.addr %s863, 2
      %s865 = scalar_lea.vmem %s9, %s864
      %p866 = pneg %p291
      %p867 = pneg %p288
      %p868 = scmp.lt.s32.totalorder %s39, 1
      %s869 = scalar_select %p868, %s39, 1
      %s870 = smul.addr %s869, 2
      %s871 = scalar_lea.vmem %s10, %s870
      %p872 = pneg %p317
      %p873 = pneg %p314
      %p874 = scmp.lt.s32.totalorder %s39, 1
      %s875 = scalar_select %p874, %s39, 1
      %s876 = smul.addr %s875, 4
      %s877 = smul.addr %s876, 4
      %s878 = scalar_lea.vmem %s11, %s877
      %p879 = pneg %p343
      %p880 = pneg %p340
      %p881 = scmp.lt.s32.totalorder %s39, 1
      %s882 = scalar_select %p881, %s39, 1
      %s883 = scalar_lea.vmem %s12, %s882
      %p884 = pneg %p369
      %p885 = pneg %p366
      %p886 = scmp.lt.s32.totalorder %s39, 1
      %s887 = scalar_select %p886, %s39, 1
      %s888 = scalar_lea.vmem %s13, %s887
      %p889 = pneg %p395
      %p890 = pneg %p392
      %p891 = scmp.lt.s32.totalorder %s39, 1
      %s892 = scalar_select %p891, %s39, 1
      %s893 = scalar_lea.vmem %s14, %s892
      %p894 = pneg %p421
      %p895 = pneg %p418
      %p896 = scmp.lt.s32.totalorder %s39, 1
      %s897 = scalar_select %p896, %s39, 1
      %s898 = scalar_lea.vmem %s15, %s897
      %p899 = pneg %p447
      %p900 = pneg %p444
      %p901 = scmp.lt.s32.totalorder %s39, 1
      %s902 = scalar_select %p901, %s39, 1
      %s903 = smul.addr %s902, 4
      %s904 = smul.addr %s903, 4
      %s905 = scalar_lea.vmem %s16, %s904
      %p906 = pneg %p473
      %p907 = pneg %p470
      %p908 = scmp.lt.s32.totalorder %s39, 1
      %s909 = scalar_select %p908, %s39, 1
      %s910 = scalar_lea.vmem %s17, %s909
      %p911 = pneg %p499
      %p912 = pneg %p496
      %p913 = scmp.lt.s32.totalorder %s39, 1
      %s914 = scalar_select %p913, %s39, 1
      %s915 = smul.addr %s914, 16
      %s916 = smul.addr %s915, 4
      %s917 = scalar_lea.vmem %s18, %s916
      %p918 = pneg %p525
      %p919 = pneg %p522
      %p920 = scmp.lt.s32.totalorder %s39, 1
      %s921 = scalar_select %p920, %s39, 1
      %s922 = scalar_lea.vmem %s19, %s921
      %p923 = pneg %p551
      %p924 = pneg %p548
      %p925 = scmp.lt.s32.totalorder %s39, 1
      %s926 = scalar_select %p925, %s39, 1
      %s927 = scalar_lea.vmem %s20, %s926
      %p928 = pneg %p577
      %p929 = pneg %p574
      %p930 = pneg %p598
      %p931 = pneg %p595
      %p932 = pneg %p619
      %p933 = pneg %p616
      %p934 = pneg %p645
      %p935 = pneg %p642
      %p936 = scmp.lt.s32.totalorder %s38, 1
      %s937 = scalar_select %p936, %s38, 1
      %s938 = scalar_lea.vmem %s23, %s937
      %p939 = scmp.lt.s32.totalorder %s38, 1
      %s940 = scalar_select %p939, %s38, 1
      %s941 = smul.addr %s940, 10
      %s942 = smul.addr %s941, 4
      %s943 = scalar_lea.vmem %s0, %s942
      %p944 = scmp.lt.s32.totalorder %s39, 1
      %s945 = scalar_select %p944, %s39, 1
      %s946 = scalar_lea.vmem %s3, %s945
      %p947 = scmp.lt.s32.totalorder %s39, 1
      %s948 = scalar_select %p947, %s39, 1
      %s949 = scalar_lea.vmem %s4, %s948
      %p950 = scmp.lt.s32.totalorder %s39, 1
      %s951 = scalar_select %p950, %s39, 1
      %s952 = smul.addr %s951, 8
      %s953 = smul.addr %s952, 4
      %s954 = scalar_lea.vmem %s5, %s953
      %p955 = scmp.lt.s32.totalorder %s39, 1
      %s956 = scalar_select %p955, %s39, 1
      %s957 = smul.addr %s956, 8
      %s958 = smul.addr %s957, 4
      %s959 = scalar_lea.vmem %s6, %s958
      %p960 = scmp.lt.s32.totalorder %s39, 1
      %s961 = scalar_select %p960, %s39, 1
      %s962 = smul.addr %s961, 8
      %s963 = smul.addr %s962, 4
      %s964 = scalar_lea.vmem %s7, %s963
      %p965 = scmp.lt.s32.totalorder %s39, 1
      %s966 = scalar_select %p965, %s39, 1
      %s967 = smul.addr %s966, 2
      %s968 = scalar_lea.vmem %s8, %s967
      %p969 = scmp.lt.s32.totalorder %s39, 1
      %s970 = scalar_select %p969, %s39, 1
      %s971 = smul.addr %s970, 2
      %s972 = scalar_lea.vmem %s9, %s971
      %p973 = scmp.lt.s32.totalorder %s39, 1
      %s974 = scalar_select %p973, %s39, 1
      %s975 = smul.addr %s974, 2
      %s976 = scalar_lea.vmem %s10, %s975
      %p977 = scmp.lt.s32.totalorder %s39, 1
      %s978 = scalar_select %p977, %s39, 1
      %s979 = smul.addr %s978, 4
      %s980 = smul.addr %s979, 4
      %s981 = scalar_lea.vmem %s11, %s980
      %p982 = scmp.lt.s32.totalorder %s39, 1
      %s983 = scalar_select %p982, %s39, 1
      %s984 = scalar_lea.vmem %s12, %s983
      %p985 = scmp.lt.s32.totalorder %s39, 1
      %s986 = scalar_select %p985, %s39, 1
      %s987 = scalar_lea.vmem %s13, %s986
      %p988 = scmp.lt.s32.totalorder %s39, 1
      %s989 = scalar_select %p988, %s39, 1
      %s990 = scalar_lea.vmem %s14, %s989
      %p991 = scmp.lt.s32.totalorder %s39, 1
      %s992 = scalar_select %p991, %s39, 1
      %s993 = scalar_lea.vmem %s15, %s992
      %p994 = scmp.lt.s32.totalorder %s39, 1
      %s995 = scalar_select %p994, %s39, 1
      %s996 = smul.addr %s995, 4
      %s997 = smul.addr %s996, 4
      %s998 = scalar_lea.vmem %s16, %s997
      %p999 = scmp.lt.s32.totalorder %s39, 1
      %s1000 = scalar_select %p999, %s39, 1
      %s1001 = scalar_lea.vmem %s17, %s1000
      %p1002 = scmp.lt.s32.totalorder %s39, 1
      %s1003 = scalar_select %p1002, %s39, 1
      %s1004 = smul.addr %s1003, 16
      %s1005 = smul.addr %s1004, 4
      %s1006 = scalar_lea.vmem %s18, %s1005
      %p1007 = scmp.lt.s32.totalorder %s39, 1
      %s1008 = scalar_select %p1007, %s39, 1
      %s1009 = scalar_lea.vmem %s19, %s1008
      %p1010 = scmp.lt.s32.totalorder %s39, 1
      %s1011 = scalar_select %p1010, %s39, 1
      %s1012 = scalar_lea.vmem %s20, %s1011
      %p1013 = scmp.lt.s32.totalorder %s38, 1
      %s1014 = scalar_select %p1013, %s38, 1
      %s1015 = scalar_lea.vmem %s23, %s1014
      %p1017 = scmp.eq.s32.totalorder %s39, 0
      // Predicated region
      $region113: #{semantic_loss.1} parent=111 // pred_check
        %p1018 = pneg %p1017
      $region114: #{semantic_loss.1} parent=111 // pred_check_branch
        %1020 = sbr.rel (%p1018) target = $region116
      $region115: #{semantic_loss.1} parent=111 // pred_region
        %v1021 = vld [vmem:[%s2] sm:$0x1f]
        %v1022 = vld [vmem:[%s943] sm:$0x77]
        %v1023 = vld [vmem:[%s943 + $0x8] sm:$0x77]
        %v1024 = vld [vmem:[%s943 + $0x10] sm:$0x7]
        %v1025 = vld [vmem:[%s1] sm:$0xf]
        %v1026 = vld [vmem:[%s1 + $0x4] sm:$0xf]
        %v1027 = vld [vmem:[%s1 + $0x8] sm:$0xf]
        %v1028 = vld [vmem:[%s1 + $0xc] sm:$0xf]
        %v1029 = vld [vmem:[%s1 + $0x10] sm:$0xf]
        %v1030 = vld [vmem:[%s1 + $0x14] sm:$0xf]
        %v1031 = vld [vmem:[%s1 + $0x18] sm:$0xf]
        %v1032 = vld [vmem:[%s1 + $0x1c] sm:$0xf]
        %v1033 = vld [vmem:[%s1 + $0x20] sm:$0xf]
        %v1034 = vld [vmem:[%s1 + $0x24] sm:$0xf]
        %v1035 = vld [vmem:[%s1 + $0x28] sm:$0xf]
        %v1036 = vld [vmem:[%s1 + $0x2c] sm:$0xf]
        %v1037 = vld [vmem:[%s1 + $0x30] sm:$0xf]
        %v1038 = vld [vmem:[%s1 + $0x34] sm:$0xf]
        %v1039 = vld [vmem:[%s1 + $0x38] sm:$0xf]
        %v1040 = vld [vmem:[%s1 + $0x3c] sm:$0xf]
        %v1041 = vld [vmem:[%s1 + $0x40] sm:$0xf]
        %v1042 = vld [vmem:[%s1 + $0x44] sm:$0xf]
        %v1043 = vld [vmem:[%s1 + $0x48] sm:$0xf]
        %v1044 = vld [vmem:[%s1 + $0x4c] sm:$0xf]
        %v1045 = vld [vmem:[%s1 + $0x50] sm:$0xf]
        %v1046 = vld [vmem:[%s1 + $0x54] sm:$0xf]
        %v1047 = vld [vmem:[%s1 + $0x58] sm:$0xf]
        %v1048 = vld [vmem:[%s1 + $0x5c] sm:$0xf]
        %v1049 = vld [vmem:[%s1 + $0x60] sm:$0xf]
        %v1050 = vld [vmem:[%s1 + $0x64] sm:$0xf]
        %v1051 = vld [vmem:[%s1 + $0x68] sm:$0xf]
        %v1052 = vld [vmem:[%s1 + $0x6c] sm:$0xf]
        %v1053 = vld [vmem:[%s1 + $0x70] sm:$0xf]
        %v1054 = vld [vmem:[%s1 + $0x74] sm:$0xf]
        %v1055 = vld [vmem:[%s1 + $0x78] sm:$0xf]
        %v1056 = vld [vmem:[%s1 + $0x7c] sm:$0xf]
        %v1057 = vld [vmem:[%s1 + $0x80] sm:$0xf]
        %v1058 = vld [vmem:[%s1 + $0x84] sm:$0xf]
        %v1059 = vld [vmem:[%s1 + $0x88] sm:$0xf]
        %v1060 = vld [vmem:[%s1 + $0x8c] sm:$0xf]
        %v1061 = vld [vmem:[%s1 + $0x90] sm:$0xf]
        %v1062 = vld [vmem:[%s1 + $0x94] sm:$0xf]
        %v1063 = vld [vmem:[%s1 + $0x98] sm:$0xf]
        %v1064 = vld [vmem:[%s1 + $0x9c] sm:$0xf]
        %v1065 = vld [vmem:[%s1 + $0xa0] sm:$0xf]
        %v1066 = vld [vmem:[%s1 + $0xa4] sm:$0xf]
        %v1067 = vld [vmem:[%s1 + $0xa8] sm:$0xf]
        %v1068 = vld [vmem:[%s1 + $0xac] sm:$0xf]
        %v1069 = vld [vmem:[%s1 + $0xb0] sm:$0xf]
        %v1070 = vld [vmem:[%s1 + $0xb4] sm:$0xf]
        %v1071 = vld [vmem:[%s1 + $0xb8] sm:$0xf]
        %v1072 = vld [vmem:[%s1 + $0xbc] sm:$0xf]
        %v1073 = vld [vmem:[%s1 + $0xc0] sm:$0xf]
        %v1074 = vld [vmem:[%s1 + $0xc4] sm:$0xf]
        %v1075 = vld [vmem:[%s1 + $0xc8] sm:$0xf]
        %v1076 = vld [vmem:[%s1 + $0xcc] sm:$0xf]
        %v1077 = vld [vmem:[%s1 + $0xd0] sm:$0xf]
        %v1078 = vld [vmem:[%s1 + $0xd4] sm:$0xf]
        %v1079 = vld [vmem:[%s1 + $0xd8] sm:$0xf]
        %v1080 = vld [vmem:[%s1 + $0xdc] sm:$0xf]
        %v1081 = vld [vmem:[%s1 + $0xe0] sm:$0xf]
        %v1082 = vld [vmem:[%s1 + $0xe4] sm:$0xf]
        %v1083 = vld [vmem:[%s1 + $0xe8] sm:$0xf]
        %v1084 = vld [vmem:[%s1 + $0xec] sm:$0xf]
        %v1085 = vld [vmem:[%s1 + $0xf0] sm:$0xf]
        %v1086 = vld [vmem:[%s1 + $0xf4] sm:$0xf]
        %v1087 = vld [vmem:[%s1 + $0xf8] sm:$0xf]
        %v1088 = vld [vmem:[%s1 + $0xfc] sm:$0xf]
        %v1089 = vld [vmem:[%s1 + $0x100] sm:$0xf]
        %v1090 = vld [vmem:[%s1 + $0x104] sm:$0xf]
        %v1091 = vld [vmem:[%s1 + $0x108] sm:$0xf]
        %v1092 = vld [vmem:[%s1 + $0x10c] sm:$0xf]
        %v1093 = vld [vmem:[%s1 + $0x110] sm:$0xf]
        %v1094 = vld [vmem:[%s1 + $0x114] sm:$0xf]
        %v1095 = vld [vmem:[%s1 + $0x118] sm:$0xf]
        %v1096 = vld [vmem:[%s1 + $0x11c] sm:$0xf]
        %v1097 = vld [vmem:[%s1 + $0x120] sm:$0xf]
        %v1098 = vld [vmem:[%s1 + $0x124] sm:$0x3]
        %v1102 = vunpack.c.l.b16 %v1022
        %v1103 = vunpack.c.h.b16 %v1022
        %v1104 = vunpack.c.l.b16 %v1023
        %v1105 = vunpack.c.h.b16 %v1023
        %v1106 = vunpack.c.l.b16 %v1024
        %v1107 = vpack.c.b16 %v1102, %v1102
        %v1108 = vpack.c.b16 %v1103, %v1103
        %v1109 = vpack.c.b16 %v1104, %v1104
        %v1110 = vpack.c.b16 %v1105, %v1105
        %v1111 = vpack.c.b16 %v1106, %v1106
        %v1190 = vunpack.c.l.b16 %v1025
        %v1191 = vunpack.c.l.b16 %v1026
        %v1192 = vunpack.c.l.b16 %v1027
        %v1193 = vunpack.c.l.b16 %v1028
        %v1194 = vunpack.c.l.b16 %v1029
        %v1195 = vunpack.c.l.b16 %v1030
        %v1196 = vunpack.c.l.b16 %v1031
        %v1197 = vunpack.c.l.b16 %v1032
        %v1198 = vunpack.c.l.b16 %v1033
        %v1199 = vunpack.c.l.b16 %v1034
        %v1200 = vunpack.c.l.b16 %v1035
        %v1201 = vunpack.c.l.b16 %v1036
        %v1202 = vunpack.c.l.b16 %v1037
        %v1203 = vunpack.c.l.b16 %v1038
        %v1204 = vunpack.c.l.b16 %v1039
        %v1205 = vunpack.c.l.b16 %v1040
        %v1206 = vunpack.c.l.b16 %v1041
        %v1207 = vunpack.c.l.b16 %v1042
        %v1208 = vunpack.c.l.b16 %v1043
        %v1209 = vunpack.c.l.b16 %v1044
        %v1210 = vunpack.c.l.b16 %v1045
        %v1211 = vunpack.c.l.b16 %v1046
        %v1212 = vunpack.c.l.b16 %v1047
        %v1213 = vunpack.c.l.b16 %v1048
        %v1214 = vunpack.c.l.b16 %v1049
        %v1215 = vunpack.c.l.b16 %v1050
        %v1216 = vunpack.c.l.b16 %v1051
        %v1217 = vunpack.c.l.b16 %v1052
        %v1218 = vunpack.c.l.b16 %v1053
        %v1219 = vunpack.c.l.b16 %v1054
        %v1220 = vunpack.c.l.b16 %v1055
        %v1221 = vunpack.c.l.b16 %v1056
        %v1222 = vunpack.c.l.b16 %v1057
        %v1223 = vunpack.c.l.b16 %v1058
        %v1224 = vunpack.c.l.b16 %v1059
        %v1225 = vunpack.c.l.b16 %v1060
        %v1226 = vunpack.c.l.b16 %v1061
        %v1227 = vunpack.c.l.b16 %v1062
        %v1228 = vunpack.c.l.b16 %v1063
        %v1229 = vunpack.c.l.b16 %v1064
        %v1230 = vunpack.c.l.b16 %v1065
        %v1231 = vunpack.c.l.b16 %v1066
        %v1232 = vunpack.c.l.b16 %v1067
        %v1233 = vunpack.c.l.b16 %v1068
        %v1234 = vunpack.c.l.b16 %v1069
        %v1235 = vunpack.c.l.b16 %v1070
        %v1236 = vunpack.c.l.b16 %v1071
        %v1237 = vunpack.c.l.b16 %v1072
        %v1238 = vunpack.c.l.b16 %v1073
        %v1239 = vunpack.c.l.b16 %v1074
        %v1240 = vunpack.c.l.b16 %v1075
        %v1241 = vunpack.c.l.b16 %v1076
        %v1242 = vunpack.c.l.b16 %v1077
        %v1243 = vunpack.c.l.b16 %v1078
        %v1244 = vunpack.c.l.b16 %v1079
        %v1245 = vunpack.c.l.b16 %v1080
        %v1246 = vunpack.c.l.b16 %v1081
        %v1247 = vunpack.c.l.b16 %v1082
        %v1248 = vunpack.c.l.b16 %v1083
        %v1249 = vunpack.c.l.b16 %v1084
        %v1250 = vunpack.c.l.b16 %v1085
        %v1251 = vunpack.c.l.b16 %v1086
        %v1252 = vunpack.c.l.b16 %v1087
        %v1253 = vunpack.c.l.b16 %v1088
        %v1254 = vunpack.c.l.b16 %v1089
        %v1255 = vunpack.c.l.b16 %v1090
        %v1256 = vunpack.c.l.b16 %v1091
        %v1257 = vunpack.c.l.b16 %v1092
        %v1258 = vunpack.c.l.b16 %v1093
        %v1259 = vunpack.c.l.b16 %v1094
        %v1260 = vunpack.c.l.b16 %v1095
        %v1261 = vunpack.c.l.b16 %v1096
        %v1262 = vunpack.c.l.b16 %v1097
        %v1263 = vunpack.c.l.b16 %v1098
        %v1264 = vpack.c.b16 %v1191, %v1190
        %v1265 = vpack.c.b16 %v1193, %v1192
        %v1266 = vpack.c.b16 %v1195, %v1194
        %v1267 = vpack.c.b16 %v1197, %v1196
        %v1268 = vpack.c.b16 %v1199, %v1198
        %v1269 = vpack.c.b16 %v1201, %v1200
        %v1270 = vpack.c.b16 %v1203, %v1202
        %v1271 = vpack.c.b16 %v1205, %v1204
        %v1272 = vpack.c.b16 %v1207, %v1206
        %v1273 = vpack.c.b16 %v1209, %v1208
        %v1274 = vpack.c.b16 %v1211, %v1210
        %v1275 = vpack.c.b16 %v1213, %v1212
        %v1276 = vpack.c.b16 %v1215, %v1214
        %v1277 = vpack.c.b16 %v1217, %v1216
        %v1278 = vpack.c.b16 %v1219, %v1218
        %v1279 = vpack.c.b16 %v1221, %v1220
        %v1280 = vpack.c.b16 %v1223, %v1222
        %v1281 = vpack.c.b16 %v1225, %v1224
        %v1282 = vpack.c.b16 %v1227, %v1226
        %v1283 = vpack.c.b16 %v1229, %v1228
        %v1284 = vpack.c.b16 %v1231, %v1230
        %v1285 = vpack.c.b16 %v1233, %v1232
        %v1286 = vpack.c.b16 %v1235, %v1234
        %v1287 = vpack.c.b16 %v1237, %v1236
        %v1288 = vpack.c.b16 %v1239, %v1238
        %v1289 = vpack.c.b16 %v1241, %v1240
        %v1290 = vpack.c.b16 %v1243, %v1242
        %v1291 = vpack.c.b16 %v1245, %v1244
        %v1292 = vpack.c.b16 %v1247, %v1246
        %v1293 = vpack.c.b16 %v1249, %v1248
        %v1294 = vpack.c.b16 %v1251, %v1250
        %v1295 = vpack.c.b16 %v1253, %v1252
        %v1296 = vpack.c.b16 %v1255, %v1254
        %v1297 = vpack.c.b16 %v1257, %v1256
        %v1298 = vpack.c.b16 %v1259, %v1258
        %v1299 = vpack.c.b16 %v1261, %v1260
        %v1300 = vpack.c.b16 %v1263, %v1262
        %vm1337 = vcmask 621568
        %v1339 = vsel %vm1337, %v1111, 0
        %vm1341 = vcmask 1045504
        %v1343 = vsel %vm1341, %v1300, 0
        %1345 = vmatprep.subr.bf16.mxu0 0
        %1346 = vmatpush1.bf16.msra.mxu0 %v1271
        %1347 = vmatprep.subr.bf16.mxu0 0
        %1348 = vmatpush1.bf16.msra.mxu0 %v1270
        %1349 = vmatprep.subr.bf16.mxu0 0
        %1350 = vmatpush1.bf16.msra.mxu0 %v1269
        %1351 = vmatprep.subr.bf16.mxu0 0
        %1352 = vmatpush1.bf16.msra.mxu0 %v1268
        %1353 = vmatprep.subr.bf16.mxu0 0
        %1354 = vmatpush1.bf16.msra.mxu0 %v1267
        %1355 = vmatprep.subr.bf16.mxu0 0
        %1356 = vmatpush1.bf16.msra.mxu0 %v1266
        %1357 = vmatprep.subr.bf16.mxu0 0
        %1358 = vmatpush1.bf16.msra.mxu0 %v1265
        %1359 = vmatprep.subr.bf16.mxu0 0
        %1360 = vmatpush1.bf16.msra.mxu0 %v1264
        %1361 = vmatprep.subr.bf16.mxu0 0
        %1362 = vmatpush2.bf16.msra.mxu0 %v1279
        %1363 = vmatprep.subr.bf16.mxu0 0
        %1364 = vmatpush2.bf16.msra.mxu0 %v1278
        %1365 = vmatprep.subr.bf16.mxu0 0
        %1366 = vmatpush2.bf16.msra.mxu0 %v1277
        %1367 = vmatprep.subr.bf16.mxu0 0
        %1368 = vmatpush2.bf16.msra.mxu0 %v1276
        %1369 = vmatprep.subr.bf16.mxu0 0
        %1370 = vmatpush2.bf16.msra.mxu0 %v1275
        %1371 = vmatprep.subr.bf16.mxu0 0
        %1372 = vmatpush2.bf16.msra.mxu0 %v1274
        %1373 = vmatprep.subr.bf16.mxu0 0
        %1374 = vmatpush2.bf16.msra.mxu0 %v1273
        %1375 = vmatprep.subr.bf16.mxu0 0
        %1376 = vmatpush2.bf16.msra.mxu0 %v1272
        %1377 = vmatprep.mubr.bf16.mxu0 %v1108
        %1378 = vmatmul.mubr.bf16.gmra.mxu0 %v1107
        %v1379 = vpop.f32.mrf.mxu0
        %v1380 = vadd.f32 %v1021, %v1379
        %v1381 = vpop.f32.mrf.mxu0
        %v1382 = vpop.f32.mrf.mxu0
        %v1383 = vpop.f32.mrf.mxu0
        %1384 = vdwg.mxu0
        %1385 = vmatprep.subr.bf16.mxu0 0
        %1386 = vmatpush1.bf16.msra.mxu0 %v1287
        %1387 = vmatprep.subr.bf16.mxu0 0
        %1388 = vmatpush1.bf16.msra.mxu0 %v1286
        %1389 = vmatprep.subr.bf16.mxu0 0
        %1390 = vmatpush1.bf16.msra.mxu0 %v1285
        %1391 = vmatprep.subr.bf16.mxu0 0
        %1392 = vmatpush1.bf16.msra.mxu0 %v1284
        %1393 = vmatprep.subr.bf16.mxu0 0
        %1394 = vmatpush1.bf16.msra.mxu0 %v1283
        %1395 = vmatprep.subr.bf16.mxu0 0
        %1396 = vmatpush1.bf16.msra.mxu0 %v1282
        %1397 = vmatprep.subr.bf16.mxu0 0
        %1398 = vmatpush1.bf16.msra.mxu0 %v1281
        %1399 = vmatprep.subr.bf16.mxu0 0
        %1400 = vmatpush1.bf16.msra.mxu0 %v1280
        %1401 = vmatprep.subr.bf16.mxu0 0
        %1402 = vmatpush2.bf16.msra.mxu0 %v1295
        %1403 = vmatprep.subr.bf16.mxu0 0
        %1404 = vmatpush2.bf16.msra.mxu0 %v1294
        %1405 = vmatprep.subr.bf16.mxu0 0
        %1406 = vmatpush2.bf16.msra.mxu0 %v1293
        %1407 = vmatprep.subr.bf16.mxu0 0
        %1408 = vmatpush2.bf16.msra.mxu0 %v1292
        %1409 = vmatprep.subr.bf16.mxu0 0
        %1410 = vmatpush2.bf16.msra.mxu0 %v1291
        %1411 = vmatprep.subr.bf16.mxu0 0
        %1412 = vmatpush2.bf16.msra.mxu0 %v1290
        %1413 = vmatprep.subr.bf16.mxu0 0
        %1414 = vmatpush2.bf16.msra.mxu0 %v1289
        %1415 = vmatprep.subr.bf16.mxu0 0
        %1416 = vmatpush2.bf16.msra.mxu0 %v1288
        %1417 = vmatprep.mubr.bf16.mxu0 %v1110
        %1418 = vmatmul.mubr.bf16.gmra.mxu0 %v1109
        %v1419 = vpop.f32.mrf.mxu0
        %v1420 = vadd.f32 %v1380, %v1419
        %v1421 = vpop.f32.mrf.mxu0
        %v1422 = vpop.f32.mrf.mxu0
        %v1423 = vpop.f32.mrf.mxu0
        %1424 = vdwg.mxu0
        %1425 = vmatprep.subr.bf16.mxu0 0
        %1426 = vmatpush1.bf16.msra.mxu0 0
        %1427 = vmatprep.subr.bf16.mxu0 0
        %1428 = vmatpush1.bf16.msra.mxu0 0
        %1429 = vmatprep.subr.bf16.mxu0 0
        %1430 = vmatpush1.bf16.msra.mxu0 0
        %1431 = vmatprep.subr.bf16.mxu0 0
        %1432 = vmatpush1.bf16.msra.mxu0 %v1343
        %1433 = vmatprep.subr.bf16.mxu0 0
        %1434 = vmatpush1.bf16.msra.mxu0 %v1299
        %1435 = vmatprep.subr.bf16.mxu0 0
        %1436 = vmatpush1.bf16.msra.mxu0 %v1298
        %1437 = vmatprep.subr.bf16.mxu0 0
        %1438 = vmatpush1.bf16.msra.mxu0 %v1297
        %1439 = vmatprep.subr.bf16.mxu0 0
        %1440 = vmatpush1.bf16.msra.mxu0 %v1296
        %1441 = vmatprep.subr.bf16.mxu0 0
        %1442 = vmatpush2.bf16.msra.mxu0 0
        %1443 = vmatprep.subr.bf16.mxu0 0
        %1444 = vmatpush2.bf16.msra.mxu0 0
        %1445 = vmatprep.subr.bf16.mxu0 0
        %1446 = vmatpush2.bf16.msra.mxu0 0
        %1447 = vmatprep.subr.bf16.mxu0 0
        %1448 = vmatpush2.bf16.msra.mxu0 0
        %1449 = vmatprep.subr.bf16.mxu0 0
        %1450 = vmatpush2.bf16.msra.mxu0 0
        %1451 = vmatprep.subr.bf16.mxu0 0
        %1452 = vmatpush2.bf16.msra.mxu0 0
        %1453 = vmatprep.subr.bf16.mxu0 0
        %1454 = vmatpush2.bf16.msra.mxu0 0
        %1455 = vmatprep.subr.bf16.mxu0 0
        %1456 = vmatpush2.bf16.msra.mxu0 0
        %1457 = vmatprep.mubr.bf16.mxu0 0
        %1458 = vmatmul.mubr.bf16.gmra.mxu0 %v1339
        %v1459 = vpop.f32.mrf.mxu0
        %v1460 = vadd.f32 %v1420, %v1459
        %v1461 = vpop.f32.mrf.mxu0
        %v1462 = vpop.f32.mrf.mxu0
        %v1463 = vpop.f32.mrf.mxu0
        %1464 = vdwg.mxu0
        %vm1465 = vcmask 258048
        %1466 = vst.msk [vmem:[#allocation2] sm:$0x1f] %vm1465, %v1460
        %s1467 = scalar_lea.vmem %s943, 20
        %v1468 = vld [vmem:[%s1467] sm:$0x77]
        %v1469 = vld [vmem:[%s1467 + $0x8] sm:$0x77]
        %v1470 = vld [vmem:[%s1467 + $0x10] sm:$0x7]
        %v1471 = vld [vmem:[%s1] sm:$0xf]
        %v1472 = vld [vmem:[%s1 + $0x4] sm:$0xf]
        %v1473 = vld [vmem:[%s1 + $0x8] sm:$0xf]
        %v1474 = vld [vmem:[%s1 + $0xc] sm:$0xf]
        %v1475 = vld [vmem:[%s1 + $0x10] sm:$0xf]
        %v1476 = vld [vmem:[%s1 + $0x14] sm:$0xf]
        %v1477 = vld [vmem:[%s1 + $0x18] sm:$0xf]
        %v1478 = vld [vmem:[%s1 + $0x1c] sm:$0xf]
        %v1479 = vld [vmem:[%s1 + $0x20] sm:$0xf]
        %v1480 = vld [vmem:[%s1 + $0x24] sm:$0xf]
        %v1481 = vld [vmem:[%s1 + $0x28] sm:$0xf]
        %v1482 = vld [vmem:[%s1 + $0x2c] sm:$0xf]
        %v1483 = vld [vmem:[%s1 + $0x30] sm:$0xf]
        %v1484 = vld [vmem:[%s1 + $0x34] sm:$0xf]
        %v1485 = vld [vmem:[%s1 + $0x38] sm:$0xf]
        %v1486 = vld [vmem:[%s1 + $0x3c] sm:$0xf]
        %v1487 = vld [vmem:[%s1 + $0x40] sm:$0xf]
        %v1488 = vld [vmem:[%s1 + $0x44] sm:$0xf]
        %v1489 = vld [vmem:[%s1 + $0x48] sm:$0xf]
        %v1490 = vld [vmem:[%s1 + $0x4c] sm:$0xf]
        %v1491 = vld [vmem:[%s1 + $0x50] sm:$0xf]
        %v1492 = vld [vmem:[%s1 + $0x54] sm:$0xf]
        %v1493 = vld [vmem:[%s1 + $0x58] sm:$0xf]
        %v1494 = vld [vmem:[%s1 + $0x5c] sm:$0xf]
        %v1495 = vld [vmem:[%s1 + $0x60] sm:$0xf]
        %v1496 = vld [vmem:[%s1 + $0x64] sm:$0xf]
        %v1497 = vld [vmem:[%s1 + $0x68] sm:$0xf]
        %v1498 = vld [vmem:[%s1 + $0x6c] sm:$0xf]
        %v1499 = vld [vmem:[%s1 + $0x70] sm:$0xf]
        %v1500 = vld [vmem:[%s1 + $0x74] sm:$0xf]
        %v1501 = vld [vmem:[%s1 + $0x78] sm:$0xf]
        %v1502 = vld [vmem:[%s1 + $0x7c] sm:$0xf]
        %v1503 = vld [vmem:[%s1 + $0x80] sm:$0xf]
        %v1504 = vld [vmem:[%s1 + $0x84] sm:$0xf]
        %v1505 = vld [vmem:[%s1 + $0x88] sm:$0xf]
        %v1506 = vld [vmem:[%s1 + $0x8c] sm:$0xf]
        %v1507 = vld [vmem:[%s1 + $0x90] sm:$0xf]
        %v1508 = vld [vmem:[%s1 + $0x94] sm:$0xf]
        %v1509 = vld [vmem:[%s1 + $0x98] sm:$0xf]
        %v1510 = vld [vmem:[%s1 + $0x9c] sm:$0xf]
        %v1511 = vld [vmem:[%s1 + $0xa0] sm:$0xf]
        %v1512 = vld [vmem:[%s1 + $0xa4] sm:$0xf]
        %v1513 = vld [vmem:[%s1 + $0xa8] sm:$0xf]
        %v1514 = vld [vmem:[%s1 + $0xac] sm:$0xf]
        %v1515 = vld [vmem:[%s1 + $0xb0] sm:$0xf]
        %v1516 = vld [vmem:[%s1 + $0xb4] sm:$0xf]
        %v1517 = vld [vmem:[%s1 + $0xb8] sm:$0xf]
        %v1518 = vld [vmem:[%s1 + $0xbc] sm:$0xf]
        %v1519 = vld [vmem:[%s1 + $0xc0] sm:$0xf]
        %v1520 = vld [vmem:[%s1 + $0xc4] sm:$0xf]
        %v1521 = vld [vmem:[%s1 + $0xc8] sm:$0xf]
        %v1522 = vld [vmem:[%s1 + $0xcc] sm:$0xf]
        %v1523 = vld [vmem:[%s1 + $0xd0] sm:$0xf]
        %v1524 = vld [vmem:[%s1 + $0xd4] sm:$0xf]
        %v1525 = vld [vmem:[%s1 + $0xd8] sm:$0xf]
        %v1526 = vld [vmem:[%s1 + $0xdc] sm:$0xf]
        %v1527 = vld [vmem:[%s1 + $0xe0] sm:$0xf]
        %v1528 = vld [vmem:[%s1 + $0xe4] sm:$0xf]
        %v1529 = vld [vmem:[%s1 + $0xe8] sm:$0xf]
        %v1530 = vld [vmem:[%s1 + $0xec] sm:$0xf]
        %v1531 = vld [vmem:[%s1 + $0xf0] sm:$0xf]
        %v1532 = vld [vmem:[%s1 + $0xf4] sm:$0xf]
        %v1533 = vld [vmem:[%s1 + $0xf8] sm:$0xf]
        %v1534 = vld [vmem:[%s1 + $0xfc] sm:$0xf]
        %v1535 = vld [vmem:[%s1 + $0x100] sm:$0xf]
        %v1536 = vld [vmem:[%s1 + $0x104] sm:$0xf]
        %v1537 = vld [vmem:[%s1 + $0x108] sm:$0xf]
        %v1538 = vld [vmem:[%s1 + $0x10c] sm:$0xf]
        %v1539 = vld [vmem:[%s1 + $0x110] sm:$0xf]
        %v1540 = vld [vmem:[%s1 + $0x114] sm:$0xf]
        %v1541 = vld [vmem:[%s1 + $0x118] sm:$0xf]
        %v1542 = vld [vmem:[%s1 + $0x11c] sm:$0xf]
        %v1543 = vld [vmem:[%s1 + $0x120] sm:$0xf]
        %v1544 = vld [vmem:[%s1 + $0x124] sm:$0x3]
        %v1548 = vunpack.c.l.b16 %v1468
        %v1549 = vunpack.c.h.b16 %v1468
        %v1550 = vunpack.c.l.b16 %v1469
        %v1551 = vunpack.c.h.b16 %v1469
        %v1552 = vunpack.c.l.b16 %v1470
        %v1553 = vpack.c.b16 %v1548, %v1548
        %v1554 = vpack.c.b16 %v1549, %v1549
        %v1555 = vpack.c.b16 %v1550, %v1550
        %v1556 = vpack.c.b16 %v1551, %v1551
        %v1557 = vpack.c.b16 %v1552, %v1552
        %v1636 = vunpack.c.l.b16 %v1471
        %v1637 = vunpack.c.l.b16 %v1472
        %v1638 = vunpack.c.l.b16 %v1473
        %v1639 = vunpack.c.l.b16 %v1474
        %v1640 = vunpack.c.l.b16 %v1475
        %v1641 = vunpack.c.l.b16 %v1476
        %v1642 = vunpack.c.l.b16 %v1477
        %v1643 = vunpack.c.l.b16 %v1478
        %v1644 = vunpack.c.l.b16 %v1479
        %v1645 = vunpack.c.l.b16 %v1480
        %v1646 = vunpack.c.l.b16 %v1481
        %v1647 = vunpack.c.l.b16 %v1482
        %v1648 = vunpack.c.l.b16 %v1483
        %v1649 = vunpack.c.l.b16 %v1484
        %v1650 = vunpack.c.l.b16 %v1485
        %v1651 = vunpack.c.l.b16 %v1486
        %v1652 = vunpack.c.l.b16 %v1487
        %v1653 = vunpack.c.l.b16 %v1488
        %v1654 = vunpack.c.l.b16 %v1489
        %v1655 = vunpack.c.l.b16 %v1490
        %v1656 = vunpack.c.l.b16 %v1491
        %v1657 = vunpack.c.l.b16 %v1492
        %v1658 = vunpack.c.l.b16 %v1493
        %v1659 = vunpack.c.l.b16 %v1494
        %v1660 = vunpack.c.l.b16 %v1495
        %v1661 = vunpack.c.l.b16 %v1496
        %v1662 = vunpack.c.l.b16 %v1497
        %v1663 = vunpack.c.l.b16 %v1498
        %v1664 = vunpack.c.l.b16 %v1499
        %v1665 = vunpack.c.l.b16 %v1500
        %v1666 = vunpack.c.l.b16 %v1501
        %v1667 = vunpack.c.l.b16 %v1502
        %v1668 = vunpack.c.l.b16 %v1503
        %v1669 = vunpack.c.l.b16 %v1504
        %v1670 = vunpack.c.l.b16 %v1505
        %v1671 = vunpack.c.l.b16 %v1506
        %v1672 = vunpack.c.l.b16 %v1507
        %v1673 = vunpack.c.l.b16 %v1508
        %v1674 = vunpack.c.l.b16 %v1509
        %v1675 = vunpack.c.l.b16 %v1510
        %v1676 = vunpack.c.l.b16 %v1511
        %v1677 = vunpack.c.l.b16 %v1512
        %v1678 = vunpack.c.l.b16 %v1513
        %v1679 = vunpack.c.l.b16 %v1514
        %v1680 = vunpack.c.l.b16 %v1515
        %v1681 = vunpack.c.l.b16 %v1516
        %v1682 = vunpack.c.l.b16 %v1517
        %v1683 = vunpack.c.l.b16 %v1518
        %v1684 = vunpack.c.l.b16 %v1519
        %v1685 = vunpack.c.l.b16 %v1520
        %v1686 = vunpack.c.l.b16 %v1521
        %v1687 = vunpack.c.l.b16 %v1522
        %v1688 = vunpack.c.l.b16 %v1523
        %v1689 = vunpack.c.l.b16 %v1524
        %v1690 = vunpack.c.l.b16 %v1525
        %v1691 = vunpack.c.l.b16 %v1526
        %v1692 = vunpack.c.l.b16 %v1527
        %v1693 = vunpack.c.l.b16 %v1528
        %v1694 = vunpack.c.l.b16 %v1529
        %v1695 = vunpack.c.l.b16 %v1530
        %v1696 = vunpack.c.l.b16 %v1531
        %v1697 = vunpack.c.l.b16 %v1532
        %v1698 = vunpack.c.l.b16 %v1533
        %v1699 = vunpack.c.l.b16 %v1534
        %v1700 = vunpack.c.l.b16 %v1535
        %v1701 = vunpack.c.l.b16 %v1536
        %v1702 = vunpack.c.l.b16 %v1537
        %v1703 = vunpack.c.l.b16 %v1538
        %v1704 = vunpack.c.l.b16 %v1539
        %v1705 = vunpack.c.l.b16 %v1540
        %v1706 = vunpack.c.l.b16 %v1541
        %v1707 = vunpack.c.l.b16 %v1542
        %v1708 = vunpack.c.l.b16 %v1543
        %v1709 = vunpack.c.l.b16 %v1544
        %v1710 = vpack.c.b16 %v1637, %v1636
        %v1711 = vpack.c.b16 %v1639, %v1638
        %v1712 = vpack.c.b16 %v1641, %v1640
        %v1713 = vpack.c.b16 %v1643, %v1642
        %v1714 = vpack.c.b16 %v1645, %v1644
        %v1715 = vpack.c.b16 %v1647, %v1646
        %v1716 = vpack.c.b16 %v1649, %v1648
        %v1717 = vpack.c.b16 %v1651, %v1650
        %v1718 = vpack.c.b16 %v1653, %v1652
        %v1719 = vpack.c.b16 %v1655, %v1654
        %v1720 = vpack.c.b16 %v1657, %v1656
        %v1721 = vpack.c.b16 %v1659, %v1658
        %v1722 = vpack.c.b16 %v1661, %v1660
        %v1723 = vpack.c.b16 %v1663, %v1662
        %v1724 = vpack.c.b16 %v1665, %v1664
        %v1725 = vpack.c.b16 %v1667, %v1666
        %v1726 = vpack.c.b16 %v1669, %v1668
        %v1727 = vpack.c.b16 %v1671, %v1670
        %v1728 = vpack.c.b16 %v1673, %v1672
        %v1729 = vpack.c.b16 %v1675, %v1674
        %v1730 = vpack.c.b16 %v1677, %v1676
        %v1731 = vpack.c.b16 %v1679, %v1678
        %v1732 = vpack.c.b16 %v1681, %v1680
        %v1733 = vpack.c.b16 %v1683, %v1682
        %v1734 = vpack.c.b16 %v1685, %v1684
        %v1735 = vpack.c.b16 %v1687, %v1686
        %v1736 = vpack.c.b16 %v1689, %v1688
        %v1737 = vpack.c.b16 %v1691, %v1690
        %v1738 = vpack.c.b16 %v1693, %v1692
        %v1739 = vpack.c.b16 %v1695, %v1694
        %v1740 = vpack.c.b16 %v1697, %v1696
        %v1741 = vpack.c.b16 %v1699, %v1698
        %v1742 = vpack.c.b16 %v1701, %v1700
        %v1743 = vpack.c.b16 %v1703, %v1702
        %v1744 = vpack.c.b16 %v1705, %v1704
        %v1745 = vpack.c.b16 %v1707, %v1706
        %v1746 = vpack.c.b16 %v1709, %v1708
        %v1784 = vsel %vm1337, %v1557, 0
        %v1787 = vsel %vm1341, %v1746, 0
        %1789 = vmatprep.subr.bf16.mxu0 0
        %1790 = vmatpush1.bf16.msra.mxu0 %v1717
        %1791 = vmatprep.subr.bf16.mxu0 0
        %1792 = vmatpush1.bf16.msra.mxu0 %v1716
        %1793 = vmatprep.subr.bf16.mxu0 0
        %1794 = vmatpush1.bf16.msra.mxu0 %v1715
        %1795 = vmatprep.subr.bf16.mxu0 0
        %1796 = vmatpush1.bf16.msra.mxu0 %v1714
        %1797 = vmatprep.subr.bf16.mxu0 0
        %1798 = vmatpush1.bf16.msra.mxu0 %v1713
        %1799 = vmatprep.subr.bf16.mxu0 0
        %1800 = vmatpush1.bf16.msra.mxu0 %v1712
        %1801 = vmatprep.subr.bf16.mxu0 0
        %1802 = vmatpush1.bf16.msra.mxu0 %v1711
        %1803 = vmatprep.subr.bf16.mxu0 0
        %1804 = vmatpush1.bf16.msra.mxu0 %v1710
        %1805 = vmatprep.subr.bf16.mxu0 0
        %1806 = vmatpush2.bf16.msra.mxu0 %v1725
        %1807 = vmatprep.subr.bf16.mxu0 0
        %1808 = vmatpush2.bf16.msra.mxu0 %v1724
        %1809 = vmatprep.subr.bf16.mxu0 0
        %1810 = vmatpush2.bf16.msra.mxu0 %v1723
        %1811 = vmatprep.subr.bf16.mxu0 0
        %1812 = vmatpush2.bf16.msra.mxu0 %v1722
        %1813 = vmatprep.subr.bf16.mxu0 0
        %1814 = vmatpush2.bf16.msra.mxu0 %v1721
        %1815 = vmatprep.subr.bf16.mxu0 0
        %1816 = vmatpush2.bf16.msra.mxu0 %v1720
        %1817 = vmatprep.subr.bf16.mxu0 0
        %1818 = vmatpush2.bf16.msra.mxu0 %v1719
        %1819 = vmatprep.subr.bf16.mxu0 0
        %1820 = vmatpush2.bf16.msra.mxu0 %v1718
        %1821 = vmatprep.mubr.bf16.mxu0 %v1554
        %1822 = vmatmul.mubr.bf16.gmra.mxu0 %v1553
        %v1823 = vpop.f32.mrf.mxu0
        %v1824 = vadd.f32 %v1021, %v1823
        %v1825 = vpop.f32.mrf.mxu0
        %v1826 = vpop.f32.mrf.mxu0
        %v1827 = vpop.f32.mrf.mxu0
        %1828 = vdwg.mxu0
        %1829 = vmatprep.subr.bf16.mxu0 0
        %1830 = vmatpush1.bf16.msra.mxu0 %v1733
        %1831 = vmatprep.subr.bf16.mxu0 0
        %1832 = vmatpush1.bf16.msra.mxu0 %v1732
        %1833 = vmatprep.subr.bf16.mxu0 0
        %1834 = vmatpush1.bf16.msra.mxu0 %v1731
        %1835 = vmatprep.subr.bf16.mxu0 0
        %1836 = vmatpush1.bf16.msra.mxu0 %v1730
        %1837 = vmatprep.subr.bf16.mxu0 0
        %1838 = vmatpush1.bf16.msra.mxu0 %v1729
        %1839 = vmatprep.subr.bf16.mxu0 0
        %1840 = vmatpush1.bf16.msra.mxu0 %v1728
        %1841 = vmatprep.subr.bf16.mxu0 0
        %1842 = vmatpush1.bf16.msra.mxu0 %v1727
        %1843 = vmatprep.subr.bf16.mxu0 0
        %1844 = vmatpush1.bf16.msra.mxu0 %v1726
        %1845 = vmatprep.subr.bf16.mxu0 0
        %1846 = vmatpush2.bf16.msra.mxu0 %v1741
        %1847 = vmatprep.subr.bf16.mxu0 0
        %1848 = vmatpush2.bf16.msra.mxu0 %v1740
        %1849 = vmatprep.subr.bf16.mxu0 0
        %1850 = vmatpush2.bf16.msra.mxu0 %v1739
        %1851 = vmatprep.subr.bf16.mxu0 0
        %1852 = vmatpush2.bf16.msra.mxu0 %v1738
        %1853 = vmatprep.subr.bf16.mxu0 0
        %1854 = vmatpush2.bf16.msra.mxu0 %v1737
        %1855 = vmatprep.subr.bf16.mxu0 0
        %1856 = vmatpush2.bf16.msra.mxu0 %v1736
        %1857 = vmatprep.subr.bf16.mxu0 0
        %1858 = vmatpush2.bf16.msra.mxu0 %v1735
        %1859 = vmatprep.subr.bf16.mxu0 0
        %1860 = vmatpush2.bf16.msra.mxu0 %v1734
        %1861 = vmatprep.mubr.bf16.mxu0 %v1556
        %1862 = vmatmul.mubr.bf16.gmra.mxu0 %v1555
        %v1863 = vpop.f32.mrf.mxu0
        %v1864 = vadd.f32 %v1824, %v1863
        %v1865 = vpop.f32.mrf.mxu0
        %v1866 = vpop.f32.mrf.mxu0
        %v1867 = vpop.f32.mrf.mxu0
        %1868 = vdwg.mxu0
        %1869 = vmatprep.subr.bf16.mxu0 0
        %1870 = vmatpush1.bf16.msra.mxu0 0
        %1871 = vmatprep.subr.bf16.mxu0 0
        %1872 = vmatpush1.bf16.msra.mxu0 0
        %1873 = vmatprep.subr.bf16.mxu0 0
        %1874 = vmatpush1.bf16.msra.mxu0 0
        %1875 = vmatprep.subr.bf16.mxu0 0
        %1876 = vmatpush1.bf16.msra.mxu0 %v1787
        %1877 = vmatprep.subr.bf16.mxu0 0
        %1878 = vmatpush1.bf16.msra.mxu0 %v1745
        %1879 = vmatprep.subr.bf16.mxu0 0
        %1880 = vmatpush1.bf16.msra.mxu0 %v1744
        %1881 = vmatprep.subr.bf16.mxu0 0
        %1882 = vmatpush1.bf16.msra.mxu0 %v1743
        %1883 = vmatprep.subr.bf16.mxu0 0
        %1884 = vmatpush1.bf16.msra.mxu0 %v1742
        %1885 = vmatprep.subr.bf16.mxu0 0
        %1886 = vmatpush2.bf16.msra.mxu0 0
        %1887 = vmatprep.subr.bf16.mxu0 0
        %1888 = vmatpush2.bf16.msra.mxu0 0
        %1889 = vmatprep.subr.bf16.mxu0 0
        %1890 = vmatpush2.bf16.msra.mxu0 0
        %1891 = vmatprep.subr.bf16.mxu0 0
        %1892 = vmatpush2.bf16.msra.mxu0 0
        %1893 = vmatprep.subr.bf16.mxu0 0
        %1894 = vmatpush2.bf16.msra.mxu0 0
        %1895 = vmatprep.subr.bf16.mxu0 0
        %1896 = vmatpush2.bf16.msra.mxu0 0
        %1897 = vmatprep.subr.bf16.mxu0 0
        %1898 = vmatpush2.bf16.msra.mxu0 0
        %1899 = vmatprep.subr.bf16.mxu0 0
        %1900 = vmatpush2.bf16.msra.mxu0 0
        %1901 = vmatprep.mubr.bf16.mxu0 0
        %1902 = vmatmul.mubr.bf16.gmra.mxu0 %v1784
        %v1903 = vpop.f32.mrf.mxu0
        %v1904 = vadd.f32 %v1864, %v1903
        %v1905 = vpop.f32.mrf.mxu0
        %v1906 = vpop.f32.mrf.mxu0
        %v1907 = vpop.f32.mrf.mxu0
        %1908 = vdwg.mxu0
        %s1909 = scalar_lea.vmem [#allocation2], 8
        %1910 = vst.msk [vmem:[%s1909] sm:$0x1f] %vm1465, %v1904
      $region116: #{semantic_loss.1} parent=111 // pred_fallthru
        _
      %v1911 = vld [vmem:[%s946] sm:$0x1]
      %v1912 = vld [vmem:[%s949] sm:$0x1]
      %v1913 = vld [vmem:[%s984] sm:$0x1]
      %v1914 = vld [vmem:[%s987] sm:$0x1]
      %v1915 = vld [vmem:[%s990] sm:$0x1]
      %v1916 = vld [vmem:[%s993] sm:$0x1]
      %v1917 = vld [vmem:[%s1001] sm:$0x1]
      %v1918 = vld [vmem:[%s1009] sm:$0x1]
      %v1919 = vld [vmem:[%s1012] sm:$0x1]
      %v1920 = vld [vmem:[#allocation2] sm:$0x1f]
      %vm1921 = vcmask 258048
      %v1922 = vsel %vm1921, %v1920, 0.0
      %1923 = vadd.xlane.f32.xlu0 %v1922
      %v1924 = vpop.xlane.xlu0 %1923
      %v1925 = vrcp.pop 32.0
      %v1926 = vmul.f32 %v1924, %v1925
      %v1927 = vsub.f32 %v1920, %v1926
      %v1928 = vmul.f32 %v1927, %v1927
      %v1929 = vsel %vm1921, %v1928, 0.0
      %1930 = vadd.xlane.f32.xlu0 %v1929
      %v1931 = vpop.xlane.xlu0 %1930
      %v1932 = vmul.f32 %v1931, %v1925
      %v1933 = vadd.f32 %v1932, 1e-06
      %v1934 = vrsqrt.pop %v1933
      %v1935 = vmul.f32 %v1927, %v1934
      %v1937 = vlaneseq
      %v1938 = vshrl.u32 %v1937, 7
      %v1939 = vsub.s32 0, %v1938
      %v1940 = vrot.slane %v1911, %v1939
      %v1942 = vmul.f32 %v1935, %v1940
      %v1944 = vlaneseq
      %v1945 = vshrl.u32 %v1944, 7
      %v1946 = vsub.s32 0, %v1945
      %v1947 = vrot.slane %v1912, %v1946
      %v1949 = vadd.f32 %v1942, %v1947
      %v1950 = vpack.c.bf16 %v1949, %v1949
      %v1951 = vld [vmem:[%s954] sm:$0xf]
      %v1952 = vld [vmem:[%s954 + $0x4] sm:$0xf]
      %v1953 = vld [vmem:[%s954 + $0x8] sm:$0xf]
      %v1954 = vld [vmem:[%s954 + $0xc] sm:$0xf]
      %v1955 = vld [vmem:[%s968] sm:$0x1]
      %v1957 = vlaneseq
      %v1958 = vshrl.u32 %v1957, 7
      %v1959 = vsub.s32 0, %v1958
      %v1960 = vrot.slane %v1955, %v1959
      %v1966 = vunpack.c.l.b16 %v1951
      %v1967 = vunpack.c.l.b16 %v1952
      %v1968 = vunpack.c.l.b16 %v1953
      %v1969 = vunpack.c.l.b16 %v1954
      %v1970 = vpack.c.b16 %v1967, %v1966
      %v1971 = vpack.c.b16 %v1969, %v1968
      %vm1974 = vcmask 261120
      %v1976 = vsel %vm1974, %v1950, 0
      %1978 = vmatprep.subr.bf16.mxu0 0
      %1979 = vmatpush1.bf16.msra.mxu0 0
      %1980 = vmatprep.subr.bf16.mxu0 0
      %1981 = vmatpush1.bf16.msra.mxu0 0
      %1982 = vmatprep.subr.bf16.mxu0 0
      %1983 = vmatpush1.bf16.msra.mxu0 0
      %1984 = vmatprep.subr.bf16.mxu0 0
      %1985 = vmatpush1.bf16.msra.mxu0 0
      %1986 = vmatprep.subr.bf16.mxu0 0
      %1987 = vmatpush1.bf16.msra.mxu0 0
      %1988 = vmatprep.subr.bf16.mxu0 0
      %1989 = vmatpush1.bf16.msra.mxu0 0
      %1990 = vmatprep.subr.bf16.mxu0 0
      %1991 = vmatpush1.bf16.msra.mxu0 %v1971
      %1992 = vmatprep.subr.bf16.mxu0 0
      %1993 = vmatpush1.bf16.msra.mxu0 %v1970
      %1994 = vmatprep.subr.bf16.mxu0 0
      %1995 = vmatpush2.bf16.msra.mxu0 0
      %1996 = vmatprep.subr.bf16.mxu0 0
      %1997 = vmatpush2.bf16.msra.mxu0 0
      %1998 = vmatprep.subr.bf16.mxu0 0
      %1999 = vmatpush2.bf16.msra.mxu0 0
      %2000 = vmatprep.subr.bf16.mxu0 0
      %2001 = vmatpush2.bf16.msra.mxu0 0
      %2002 = vmatprep.subr.bf16.mxu0 0
      %2003 = vmatpush2.bf16.msra.mxu0 0
      %2004 = vmatprep.subr.bf16.mxu0 0
      %2005 = vmatpush2.bf16.msra.mxu0 0
      %2006 = vmatprep.subr.bf16.mxu0 0
      %2007 = vmatpush2.bf16.msra.mxu0 0
      %2008 = vmatprep.subr.bf16.mxu0 0
      %2009 = vmatpush2.bf16.msra.mxu0 0
      %2010 = vmatprep.mubr.bf16.mxu0 0
      %2011 = vmatmul.mubr.bf16.gmra.mxu0 %v1976
      %v2012 = vpop.f32.mrf.mxu0
      %v2013 = vadd.f32 %v1960, %v2012
      %v2014 = vpop.f32.mrf.mxu0
      %v2015 = vpop.f32.mrf.mxu0
      %v2016 = vpop.f32.mrf.mxu0
      %2017 = vdwg.mxu0
      %v2018 = vld [vmem:[%s959] sm:$0xf]
      %v2019 = vld [vmem:[%s959 + $0x4] sm:$0xf]
      %v2020 = vld [vmem:[%s959 + $0x8] sm:$0xf]
      %v2021 = vld [vmem:[%s959 + $0xc] sm:$0xf]
      %v2022 = vld [vmem:[%s972] sm:$0x1]
      %v2024 = vlaneseq
      %v2025 = vshrl.u32 %v2024, 7
      %v2026 = vsub.s32 0, %v2025
      %v2027 = vrot.slane %v2022, %v2026
      %v2033 = vunpack.c.l.b16 %v2018
      %v2034 = vunpack.c.l.b16 %v2019
      %v2035 = vunpack.c.l.b16 %v2020
      %v2036 = vunpack.c.l.b16 %v2021
      %v2037 = vpack.c.b16 %v2034, %v2033
      %v2038 = vpack.c.b16 %v2036, %v2035
      %2041 = vmatprep.subr.bf16.mxu0 0
      %2042 = vmatpush1.bf16.msra.mxu0 0
      %2043 = vmatprep.subr.bf16.mxu0 0
      %2044 = vmatpush1.bf16.msra.mxu0 0
      %2045 = vmatprep.subr.bf16.mxu0 0
      %2046 = vmatpush1.bf16.msra.mxu0 0
      %2047 = vmatprep.subr.bf16.mxu0 0
      %2048 = vmatpush1.bf16.msra.mxu0 0
      %2049 = vmatprep.subr.bf16.mxu0 0
      %2050 = vmatpush1.bf16.msra.mxu0 0
      %2051 = vmatprep.subr.bf16.mxu0 0
      %2052 = vmatpush1.bf16.msra.mxu0 0
      %2053 = vmatprep.subr.bf16.mxu0 0
      %2054 = vmatpush1.bf16.msra.mxu0 %v2038
      %2055 = vmatprep.subr.bf16.mxu0 0
      %2056 = vmatpush1.bf16.msra.mxu0 %v2037
      %2057 = vmatprep.subr.bf16.mxu0 0
      %2058 = vmatpush2.bf16.msra.mxu0 0
      %2059 = vmatprep.subr.bf16.mxu0 0
      %2060 = vmatpush2.bf16.msra.mxu0 0
      %2061 = vmatprep.subr.bf16.mxu0 0
      %2062 = vmatpush2.bf16.msra.mxu0 0
      %2063 = vmatprep.subr.bf16.mxu0 0
      %2064 = vmatpush2.bf16.msra.mxu0 0
      %2065 = vmatprep.subr.bf16.mxu0 0
      %2066 = vmatpush2.bf16.msra.mxu0 0
      %2067 = vmatprep.subr.bf16.mxu0 0
      %2068 = vmatpush2.bf16.msra.mxu0 0
      %2069 = vmatprep.subr.bf16.mxu0 0
      %2070 = vmatpush2.bf16.msra.mxu0 0
      %2071 = vmatprep.subr.bf16.mxu0 0
      %2072 = vmatpush2.bf16.msra.mxu0 0
      %2073 = vmatprep.mubr.bf16.mxu0 0
      %2074 = vmatmul.mubr.bf16.gmra.mxu0 %v1976
      %v2075 = vpop.f32.mrf.mxu0
      %v2076 = vadd.f32 %v2027, %v2075
      %v2077 = vpop.f32.mrf.mxu0
      %v2078 = vpop.f32.mrf.mxu0
      %v2079 = vpop.f32.mrf.mxu0
      %2080 = vdwg.mxu0
      %v2081 = vld [vmem:[%s964] sm:$0xf]
      %v2082 = vld [vmem:[%s964 + $0x4] sm:$0xf]
      %v2083 = vld [vmem:[%s964 + $0x8] sm:$0xf]
      %v2084 = vld [vmem:[%s964 + $0xc] sm:$0xf]
      %v2085 = vld [vmem:[%s976] sm:$0x1]
      %v2087 = vlaneseq
      %v2088 = vshrl.u32 %v2087, 7
      %v2089 = vsub.s32 0, %v2088
      %v2090 = vrot.slane %v2085, %v2089
      %v2096 = vunpack.c.l.b16 %v2081
      %v2097 = vunpack.c.l.b16 %v2082
      %v2098 = vunpack.c.l.b16 %v2083
      %v2099 = vunpack.c.l.b16 %v2084
      %v2100 = vpack.c.b16 %v2097, %v2096
      %v2101 = vpack.c.b16 %v2099, %v2098
      %2104 = vmatprep.subr.bf16.mxu0 0
      %2105 = vmatpush1.bf16.msra.mxu0 0
      %2106 = vmatprep.subr.bf16.mxu0 0
      %2107 = vmatpush1.bf16.msra.mxu0 0
      %2108 = vmatprep.subr.bf16.mxu0 0
      %2109 = vmatpush1.bf16.msra.mxu0 0
      %2110 = vmatprep.subr.bf16.mxu0 0
      %2111 = vmatpush1.bf16.msra.mxu0 0
      %2112 = vmatprep.subr.bf16.mxu0 0
      %2113 = vmatpush1.bf16.msra.mxu0 0
      %2114 = vmatprep.subr.bf16.mxu0 0
      %2115 = vmatpush1.bf16.msra.mxu0 0
      %2116 = vmatprep.subr.bf16.mxu0 0
      %2117 = vmatpush1.bf16.msra.mxu0 %v2101
      %2118 = vmatprep.subr.bf16.mxu0 0
      %2119 = vmatpush1.bf16.msra.mxu0 %v2100
      %2120 = vmatprep.subr.bf16.mxu0 0
      %2121 = vmatpush2.bf16.msra.mxu0 0
      %2122 = vmatprep.subr.bf16.mxu0 0
      %2123 = vmatpush2.bf16.msra.mxu0 0
      %2124 = vmatprep.subr.bf16.mxu0 0
      %2125 = vmatpush2.bf16.msra.mxu0 0
      %2126 = vmatprep.subr.bf16.mxu0 0
      %2127 = vmatpush2.bf16.msra.mxu0 0
      %2128 = vmatprep.subr.bf16.mxu0 0
      %2129 = vmatpush2.bf16.msra.mxu0 0
      %2130 = vmatprep.subr.bf16.mxu0 0
      %2131 = vmatpush2.bf16.msra.mxu0 0
      %2132 = vmatprep.subr.bf16.mxu0 0
      %2133 = vmatpush2.bf16.msra.mxu0 0
      %2134 = vmatprep.subr.bf16.mxu0 0
      %2135 = vmatpush2.bf16.msra.mxu0 0
      %2136 = vmatprep.mubr.bf16.mxu0 0
      %2137 = vmatmul.mubr.bf16.gmra.mxu0 %v1976
      %v2138 = vpop.f32.mrf.mxu0
      %v2139 = vadd.f32 %v2090, %v2138
      %v2140 = vpop.f32.mrf.mxu0
      %v2141 = vpop.f32.mrf.mxu0
      %v2142 = vpop.f32.mrf.mxu0
      %2143 = vdwg.mxu0
      %v2144 = vpack.c.bf16 %v2013, %v2013
      %v2145 = vpack.c.bf16 %v2076, %v2076
      %vm2146 = vcmask 130048
      %v2148 = vsel %vm2146, %v2144, 0
      %v2151 = vsel %vm2146, %v2145, 0
      %2153 = vmatprep.subr.bf16.mxu0 0
      %2154 = vmatpush1.bf16.xpose.msra.mxu0 0
      %2155 = vmatprep.subr.bf16.mxu0 0
      %2156 = vmatpush1.bf16.xpose.msra.mxu0 0
      %2157 = vmatprep.subr.bf16.mxu0 0
      %2158 = vmatpush1.bf16.xpose.msra.mxu0 0
      %2159 = vmatprep.subr.bf16.mxu0 0
      %2160 = vmatpush1.bf16.xpose.msra.mxu0 0
      %2161 = vmatprep.subr.bf16.mxu0 0
      %2162 = vmatpush1.bf16.xpose.msra.mxu0 0
      %2163 = vmatprep.subr.bf16.mxu0 0
      %2164 = vmatpush1.bf16.xpose.msra.mxu0 0
      %2165 = vmatprep.subr.bf16.mxu0 0
      %2166 = vmatpush1.bf16.xpose.msra.mxu0 0
      %2167 = vmatprep.subr.bf16.mxu0 0
      %2168 = vmatpush1.bf16.xpose.msra.mxu0 %v2151
      %2169 = vmatprep.subr.bf16.mxu0 0
      %2170 = vmatpush2.bf16.xpose.msra.mxu0 0
      %2171 = vmatprep.subr.bf16.mxu0 0
      %2172 = vmatpush2.bf16.xpose.msra.mxu0 0
      %2173 = vmatprep.subr.bf16.mxu0 0
      %2174 = vmatpush2.bf16.xpose.msra.mxu0 0
      %2175 = vmatprep.subr.bf16.mxu0 0
      %2176 = vmatpush2.bf16.xpose.msra.mxu0 0
      %2177 = vmatprep.subr.bf16.mxu0 0
      %2178 = vmatpush2.bf16.xpose.msra.mxu0 0
      %2179 = vmatprep.subr.bf16.mxu0 0
      %2180 = vmatpush2.bf16.xpose.msra.mxu0 0
      %2181 = vmatprep.subr.bf16.mxu0 0
      %2182 = vmatpush2.bf16.xpose.msra.mxu0 0
      %2183 = vmatprep.subr.bf16.mxu0 0
      %2184 = vmatpush2.bf16.xpose.msra.mxu0 0
      %2185 = vmatprep.mubr.bf16.mxu0 0
      %2186 = vmatmul.mubr.bf16.gmra.mxu0 %v2148
      %v2187 = vpop.f32.mrf.mxu0
      %v2188 = vadd.f32 0.0, %v2187
      %v2189 = vpop.f32.mrf.mxu0
      %v2190 = vpop.f32.mrf.mxu0
      %v2191 = vpop.f32.mrf.mxu0
      %2192 = vdwg.mxu0
      %v2193 = vmul.f32 %v2188, 0.25
      %vm2194 = vcmask 36864
      %v2195 = vsel %vm2194, %v2193, -inf
      %2196 = vmax.xlane.f32.xlu0 %v2195
      %v2197 = vpop.xlane.xlu0 %2196
      %v2198 = vsub.f32 %v2193, %v2197
      %v2199 = vmul.f32 %v2198, 1.442695
      %v2200 = vpow.pop %v2199
      %v2201 = vsel %vm2194, %v2200, 0.0
      %2202 = vadd.xlane.f32.xlu0 %v2201
      %v2203 = vpop.xlane.xlu0 %2202
      %v2204 = vrcp.pop %v2203
      %v2205 = vmul.f32 %v2200, %v2204
      %v2206 = vpack.c.bf16 %v2205, %v2205
      %v2207 = vpack.c.bf16 %v2139, %v2139
      %vm2208 = vcmask 39936
      %v2210 = vsel %vm2208, %v2206, 0
      %vm2212 = vcmask 1041408
      %vm2213 = vcmask 1042432
      %v2214 = vsel %vm2212, 4294967295, 65535
      %v2215 = vsel %vm2213, %v2214, 0
      %v2217 = vand.u32 %v2207, %v2215
      %2219 = vmatprep.subr.bf16.mxu0 0
      %2220 = vmatpush1.bf16.msra.mxu0 0
      %2221 = vmatprep.subr.bf16.mxu0 0
      %2222 = vmatpush1.bf16.msra.mxu0 0
      %2223 = vmatprep.subr.bf16.mxu0 0
      %2224 = vmatpush1.bf16.msra.mxu0 0
      %2225 = vmatprep.subr.bf16.mxu0 0
      %2226 = vmatpush1.bf16.msra.mxu0 0
      %2227 = vmatprep.subr.bf16.mxu0 0
      %2228 = vmatpush1.bf16.msra.mxu0 0
      %2229 = vmatprep.subr.bf16.mxu0 0
      %2230 = vmatpush1.bf16.msra.mxu0 0
      %2231 = vmatprep.subr.bf16.mxu0 0
      %2232 = vmatpush1.bf16.msra.mxu0 0
      %2233 = vmatprep.subr.bf16.mxu0 0
      %2234 = vmatpush1.bf16.msra.mxu0 %v2217
      %2235 = vmatprep.subr.bf16.mxu0 0
      %2236 = vmatpush2.bf16.msra.mxu0 0
      %2237 = vmatprep.subr.bf16.mxu0 0
      %2238 = vmatpush2.bf16.msra.mxu0 0
      %2239 = vmatprep.subr.bf16.mxu0 0
      %2240 = vmatpush2.bf16.msra.mxu0 0
      %2241 = vmatprep.subr.bf16.mxu0 0
      %2242 = vmatpush2.bf16.msra.mxu0 0
      %2243 = vmatprep.subr.bf16.mxu0 0
      %2244 = vmatpush2.bf16.msra.mxu0 0
      %2245 = vmatprep.subr.bf16.mxu0 0
      %2246 = vmatpush2.bf16.msra.mxu0 0
      %2247 = vmatprep.subr.bf16.mxu0 0
      %2248 = vmatpush2.bf16.msra.mxu0 0
      %2249 = vmatprep.subr.bf16.mxu0 0
      %2250 = vmatpush2.bf16.msra.mxu0 0
      %2251 = vmatprep.mubr.bf16.mxu0 0
      %2252 = vmatmul.mubr.bf16.gmra.mxu0 %v2210
      %v2253 = vpop.f32.mrf.mxu0
      %v2254 = vadd.f32 0.0, %v2253
      %v2255 = vpop.f32.mrf.mxu0
      %v2256 = vpop.f32.mrf.mxu0
      %v2257 = vpop.f32.mrf.mxu0
      %2258 = vdwg.mxu0
      %v2259 = vpack.c.bf16 %v2254, %v2254
      %v2260 = vld [vmem:[%s981] sm:$0xf]
      %v2261 = vld [vmem:[%s981 + $0x4] sm:$0xf]
      %s2262 = scalar_lea.vmem %s954, 16
      %v2263 = vld [vmem:[%s2262] sm:$0xf]
      %v2264 = vld [vmem:[%s2262 + $0x4] sm:$0xf]
      %v2265 = vld [vmem:[%s2262 + $0x8] sm:$0xf]
      %v2266 = vld [vmem:[%s2262 + $0xc] sm:$0xf]
      %s2267 = scalar_lea.vmem %s968, 1
      %v2268 = vld [vmem:[%s2267] sm:$0x1]
      %v2270 = vlaneseq
      %v2271 = vshrl.u32 %v2270, 7
      %v2272 = vsub.s32 0, %v2271
      %v2273 = vrot.slane %v2268, %v2272
      %v2279 = vunpack.c.l.b16 %v2263
      %v2280 = vunpack.c.l.b16 %v2264
      %v2281 = vunpack.c.l.b16 %v2265
      %v2282 = vunpack.c.l.b16 %v2266
      %v2283 = vpack.c.b16 %v2280, %v2279
      %v2284 = vpack.c.b16 %v2282, %v2281
      %2287 = vmatprep.subr.bf16.mxu0 0
      %2288 = vmatpush1.bf16.msra.mxu0 0
      %2289 = vmatprep.subr.bf16.mxu0 0
      %2290 = vmatpush1.bf16.msra.mxu0 0
      %2291 = vmatprep.subr.bf16.mxu0 0
      %2292 = vmatpush1.bf16.msra.mxu0 0
      %2293 = vmatprep.subr.bf16.mxu0 0
      %2294 = vmatpush1.bf16.msra.mxu0 0
      %2295 = vmatprep.subr.bf16.mxu0 0
      %2296 = vmatpush1.bf16.msra.mxu0 0
      %2297 = vmatprep.subr.bf16.mxu0 0
      %2298 = vmatpush1.bf16.msra.mxu0 0
      %2299 = vmatprep.subr.bf16.mxu0 0
      %2300 = vmatpush1.bf16.msra.mxu0 %v2284
      %2301 = vmatprep.subr.bf16.mxu0 0
      %2302 = vmatpush1.bf16.msra.mxu0 %v2283
      %2303 = vmatprep.subr.bf16.mxu0 0
      %2304 = vmatpush2.bf16.msra.mxu0 0
      %2305 = vmatprep.subr.bf16.mxu0 0
      %2306 = vmatpush2.bf16.msra.mxu0 0
      %2307 = vmatprep.subr.bf16.mxu0 0
      %2308 = vmatpush2.bf16.msra.mxu0 0
      %2309 = vmatprep.subr.bf16.mxu0 0
      %2310 = vmatpush2.bf16.msra.mxu0 0
      %2311 = vmatprep.subr.bf16.mxu0 0
      %2312 = vmatpush2.bf16.msra.mxu0 0
      %2313 = vmatprep.subr.bf16.mxu0 0
      %2314 = vmatpush2.bf16.msra.mxu0 0
      %2315 = vmatprep.subr.bf16.mxu0 0
      %2316 = vmatpush2.bf16.msra.mxu0 0
      %2317 = vmatprep.subr.bf16.mxu0 0
      %2318 = vmatpush2.bf16.msra.mxu0 0
      %2319 = vmatprep.mubr.bf16.mxu0 0
      %2320 = vmatmul.mubr.bf16.gmra.mxu0 %v1976
      %v2321 = vpop.f32.mrf.mxu0
      %v2322 = vadd.f32 %v2273, %v2321
      %v2323 = vpop.f32.mrf.mxu0
      %v2324 = vpop.f32.mrf.mxu0
      %v2325 = vpop.f32.mrf.mxu0
      %2326 = vdwg.mxu0
      %s2327 = scalar_lea.vmem %s959, 16
      %v2328 = vld [vmem:[%s2327] sm:$0xf]
      %v2329 = vld [vmem:[%s2327 + $0x4] sm:$0xf]
      %v2330 = vld [vmem:[%s2327 + $0x8] sm:$0xf]
      %v2331 = vld [vmem:[%s2327 + $0xc] sm:$0xf]
      %s2332 = scalar_lea.vmem %s972, 1
      %v2333 = vld [vmem:[%s2332] sm:$0x1]
      %v2335 = vlaneseq
      %v2336 = vshrl.u32 %v2335, 7
      %v2337 = vsub.s32 0, %v2336
      %v2338 = vrot.slane %v2333, %v2337
      %v2344 = vunpack.c.l.b16 %v2328
      %v2345 = vunpack.c.l.b16 %v2329
      %v2346 = vunpack.c.l.b16 %v2330
      %v2347 = vunpack.c.l.b16 %v2331
      %v2348 = vpack.c.b16 %v2345, %v2344
      %v2349 = vpack.c.b16 %v2347, %v2346
      %2352 = vmatprep.subr.bf16.mxu0 0
      %2353 = vmatpush1.bf16.msra.mxu0 0
      %2354 = vmatprep.subr.bf16.mxu0 0
      %2355 = vmatpush1.bf16.msra.mxu0 0
      %2356 = vmatprep.subr.bf16.mxu0 0
      %2357 = vmatpush1.bf16.msra.mxu0 0
      %2358 = vmatprep.subr.bf16.mxu0 0
      %2359 = vmatpush1.bf16.msra.mxu0 0
      %2360 = vmatprep.subr.bf16.mxu0 0
      %2361 = vmatpush1.bf16.msra.mxu0 0
      %2362 = vmatprep.subr.bf16.mxu0 0
      %2363 = vmatpush1.bf16.msra.mxu0 0
      %2364 = vmatprep.subr.bf16.mxu0 0
      %2365 = vmatpush1.bf16.msra.mxu0 %v2349
      %2366 = vmatprep.subr.bf16.mxu0 0
      %2367 = vmatpush1.bf16.msra.mxu0 %v2348
      %2368 = vmatprep.subr.bf16.mxu0 0
      %2369 = vmatpush2.bf16.msra.mxu0 0
      %2370 = vmatprep.subr.bf16.mxu0 0
      %2371 = vmatpush2.bf16.msra.mxu0 0
      %2372 = vmatprep.subr.bf16.mxu0 0
      %2373 = vmatpush2.bf16.msra.mxu0 0
      %2374 = vmatprep.subr.bf16.mxu0 0
      %2375 = vmatpush2.bf16.msra.mxu0 0
      %2376 = vmatprep.subr.bf16.mxu0 0
      %2377 = vmatpush2.bf16.msra.mxu0 0
      %2378 = vmatprep.subr.bf16.mxu0 0
      %2379 = vmatpush2.bf16.msra.mxu0 0
      %2380 = vmatprep.subr.bf16.mxu0 0
      %2381 = vmatpush2.bf16.msra.mxu0 0
      %2382 = vmatprep.subr.bf16.mxu0 0
      %2383 = vmatpush2.bf16.msra.mxu0 0
      %2384 = vmatprep.mubr.bf16.mxu0 0
      %2385 = vmatmul.mubr.bf16.gmra.mxu0 %v1976
      %v2386 = vpop.f32.mrf.mxu0
      %v2387 = vadd.f32 %v2338, %v2386
      %v2388 = vpop.f32.mrf.mxu0
      %v2389 = vpop.f32.mrf.mxu0
      %v2390 = vpop.f32.mrf.mxu0
      %2391 = vdwg.mxu0
      %s2392 = scalar_lea.vmem %s964, 16
      %v2393 = vld [vmem:[%s2392] sm:$0xf]
      %v2394 = vld [vmem:[%s2392 + $0x4] sm:$0xf]
      %v2395 = vld [vmem:[%s2392 + $0x8] sm:$0xf]
      %v2396 = vld [vmem:[%s2392 + $0xc] sm:$0xf]
      %s2397 = scalar_lea.vmem %s976, 1
      %v2398 = vld [vmem:[%s2397] sm:$0x1]
      %v2400 = vlaneseq
      %v2401 = vshrl.u32 %v2400, 7
      %v2402 = vsub.s32 0, %v2401
      %v2403 = vrot.slane %v2398, %v2402
      %v2409 = vunpack.c.l.b16 %v2393
      %v2410 = vunpack.c.l.b16 %v2394
      %v2411 = vunpack.c.l.b16 %v2395
      %v2412 = vunpack.c.l.b16 %v2396
      %v2413 = vpack.c.b16 %v2410, %v2409
      %v2414 = vpack.c.b16 %v2412, %v2411
      %2417 = vmatprep.subr.bf16.mxu0 0
      %2418 = vmatpush1.bf16.msra.mxu0 0
      %2419 = vmatprep.subr.bf16.mxu0 0
      %2420 = vmatpush1.bf16.msra.mxu0 0
      %2421 = vmatprep.subr.bf16.mxu0 0
      %2422 = vmatpush1.bf16.msra.mxu0 0
      %2423 = vmatprep.subr.bf16.mxu0 0
      %2424 = vmatpush1.bf16.msra.mxu0 0
      %2425 = vmatprep.subr.bf16.mxu0 0
      %2426 = vmatpush1.bf16.msra.mxu0 0
      %2427 = vmatprep.subr.bf16.mxu0 0
      %2428 = vmatpush1.bf16.msra.mxu0 0
      %2429 = vmatprep.subr.bf16.mxu0 0
      %2430 = vmatpush1.bf16.msra.mxu0 %v2414
      %2431 = vmatprep.subr.bf16.mxu0 0
      %2432 = vmatpush1.bf16.msra.mxu0 %v2413
      %2433 = vmatprep.subr.bf16.mxu0 0
      %2434 = vmatpush2.bf16.msra.mxu0 0
      %2435 = vmatprep.subr.bf16.mxu0 0
      %2436 = vmatpush2.bf16.msra.mxu0 0
      %2437 = vmatprep.subr.bf16.mxu0 0
      %2438 = vmatpush2.bf16.msra.mxu0 0
      %2439 = vmatprep.subr.bf16.mxu0 0
      %2440 = vmatpush2.bf16.msra.mxu0 0
      %2441 = vmatprep.subr.bf16.mxu0 0
      %2442 = vmatpush2.bf16.msra.mxu0 0
      %2443 = vmatprep.subr.bf16.mxu0 0
      %2444 = vmatpush2.bf16.msra.mxu0 0
      %2445 = vmatprep.subr.bf16.mxu0 0
      %2446 = vmatpush2.bf16.msra.mxu0 0
      %2447 = vmatprep.subr.bf16.mxu0 0
      %2448 = vmatpush2.bf16.msra.mxu0 0
      %2449 = vmatprep.mubr.bf16.mxu0 0
      %2450 = vmatmul.mubr.bf16.gmra.mxu0 %v1976
      %v2451 = vpop.f32.mrf.mxu0
      %v2452 = vadd.f32 %v2403, %v2451
      %v2453 = vpop.f32.mrf.mxu0
      %v2454 = vpop.f32.mrf.mxu0
      %v2455 = vpop.f32.mrf.mxu0
      %2456 = vdwg.mxu0
      %v2457 = vpack.c.bf16 %v2322, %v2322
      %v2458 = vpack.c.bf16 %v2387, %v2387
      %v2460 = vsel %vm2146, %v2457, 0
      %v2463 = vsel %vm2146, %v2458, 0
      %2465 = vmatprep.subr.bf16.mxu0 0
      %2466 = vmatpush1.bf16.xpose.msra.mxu0 0
      %2467 = vmatprep.subr.bf16.mxu0 0
      %2468 = vmatpush1.bf16.xpose.msra.mxu0 0
      %2469 = vmatprep.subr.bf16.mxu0 0
      %2470 = vmatpush1.bf16.xpose.msra.mxu0 0
      %2471 = vmatprep.subr.bf16.mxu0 0
      %2472 = vmatpush1.bf16.xpose.msra.mxu0 0
      %2473 = vmatprep.subr.bf16.mxu0 0
      %2474 = vmatpush1.bf16.xpose.msra.mxu0 0
      %2475 = vmatprep.subr.bf16.mxu0 0
      %2476 = vmatpush1.bf16.xpose.msra.mxu0 0
      %2477 = vmatprep.subr.bf16.mxu0 0
      %2478 = vmatpush1.bf16.xpose.msra.mxu0 0
      %2479 = vmatprep.subr.bf16.mxu0 0
      %2480 = vmatpush1.bf16.xpose.msra.mxu0 %v2463
      %2481 = vmatprep.subr.bf16.mxu0 0
      %2482 = vmatpush2.bf16.xpose.msra.mxu0 0
      %2483 = vmatprep.subr.bf16.mxu0 0
      %2484 = vmatpush2.bf16.xpose.msra.mxu0 0
      %2485 = vmatprep.subr.bf16.mxu0 0
      %2486 = vmatpush2.bf16.xpose.msra.mxu0 0
      %2487 = vmatprep.subr.bf16.mxu0 0
      %2488 = vmatpush2.bf16.xpose.msra.mxu0 0
      %2489 = vmatprep.subr.bf16.mxu0 0
      %2490 = vmatpush2.bf16.xpose.msra.mxu0 0
      %2491 = vmatprep.subr.bf16.mxu0 0
      %2492 = vmatpush2.bf16.xpose.msra.mxu0 0
      %2493 = vmatprep.subr.bf16.mxu0 0
      %2494 = vmatpush2.bf16.xpose.msra.mxu0 0
      %2495 = vmatprep.subr.bf16.mxu0 0
      %2496 = vmatpush2.bf16.xpose.msra.mxu0 0
      %2497 = vmatprep.mubr.bf16.mxu0 0
      %2498 = vmatmul.mubr.bf16.gmra.mxu0 %v2460
      %v2499 = vpop.f32.mrf.mxu0
      %v2500 = vadd.f32 0.0, %v2499
      %v2501 = vpop.f32.mrf.mxu0
      %v2502 = vpop.f32.mrf.mxu0
      %v2503 = vpop.f32.mrf.mxu0
      %2504 = vdwg.mxu0
      %v2505 = vmul.f32 %v2500, 0.25
      %v2506 = vsel %vm2194, %v2505, -inf
      %2507 = vmax.xlane.f32.xlu0 %v2506
      %v2508 = vpop.xlane.xlu0 %2507
      %v2509 = vsub.f32 %v2505, %v2508
      %v2510 = vmul.f32 %v2509, 1.442695
      %v2511 = vpow.pop %v2510
      %v2512 = vsel %vm2194, %v2511, 0.0
      %2513 = vadd.xlane.f32.xlu0 %v2512
      %v2514 = vpop.xlane.xlu0 %2513
      %v2515 = vrcp.pop %v2514
      %v2516 = vmul.f32 %v2511, %v2515
      %v2517 = vpack.c.bf16 %v2516, %v2516
      %v2518 = vpack.c.bf16 %v2452, %v2452
      %v2520 = vsel %vm2208, %v2517, 0
      %v2523 = vand.u32 %v2518, %v2215
      %2525 = vmatprep.subr.bf16.mxu0 0
      %2526 = vmatpush1.bf16.msra.mxu0 0
      %2527 = vmatprep.subr.bf16.mxu0 0
      %2528 = vmatpush1.bf16.msra.mxu0 0
      %2529 = vmatprep.subr.bf16.mxu0 0
      %2530 = vmatpush1.bf16.msra.mxu0 0
      %2531 = vmatprep.subr.bf16.mxu0 0
      %2532 = vmatpush1.bf16.msra.mxu0 0
      %2533 = vmatprep.subr.bf16.mxu0 0
      %2534 = vmatpush1.bf16.msra.mxu0 0
      %2535 = vmatprep.subr.bf16.mxu0 0
      %2536 = vmatpush1.bf16.msra.mxu0 0
      %2537 = vmatprep.subr.bf16.mxu0 0
      %2538 = vmatpush1.bf16.msra.mxu0 0
      %2539 = vmatprep.subr.bf16.mxu0 0
      %2540 = vmatpush1.bf16.msra.mxu0 %v2523
      %2541 = vmatprep.subr.bf16.mxu0 0
      %2542 = vmatpush2.bf16.msra.mxu0 0
      %2543 = vmatprep.subr.bf16.mxu0 0
      %2544 = vmatpush2.bf16.msra.mxu0 0
      %2545 = vmatprep.subr.bf16.mxu0 0
      %2546 = vmatpush2.bf16.msra.mxu0 0
      %2547 = vmatprep.subr.bf16.mxu0 0
      %2548 = vmatpush2.bf16.msra.mxu0 0
      %2549 = vmatprep.subr.bf16.mxu0 0
      %2550 = vmatpush2.bf16.msra.mxu0 0
      %2551 = vmatprep.subr.bf16.mxu0 0
      %2552 = vmatpush2.bf16.msra.mxu0 0
      %2553 = vmatprep.subr.bf16.mxu0 0
      %2554 = vmatpush2.bf16.msra.mxu0 0
      %2555 = vmatprep.subr.bf16.mxu0 0
      %2556 = vmatpush2.bf16.msra.mxu0 0
      %2557 = vmatprep.mubr.bf16.mxu0 0
      %2558 = vmatmul.mubr.bf16.gmra.mxu0 %v2520
      %v2559 = vpop.f32.mrf.mxu0
      %v2560 = vadd.f32 0.0, %v2559
      %v2561 = vpop.f32.mrf.mxu0
      %v2562 = vpop.f32.mrf.mxu0
      %v2563 = vpop.f32.mrf.mxu0
      %2564 = vdwg.mxu0
      %v2565 = vpack.c.bf16 %v2560, %v2560
      %s2566 = scalar_lea.vmem %s981, 8
      %v2567 = vld [vmem:[%s2566] sm:$0xf]
      %v2568 = vld [vmem:[%s2566 + $0x4] sm:$0xf]
      %v2571 = vunpack.c.l.b16 %v2567
      %v2572 = vunpack.c.l.b16 %v2568
      %v2573 = vpack.c.b16 %v2572, %v2571
      %v2576 = vsel %vm2146, %v2565, 0
      %2578 = vmatprep.subr.bf16.mxu0 0
      %2579 = vmatpush1.bf16.msra.mxu0 0
      %2580 = vmatprep.subr.bf16.mxu0 0
      %2581 = vmatpush1.bf16.msra.mxu0 0
      %2582 = vmatprep.subr.bf16.mxu0 0
      %2583 = vmatpush1.bf16.msra.mxu0 0
      %2584 = vmatprep.subr.bf16.mxu0 0
      %2585 = vmatpush1.bf16.msra.mxu0 0
      %2586 = vmatprep.subr.bf16.mxu0 0
      %2587 = vmatpush1.bf16.msra.mxu0 0
      %2588 = vmatprep.subr.bf16.mxu0 0
      %2589 = vmatpush1.bf16.msra.mxu0 0
      %2590 = vmatprep.subr.bf16.mxu0 0
      %2591 = vmatpush1.bf16.msra.mxu0 0
      %2592 = vmatprep.subr.bf16.mxu0 0
      %2593 = vmatpush1.bf16.msra.mxu0 %v2573
      %2594 = vmatprep.subr.bf16.mxu0 0
      %2595 = vmatpush2.bf16.msra.mxu0 0
      %2596 = vmatprep.subr.bf16.mxu0 0
      %2597 = vmatpush2.bf16.msra.mxu0 0
      %2598 = vmatprep.subr.bf16.mxu0 0
      %2599 = vmatpush2.bf16.msra.mxu0 0
      %2600 = vmatprep.subr.bf16.mxu0 0
      %2601 = vmatpush2.bf16.msra.mxu0 0
      %2602 = vmatprep.subr.bf16.mxu0 0
      %2603 = vmatpush2.bf16.msra.mxu0 0
      %2604 = vmatprep.subr.bf16.mxu0 0
      %2605 = vmatpush2.bf16.msra.mxu0 0
      %2606 = vmatprep.subr.bf16.mxu0 0
      %2607 = vmatpush2.bf16.msra.mxu0 0
      %2608 = vmatprep.subr.bf16.mxu0 0
      %2609 = vmatpush2.bf16.msra.mxu0 0
      %2610 = vmatprep.mubr.bf16.mxu0 0
      %2611 = vmatmul.mubr.bf16.gmra.mxu0 %v2576
      %v2612 = vpop.f32.mrf.mxu0
      %v2613 = vadd.f32 0.0, %v2612
      %v2614 = vpop.f32.mrf.mxu0
      %v2615 = vpop.f32.mrf.mxu0
      %v2616 = vpop.f32.mrf.mxu0
      %2617 = vdwg.mxu0
      %v2620 = vunpack.c.l.b16 %v2260
      %v2621 = vunpack.c.l.b16 %v2261
      %v2622 = vpack.c.b16 %v2621, %v2620
      %v2625 = vsel %vm2146, %v2259, 0
      %2627 = vmatprep.subr.bf16.mxu0 0
      %2628 = vmatpush1.bf16.msra.mxu0 0
      %2629 = vmatprep.subr.bf16.mxu0 0
      %2630 = vmatpush1.bf16.msra.mxu0 0
      %2631 = vmatprep.subr.bf16.mxu0 0
      %2632 = vmatpush1.bf16.msra.mxu0 0
      %2633 = vmatprep.subr.bf16.mxu0 0
      %2634 = vmatpush1.bf16.msra.mxu0 0
      %2635 = vmatprep.subr.bf16.mxu0 0
      %2636 = vmatpush1.bf16.msra.mxu0 0
      %2637 = vmatprep.subr.bf16.mxu0 0
      %2638 = vmatpush1.bf16.msra.mxu0 0
      %2639 = vmatprep.subr.bf16.mxu0 0
      %2640 = vmatpush1.bf16.msra.mxu0 0
      %2641 = vmatprep.subr.bf16.mxu0 0
      %2642 = vmatpush1.bf16.msra.mxu0 %v2622
      %2643 = vmatprep.subr.bf16.mxu0 0
      %2644 = vmatpush2.bf16.msra.mxu0 0
      %2645 = vmatprep.subr.bf16.mxu0 0
      %2646 = vmatpush2.bf16.msra.mxu0 0
      %2647 = vmatprep.subr.bf16.mxu0 0
      %2648 = vmatpush2.bf16.msra.mxu0 0
      %2649 = vmatprep.subr.bf16.mxu0 0
      %2650 = vmatpush2.bf16.msra.mxu0 0
      %2651 = vmatprep.subr.bf16.mxu0 0
      %2652 = vmatpush2.bf16.msra.mxu0 0
      %2653 = vmatprep.subr.bf16.mxu0 0
      %2654 = vmatpush2.bf16.msra.mxu0 0
      %2655 = vmatprep.subr.bf16.mxu0 0
      %2656 = vmatpush2.bf16.msra.mxu0 0
      %2657 = vmatprep.subr.bf16.mxu0 0
      %2658 = vmatpush2.bf16.msra.mxu0 0
      %2659 = vmatprep.mubr.bf16.mxu0 0
      %2660 = vmatmul.mubr.bf16.gmra.mxu0 %v2625
      %v2661 = vpop.f32.mrf.mxu0
      %v2662 = vadd.f32 %v2613, %v2661
      %v2663 = vpop.f32.mrf.mxu0
      %v2664 = vpop.f32.mrf.mxu0
      %v2665 = vpop.f32.mrf.mxu0
      %2666 = vdwg.mxu0
      %v2668 = vlaneseq
      %v2669 = vshrl.u32 %v2668, 7
      %v2670 = vsub.s32 0, %v2669
      %v2671 = vrot.slane %v1913, %v2670
      %v2673 = vadd.f32 %v2662, %v2671
      %v2675 = vlaneseq
      %v2676 = vshrl.u32 %v2675, 7
      %v2677 = vsub.s32 0, %v2676
      %v2678 = vrot.slane %v1914, %v2677
      %v2680 = vmul.f32 %v2678, %v2673
      %v2681 = vadd.f32 %v1920, %v2680
      %v2682 = vsel %vm1921, %v2681, 0.0
      %2683 = vadd.xlane.f32.xlu0 %v2682
      %v2684 = vpop.xlane.xlu0 %2683
      %v2685 = vmul.f32 %v2684, %v1925
      %v2686 = vsub.f32 %v2681, %v2685
      %v2687 = vmul.f32 %v2686, %v2686
      %v2688 = vsel %vm1921, %v2687, 0.0
      %2689 = vadd.xlane.f32.xlu0 %v2688
      %v2690 = vpop.xlane.xlu0 %2689
      %v2691 = vmul.f32 %v2690, %v1925
      %v2692 = vadd.f32 %v2691, 1e-06
      %v2693 = vrsqrt.pop %v2692
      %v2694 = vmul.f32 %v2686, %v2693
      %v2696 = vlaneseq
      %v2697 = vshrl.u32 %v2696, 7
      %v2698 = vsub.s32 0, %v2697
      %v2699 = vrot.slane %v1915, %v2698
      %v2701 = vmul.f32 %v2694, %v2699
      %v2703 = vlaneseq
      %v2704 = vshrl.u32 %v2703, 7
      %v2705 = vsub.s32 0, %v2704
      %v2706 = vrot.slane %v1916, %v2705
      %v2708 = vadd.f32 %v2701, %v2706
      %v2709 = vpack.c.bf16 %v2708, %v2708
      %v2710 = vld [vmem:[%s998] sm:$0xf]
      %v2711 = vld [vmem:[%s998 + $0x4] sm:$0xf]
      %v2712 = vld [vmem:[%s998 + $0x8] sm:$0xf]
      %v2713 = vld [vmem:[%s998 + $0xc] sm:$0xf]
      %v2715 = vlaneseq
      %v2716 = vshrl.u32 %v2715, 7
      %v2717 = vsub.s32 0, %v2716
      %v2718 = vrot.slane %v1917, %v2717
      %v2724 = vunpack.c.l.b16 %v2710
      %v2725 = vunpack.c.l.b16 %v2711
      %v2726 = vunpack.c.l.b16 %v2712
      %v2727 = vunpack.c.l.b16 %v2713
      %v2728 = vpack.c.b16 %v2725, %v2724
      %v2729 = vpack.c.b16 %v2727, %v2726
      %v2733 = vsel %vm1974, %v2709, 0
      %2735 = vmatprep.subr.bf16.mxu0 0
      %2736 = vmatpush1.bf16.msra.mxu0 0
      %2737 = vmatprep.subr.bf16.mxu0 0
      %2738 = vmatpush1.bf16.msra.mxu0 0
      %2739 = vmatprep.subr.bf16.mxu0 0
      %2740 = vmatpush1.bf16.msra.mxu0 0
      %2741 = vmatprep.subr.bf16.mxu0 0
      %2742 = vmatpush1.bf16.msra.mxu0 0
      %2743 = vmatprep.subr.bf16.mxu0 0
      %2744 = vmatpush1.bf16.msra.mxu0 0
      %2745 = vmatprep.subr.bf16.mxu0 0
      %2746 = vmatpush1.bf16.msra.mxu0 0
      %2747 = vmatprep.subr.bf16.mxu0 0
      %2748 = vmatpush1.bf16.msra.mxu0 %v2729
      %2749 = vmatprep.subr.bf16.mxu0 0
      %2750 = vmatpush1.bf16.msra.mxu0 %v2728
      %2751 = vmatprep.subr.bf16.mxu0 0
      %2752 = vmatpush2.bf16.msra.mxu0 0
      %2753 = vmatprep.subr.bf16.mxu0 0
      %2754 = vmatpush2.bf16.msra.mxu0 0
      %2755 = vmatprep.subr.bf16.mxu0 0
      %2756 = vmatpush2.bf16.msra.mxu0 0
      %2757 = vmatprep.subr.bf16.mxu0 0
      %2758 = vmatpush2.bf16.msra.mxu0 0
      %2759 = vmatprep.subr.bf16.mxu0 0
      %2760 = vmatpush2.bf16.msra.mxu0 0
      %2761 = vmatprep.subr.bf16.mxu0 0
      %2762 = vmatpush2.bf16.msra.mxu0 0
      %2763 = vmatprep.subr.bf16.mxu0 0
      %2764 = vmatpush2.bf16.msra.mxu0 0
      %2765 = vmatprep.subr.bf16.mxu0 0
      %2766 = vmatpush2.bf16.msra.mxu0 0
      %2767 = vmatprep.mubr.bf16.mxu0 0
      %2768 = vmatmul.mubr.bf16.gmra.mxu0 %v2733
      %v2769 = vpop.f32.mrf.mxu0
      %v2770 = vadd.f32 %v2718, %v2769
      %v2771 = vpop.f32.mrf.mxu0
      %v2772 = vpop.f32.mrf.mxu0
      %v2773 = vpop.f32.mrf.mxu0
      %2774 = vdwg.mxu0
      %v2775 = vmul.f32 %v2770, %v2770
      %v2776 = vmul.f32 %v2770, %v2775
      %v2777 = vmul.f32 %v2776, 0.044715
      %v2778 = vadd.f32 %v2770, %v2777
      %v2779 = vmul.f32 %v2778, 0.7978846
      %v2780 = vtanh.pop %v2779
      %v2781 = vadd.f32 %v2780, 1.0
      %v2782 = vmul.f32 %v2781, 0.5
      %v2783 = vmul.f32 %v2770, %v2782
      %v2784 = vpack.c.bf16 %v2783, %v2783
      %v2785 = vld [vmem:[%s1006] sm:$0xf]
      %v2786 = vld [vmem:[%s1006 + $0x4] sm:$0xf]
      %v2787 = vld [vmem:[%s1006 + $0x8] sm:$0xf]
      %v2788 = vld [vmem:[%s1006 + $0xc] sm:$0xf]
      %v2789 = vld [vmem:[%s1006 + $0x10] sm:$0xf]
      %v2790 = vld [vmem:[%s1006 + $0x14] sm:$0xf]
      %v2791 = vld [vmem:[%s1006 + $0x18] sm:$0xf]
      %v2792 = vld [vmem:[%s1006 + $0x1c] sm:$0xf]
      %v2793 = vld [vmem:[%s1006 + $0x20] sm:$0xf]
      %v2794 = vld [vmem:[%s1006 + $0x24] sm:$0xf]
      %v2795 = vld [vmem:[%s1006 + $0x28] sm:$0xf]
      %v2796 = vld [vmem:[%s1006 + $0x2c] sm:$0xf]
      %v2797 = vld [vmem:[%s1006 + $0x30] sm:$0xf]
      %v2798 = vld [vmem:[%s1006 + $0x34] sm:$0xf]
      %v2799 = vld [vmem:[%s1006 + $0x38] sm:$0xf]
      %v2800 = vld [vmem:[%s1006 + $0x3c] sm:$0xf]
      %v2802 = vlaneseq
      %v2803 = vshrl.u32 %v2802, 7
      %v2804 = vsub.s32 0, %v2803
      %v2805 = vrot.slane %v1918, %v2804
      %v2823 = vunpack.c.l.b16 %v2785
      %v2824 = vunpack.c.l.b16 %v2786
      %v2825 = vunpack.c.l.b16 %v2787
      %v2826 = vunpack.c.l.b16 %v2788
      %v2827 = vunpack.c.l.b16 %v2789
      %v2828 = vunpack.c.l.b16 %v2790
      %v2829 = vunpack.c.l.b16 %v2791
      %v2830 = vunpack.c.l.b16 %v2792
      %v2831 = vunpack.c.l.b16 %v2793
      %v2832 = vunpack.c.l.b16 %v2794
      %v2833 = vunpack.c.l.b16 %v2795
      %v2834 = vunpack.c.l.b16 %v2796
      %v2835 = vunpack.c.l.b16 %v2797
      %v2836 = vunpack.c.l.b16 %v2798
      %v2837 = vunpack.c.l.b16 %v2799
      %v2838 = vunpack.c.l.b16 %v2800
      %v2839 = vpack.c.b16 %v2824, %v2823
      %v2840 = vpack.c.b16 %v2826, %v2825
      %v2841 = vpack.c.b16 %v2828, %v2827
      %v2842 = vpack.c.b16 %v2830, %v2829
      %v2843 = vpack.c.b16 %v2832, %v2831
      %v2844 = vpack.c.b16 %v2834, %v2833
      %v2845 = vpack.c.b16 %v2836, %v2835
      %v2846 = vpack.c.b16 %v2838, %v2837
      %2855 = vmatprep.subr.bf16.mxu0 0
      %2856 = vmatpush1.bf16.msra.mxu0 %v2846
      %2857 = vmatprep.subr.bf16.mxu0 0
      %2858 = vmatpush1.bf16.msra.mxu0 %v2845
      %2859 = vmatprep.subr.bf16.mxu0 0
      %2860 = vmatpush1.bf16.msra.mxu0 %v2844
      %2861 = vmatprep.subr.bf16.mxu0 0
      %2862 = vmatpush1.bf16.msra.mxu0 %v2843
      %2863 = vmatprep.subr.bf16.mxu0 0
      %2864 = vmatpush1.bf16.msra.mxu0 %v2842
      %2865 = vmatprep.subr.bf16.mxu0 0
      %2866 = vmatpush1.bf16.msra.mxu0 %v2841
      %2867 = vmatprep.subr.bf16.mxu0 0
      %2868 = vmatpush1.bf16.msra.mxu0 %v2840
      %2869 = vmatprep.subr.bf16.mxu0 0
      %2870 = vmatpush1.bf16.msra.mxu0 %v2839
      %2871 = vmatprep.subr.bf16.mxu0 0
      %2872 = vmatpush2.bf16.msra.mxu0 0
      %2873 = vmatprep.subr.bf16.mxu0 0
      %2874 = vmatpush2.bf16.msra.mxu0 0
      %2875 = vmatprep.subr.bf16.mxu0 0
      %2876 = vmatpush2.bf16.msra.mxu0 0
      %2877 = vmatprep.subr.bf16.mxu0 0
      %2878 = vmatpush2.bf16.msra.mxu0 0
      %2879 = vmatprep.subr.bf16.mxu0 0
      %2880 = vmatpush2.bf16.msra.mxu0 0
      %2881 = vmatprep.subr.bf16.mxu0 0
      %2882 = vmatpush2.bf16.msra.mxu0 0
      %2883 = vmatprep.subr.bf16.mxu0 0
      %2884 = vmatpush2.bf16.msra.mxu0 0
      %2885 = vmatprep.subr.bf16.mxu0 0
      %2886 = vmatpush2.bf16.msra.mxu0 0
      %2887 = vmatprep.mubr.bf16.mxu0 0
      %2888 = vmatmul.mubr.bf16.gmra.mxu0 %v2784
      %v2889 = vpop.f32.mrf.mxu0
      %v2890 = vadd.f32 %v2805, %v2889
      %v2891 = vpop.f32.mrf.mxu0
      %v2892 = vpop.f32.mrf.mxu0
      %v2893 = vpop.f32.mrf.mxu0
      %2894 = vdwg.mxu0
      %v2896 = vlaneseq
      %v2897 = vshrl.u32 %v2896, 7
      %v2898 = vsub.s32 0, %v2897
      %v2899 = vrot.slane %v1919, %v2898
      %v2901 = vmul.f32 %v2899, %v2890
      %v2902 = vadd.f32 %v2681, %v2901
      %2903 = vst.msk [vmem:[#allocation2] sm:$0x1f] %vm1921, %v2902
      %s2904 = scalar_lea.vmem [#allocation2], 8
      %v2905 = vld [vmem:[%s2904] sm:$0x1f]
      %v2906 = vsel %vm1921, %v2905, 0.0
      %2907 = vadd.xlane.f32.xlu0 %v2906
      %v2908 = vpop.xlane.xlu0 %2907
      %v2909 = vmul.f32 %v2908, %v1925
      %v2910 = vsub.f32 %v2905, %v2909
      %v2911 = vmul.f32 %v2910, %v2910
      %v2912 = vsel %vm1921, %v2911, 0.0
      %2913 = vadd.xlane.f32.xlu0 %v2912
      %v2914 = vpop.xlane.xlu0 %2913
      %v2915 = vmul.f32 %v2914, %v1925
      %v2916 = vadd.f32 %v2915, 1e-06
      %v2917 = vrsqrt.pop %v2916
      %v2918 = vmul.f32 %v2910, %v2917
      %v2919 = vmul.f32 %v2918, %v1940
      %v2920 = vadd.f32 %v2919, %v1947
      %v2921 = vpack.c.bf16 %v2920, %v2920
      %v2922 = vld [vmem:[%s954] sm:$0xf]
      %v2923 = vld [vmem:[%s954 + $0x4] sm:$0xf]
      %v2924 = vld [vmem:[%s954 + $0x8] sm:$0xf]
      %v2925 = vld [vmem:[%s954 + $0xc] sm:$0xf]
      %v2926 = vld [vmem:[%s968] sm:$0x1]
      %v2928 = vlaneseq
      %v2929 = vshrl.u32 %v2928, 7
      %v2930 = vsub.s32 0, %v2929
      %v2931 = vrot.slane %v2926, %v2930
      %v2937 = vunpack.c.l.b16 %v2922
      %v2938 = vunpack.c.l.b16 %v2923
      %v2939 = vunpack.c.l.b16 %v2924
      %v2940 = vunpack.c.l.b16 %v2925
      %v2941 = vpack.c.b16 %v2938, %v2937
      %v2942 = vpack.c.b16 %v2940, %v2939
      %v2946 = vsel %vm1974, %v2921, 0
      %2948 = vmatprep.subr.bf16.mxu0 0
      %2949 = vmatpush1.bf16.msra.mxu0 0
      %2950 = vmatprep.subr.bf16.mxu0 0
      %2951 = vmatpush1.bf16.msra.mxu0 0
      %2952 = vmatprep.subr.bf16.mxu0 0
      %2953 = vmatpush1.bf16.msra.mxu0 0
      %2954 = vmatprep.subr.bf16.mxu0 0
      %2955 = vmatpush1.bf16.msra.mxu0 0
      %2956 = vmatprep.subr.bf16.mxu0 0
      %2957 = vmatpush1.bf16.msra.mxu0 0
      %2958 = vmatprep.subr.bf16.mxu0 0
      %2959 = vmatpush1.bf16.msra.mxu0 0
      %2960 = vmatprep.subr.bf16.mxu0 0
      %2961 = vmatpush1.bf16.msra.mxu0 %v2942
      %2962 = vmatprep.subr.bf16.mxu0 0
      %2963 = vmatpush1.bf16.msra.mxu0 %v2941
      %2964 = vmatprep.subr.bf16.mxu0 0
      %2965 = vmatpush2.bf16.msra.mxu0 0
      %2966 = vmatprep.subr.bf16.mxu0 0
      %2967 = vmatpush2.bf16.msra.mxu0 0
      %2968 = vmatprep.subr.bf16.mxu0 0
      %2969 = vmatpush2.bf16.msra.mxu0 0
      %2970 = vmatprep.subr.bf16.mxu0 0
      %2971 = vmatpush2.bf16.msra.mxu0 0
      %2972 = vmatprep.subr.bf16.mxu0 0
      %2973 = vmatpush2.bf16.msra.mxu0 0
      %2974 = vmatprep.subr.bf16.mxu0 0
      %2975 = vmatpush2.bf16.msra.mxu0 0
      %2976 = vmatprep.subr.bf16.mxu0 0
      %2977 = vmatpush2.bf16.msra.mxu0 0
      %2978 = vmatprep.subr.bf16.mxu0 0
      %2979 = vmatpush2.bf16.msra.mxu0 0
      %2980 = vmatprep.mubr.bf16.mxu0 0
      %2981 = vmatmul.mubr.bf16.gmra.mxu0 %v2946
      %v2982 = vpop.f32.mrf.mxu0
      %v2983 = vadd.f32 %v2931, %v2982
      %v2984 = vpop.f32.mrf.mxu0
      %v2985 = vpop.f32.mrf.mxu0
      %v2986 = vpop.f32.mrf.mxu0
      %2987 = vdwg.mxu0
      %v2988 = vld [vmem:[%s959] sm:$0xf]
      %v2989 = vld [vmem:[%s959 + $0x4] sm:$0xf]
      %v2990 = vld [vmem:[%s959 + $0x8] sm:$0xf]
      %v2991 = vld [vmem:[%s959 + $0xc] sm:$0xf]
      %v2992 = vld [vmem:[%s972] sm:$0x1]
      %v2994 = vlaneseq
      %v2995 = vshrl.u32 %v2994, 7
      %v2996 = vsub.s32 0, %v2995
      %v2997 = vrot.slane %v2992, %v2996
      %v3003 = vunpack.c.l.b16 %v2988
      %v3004 = vunpack.c.l.b16 %v2989
      %v3005 = vunpack.c.l.b16 %v2990
      %v3006 = vunpack.c.l.b16 %v2991
      %v3007 = vpack.c.b16 %v3004, %v3003
      %v3008 = vpack.c.b16 %v3006, %v3005
      %3011 = vmatprep.subr.bf16.mxu0 0
      %3012 = vmatpush1.bf16.msra.mxu0 0
      %3013 = vmatprep.subr.bf16.mxu0 0
      %3014 = vmatpush1.bf16.msra.mxu0 0
      %3015 = vmatprep.subr.bf16.mxu0 0
      %3016 = vmatpush1.bf16.msra.mxu0 0
      %3017 = vmatprep.subr.bf16.mxu0 0
      %3018 = vmatpush1.bf16.msra.mxu0 0
      %3019 = vmatprep.subr.bf16.mxu0 0
      %3020 = vmatpush1.bf16.msra.mxu0 0
      %3021 = vmatprep.subr.bf16.mxu0 0
      %3022 = vmatpush1.bf16.msra.mxu0 0
      %3023 = vmatprep.subr.bf16.mxu0 0
      %3024 = vmatpush1.bf16.msra.mxu0 %v3008
      %3025 = vmatprep.subr.bf16.mxu0 0
      %3026 = vmatpush1.bf16.msra.mxu0 %v3007
      %3027 = vmatprep.subr.bf16.mxu0 0
      %3028 = vmatpush2.bf16.msra.mxu0 0
      %3029 = vmatprep.subr.bf16.mxu0 0
      %3030 = vmatpush2.bf16.msra.mxu0 0
      %3031 = vmatprep.subr.bf16.mxu0 0
      %3032 = vmatpush2.bf16.msra.mxu0 0
      %3033 = vmatprep.subr.bf16.mxu0 0
      %3034 = vmatpush2.bf16.msra.mxu0 0
      %3035 = vmatprep.subr.bf16.mxu0 0
      %3036 = vmatpush2.bf16.msra.mxu0 0
      %3037 = vmatprep.subr.bf16.mxu0 0
      %3038 = vmatpush2.bf16.msra.mxu0 0
      %3039 = vmatprep.subr.bf16.mxu0 0
      %3040 = vmatpush2.bf16.msra.mxu0 0
      %3041 = vmatprep.subr.bf16.mxu0 0
      %3042 = vmatpush2.bf16.msra.mxu0 0
      %3043 = vmatprep.mubr.bf16.mxu0 0
      %3044 = vmatmul.mubr.bf16.gmra.mxu0 %v2946
      %v3045 = vpop.f32.mrf.mxu0
      %v3046 = vadd.f32 %v2997, %v3045
      %v3047 = vpop.f32.mrf.mxu0
      %v3048 = vpop.f32.mrf.mxu0
      %v3049 = vpop.f32.mrf.mxu0
      %3050 = vdwg.mxu0
      %v3051 = vld [vmem:[%s964] sm:$0xf]
      %v3052 = vld [vmem:[%s964 + $0x4] sm:$0xf]
      %v3053 = vld [vmem:[%s964 + $0x8] sm:$0xf]
      %v3054 = vld [vmem:[%s964 + $0xc] sm:$0xf]
      %v3055 = vld [vmem:[%s976] sm:$0x1]
      %v3057 = vlaneseq
      %v3058 = vshrl.u32 %v3057, 7
      %v3059 = vsub.s32 0, %v3058
      %v3060 = vrot.slane %v3055, %v3059
      %v3066 = vunpack.c.l.b16 %v3051
      %v3067 = vunpack.c.l.b16 %v3052
      %v3068 = vunpack.c.l.b16 %v3053
      %v3069 = vunpack.c.l.b16 %v3054
      %v3070 = vpack.c.b16 %v3067, %v3066
      %v3071 = vpack.c.b16 %v3069, %v3068
      %3074 = vmatprep.subr.bf16.mxu0 0
      %3075 = vmatpush1.bf16.msra.mxu0 0
      %3076 = vmatprep.subr.bf16.mxu0 0
      %3077 = vmatpush1.bf16.msra.mxu0 0
      %3078 = vmatprep.subr.bf16.mxu0 0
      %3079 = vmatpush1.bf16.msra.mxu0 0
      %3080 = vmatprep.subr.bf16.mxu0 0
      %3081 = vmatpush1.bf16.msra.mxu0 0
      %3082 = vmatprep.subr.bf16.mxu0 0
      %3083 = vmatpush1.bf16.msra.mxu0 0
      %3084 = vmatprep.subr.bf16.mxu0 0
      %3085 = vmatpush1.bf16.msra.mxu0 0
      %3086 = vmatprep.subr.bf16.mxu0 0
      %3087 = vmatpush1.bf16.msra.mxu0 %v3071
      %3088 = vmatprep.subr.bf16.mxu0 0
      %3089 = vmatpush1.bf16.msra.mxu0 %v3070
      %3090 = vmatprep.subr.bf16.mxu0 0
      %3091 = vmatpush2.bf16.msra.mxu0 0
      %3092 = vmatprep.subr.bf16.mxu0 0
      %3093 = vmatpush2.bf16.msra.mxu0 0
      %3094 = vmatprep.subr.bf16.mxu0 0
      %3095 = vmatpush2.bf16.msra.mxu0 0
      %3096 = vmatprep.subr.bf16.mxu0 0
      %3097 = vmatpush2.bf16.msra.mxu0 0
      %3098 = vmatprep.subr.bf16.mxu0 0
      %3099 = vmatpush2.bf16.msra.mxu0 0
      %3100 = vmatprep.subr.bf16.mxu0 0
      %3101 = vmatpush2.bf16.msra.mxu0 0
      %3102 = vmatprep.subr.bf16.mxu0 0
      %3103 = vmatpush2.bf16.msra.mxu0 0
      %3104 = vmatprep.subr.bf16.mxu0 0
      %3105 = vmatpush2.bf16.msra.mxu0 0
      %3106 = vmatprep.mubr.bf16.mxu0 0
      %3107 = vmatmul.mubr.bf16.gmra.mxu0 %v2946
      %v3108 = vpop.f32.mrf.mxu0
      %v3109 = vadd.f32 %v3060, %v3108
      %v3110 = vpop.f32.mrf.mxu0
      %v3111 = vpop.f32.mrf.mxu0
      %v3112 = vpop.f32.mrf.mxu0
      %3113 = vdwg.mxu0
      %v3114 = vpack.c.bf16 %v2983, %v2983
      %v3115 = vpack.c.bf16 %v3046, %v3046
      %v3117 = vsel %vm2146, %v3114, 0
      %v3120 = vsel %vm2146, %v3115, 0
      %3122 = vmatprep.subr.bf16.mxu0 0
      %3123 = vmatpush1.bf16.xpose.msra.mxu0 0
      %3124 = vmatprep.subr.bf16.mxu0 0
      %3125 = vmatpush1.bf16.xpose.msra.mxu0 0
      %3126 = vmatprep.subr.bf16.mxu0 0
      %3127 = vmatpush1.bf16.xpose.msra.mxu0 0
      %3128 = vmatprep.subr.bf16.mxu0 0
      %3129 = vmatpush1.bf16.xpose.msra.mxu0 0
      %3130 = vmatprep.subr.bf16.mxu0 0
      %3131 = vmatpush1.bf16.xpose.msra.mxu0 0
      %3132 = vmatprep.subr.bf16.mxu0 0
      %3133 = vmatpush1.bf16.xpose.msra.mxu0 0
      %3134 = vmatprep.subr.bf16.mxu0 0
      %3135 = vmatpush1.bf16.xpose.msra.mxu0 0
      %3136 = vmatprep.subr.bf16.mxu0 0
      %3137 = vmatpush1.bf16.xpose.msra.mxu0 %v3120
      %3138 = vmatprep.subr.bf16.mxu0 0
      %3139 = vmatpush2.bf16.xpose.msra.mxu0 0
      %3140 = vmatprep.subr.bf16.mxu0 0
      %3141 = vmatpush2.bf16.xpose.msra.mxu0 0
      %3142 = vmatprep.subr.bf16.mxu0 0
      %3143 = vmatpush2.bf16.xpose.msra.mxu0 0
      %3144 = vmatprep.subr.bf16.mxu0 0
      %3145 = vmatpush2.bf16.xpose.msra.mxu0 0
      %3146 = vmatprep.subr.bf16.mxu0 0
      %3147 = vmatpush2.bf16.xpose.msra.mxu0 0
      %3148 = vmatprep.subr.bf16.mxu0 0
      %3149 = vmatpush2.bf16.xpose.msra.mxu0 0
      %3150 = vmatprep.subr.bf16.mxu0 0
      %3151 = vmatpush2.bf16.xpose.msra.mxu0 0
      %3152 = vmatprep.subr.bf16.mxu0 0
      %3153 = vmatpush2.bf16.xpose.msra.mxu0 0
      %3154 = vmatprep.mubr.bf16.mxu0 0
      %3155 = vmatmul.mubr.bf16.gmra.mxu0 %v3117
      %v3156 = vpop.f32.mrf.mxu0
      %v3157 = vadd.f32 0.0, %v3156
      %v3158 = vpop.f32.mrf.mxu0
      %v3159 = vpop.f32.mrf.mxu0
      %v3160 = vpop.f32.mrf.mxu0
      %3161 = vdwg.mxu0
      %v3162 = vmul.f32 %v3157, 0.25
      %v3163 = vsel %vm2194, %v3162, -inf
      %3164 = vmax.xlane.f32.xlu0 %v3163
      %v3165 = vpop.xlane.xlu0 %3164
      %v3166 = vsub.f32 %v3162, %v3165
      %v3167 = vmul.f32 %v3166, 1.442695
      %v3168 = vpow.pop %v3167
      %v3169 = vsel %vm2194, %v3168, 0.0
      %3170 = vadd.xlane.f32.xlu0 %v3169
      %v3171 = vpop.xlane.xlu0 %3170
      %v3172 = vrcp.pop %v3171
      %v3173 = vmul.f32 %v3168, %v3172
      %v3174 = vpack.c.bf16 %v3173, %v3173
      %v3175 = vpack.c.bf16 %v3109, %v3109
      %v3177 = vsel %vm2208, %v3174, 0
      %v3180 = vand.u32 %v3175, %v2215
      %3182 = vmatprep.subr.bf16.mxu0 0
      %3183 = vmatpush1.bf16.msra.mxu0 0
      %3184 = vmatprep.subr.bf16.mxu0 0
      %3185 = vmatpush1.bf16.msra.mxu0 0
      %3186 = vmatprep.subr.bf16.mxu0 0
      %3187 = vmatpush1.bf16.msra.mxu0 0
      %3188 = vmatprep.subr.bf16.mxu0 0
      %3189 = vmatpush1.bf16.msra.mxu0 0
      %3190 = vmatprep.subr.bf16.mxu0 0
      %3191 = vmatpush1.bf16.msra.mxu0 0
      %3192 = vmatprep.subr.bf16.mxu0 0
      %3193 = vmatpush1.bf16.msra.mxu0 0
      %3194 = vmatprep.subr.bf16.mxu0 0
      %3195 = vmatpush1.bf16.msra.mxu0 0
      %3196 = vmatprep.subr.bf16.mxu0 0
      %3197 = vmatpush1.bf16.msra.mxu0 %v3180
      %3198 = vmatprep.subr.bf16.mxu0 0
      %3199 = vmatpush2.bf16.msra.mxu0 0
      %3200 = vmatprep.subr.bf16.mxu0 0
      %3201 = vmatpush2.bf16.msra.mxu0 0
      %3202 = vmatprep.subr.bf16.mxu0 0
      %3203 = vmatpush2.bf16.msra.mxu0 0
      %3204 = vmatprep.subr.bf16.mxu0 0
      %3205 = vmatpush2.bf16.msra.mxu0 0
      %3206 = vmatprep.subr.bf16.mxu0 0
      %3207 = vmatpush2.bf16.msra.mxu0 0
      %3208 = vmatprep.subr.bf16.mxu0 0
      %3209 = vmatpush2.bf16.msra.mxu0 0
      %3210 = vmatprep.subr.bf16.mxu0 0
      %3211 = vmatpush2.bf16.msra.mxu0 0
      %3212 = vmatprep.subr.bf16.mxu0 0
      %3213 = vmatpush2.bf16.msra.mxu0 0
      %3214 = vmatprep.mubr.bf16.mxu0 0
      %3215 = vmatmul.mubr.bf16.gmra.mxu0 %v3177
      %v3216 = vpop.f32.mrf.mxu0
      %v3217 = vadd.f32 0.0, %v3216
      %v3218 = vpop.f32.mrf.mxu0
      %v3219 = vpop.f32.mrf.mxu0
      %v3220 = vpop.f32.mrf.mxu0
      %3221 = vdwg.mxu0
      %v3222 = vpack.c.bf16 %v3217, %v3217
      %v3223 = vld [vmem:[%s981] sm:$0xf]
      %v3224 = vld [vmem:[%s981 + $0x4] sm:$0xf]
      %v3225 = vld [vmem:[%s2262] sm:$0xf]
      %v3226 = vld [vmem:[%s2262 + $0x4] sm:$0xf]
      %v3227 = vld [vmem:[%s2262 + $0x8] sm:$0xf]
      %v3228 = vld [vmem:[%s2262 + $0xc] sm:$0xf]
      %v3229 = vld [vmem:[%s2267] sm:$0x1]
      %v3231 = vlaneseq
      %v3232 = vshrl.u32 %v3231, 7
      %v3233 = vsub.s32 0, %v3232
      %v3234 = vrot.slane %v3229, %v3233
      %v3240 = vunpack.c.l.b16 %v3225
      %v3241 = vunpack.c.l.b16 %v3226
      %v3242 = vunpack.c.l.b16 %v3227
      %v3243 = vunpack.c.l.b16 %v3228
      %v3244 = vpack.c.b16 %v3241, %v3240
      %v3245 = vpack.c.b16 %v3243, %v3242
      %3248 = vmatprep.subr.bf16.mxu0 0
      %3249 = vmatpush1.bf16.msra.mxu0 0
      %3250 = vmatprep.subr.bf16.mxu0 0
      %3251 = vmatpush1.bf16.msra.mxu0 0
      %3252 = vmatprep.subr.bf16.mxu0 0
      %3253 = vmatpush1.bf16.msra.mxu0 0
      %3254 = vmatprep.subr.bf16.mxu0 0
      %3255 = vmatpush1.bf16.msra.mxu0 0
      %3256 = vmatprep.subr.bf16.mxu0 0
      %3257 = vmatpush1.bf16.msra.mxu0 0
      %3258 = vmatprep.subr.bf16.mxu0 0
      %3259 = vmatpush1.bf16.msra.mxu0 0
      %3260 = vmatprep.subr.bf16.mxu0 0
      %3261 = vmatpush1.bf16.msra.mxu0 %v3245
      %3262 = vmatprep.subr.bf16.mxu0 0
      %3263 = vmatpush1.bf16.msra.mxu0 %v3244
      %3264 = vmatprep.subr.bf16.mxu0 0
      %3265 = vmatpush2.bf16.msra.mxu0 0
      %3266 = vmatprep.subr.bf16.mxu0 0
      %3267 = vmatpush2.bf16.msra.mxu0 0
      %3268 = vmatprep.subr.bf16.mxu0 0
      %3269 = vmatpush2.bf16.msra.mxu0 0
      %3270 = vmatprep.subr.bf16.mxu0 0
      %3271 = vmatpush2.bf16.msra.mxu0 0
      %3272 = vmatprep.subr.bf16.mxu0 0
      %3273 = vmatpush2.bf16.msra.mxu0 0
      %3274 = vmatprep.subr.bf16.mxu0 0
      %3275 = vmatpush2.bf16.msra.mxu0 0
      %3276 = vmatprep.subr.bf16.mxu0 0
      %3277 = vmatpush2.bf16.msra.mxu0 0
      %3278 = vmatprep.subr.bf16.mxu0 0
      %3279 = vmatpush2.bf16.msra.mxu0 0
      %3280 = vmatprep.mubr.bf16.mxu0 0
      %3281 = vmatmul.mubr.bf16.gmra.mxu0 %v2946
      %v3282 = vpop.f32.mrf.mxu0
      %v3283 = vadd.f32 %v3234, %v3282
      %v3284 = vpop.f32.mrf.mxu0
      %v3285 = vpop.f32.mrf.mxu0
      %v3286 = vpop.f32.mrf.mxu0
      %3287 = vdwg.mxu0
      %v3288 = vld [vmem:[%s2327] sm:$0xf]
      %v3289 = vld [vmem:[%s2327 + $0x4] sm:$0xf]
      %v3290 = vld [vmem:[%s2327 + $0x8] sm:$0xf]
      %v3291 = vld [vmem:[%s2327 + $0xc] sm:$0xf]
      %v3292 = vld [vmem:[%s2332] sm:$0x1]
      %v3294 = vlaneseq
      %v3295 = vshrl.u32 %v3294, 7
      %v3296 = vsub.s32 0, %v3295
      %v3297 = vrot.slane %v3292, %v3296
      %v3303 = vunpack.c.l.b16 %v3288
      %v3304 = vunpack.c.l.b16 %v3289
      %v3305 = vunpack.c.l.b16 %v3290
      %v3306 = vunpack.c.l.b16 %v3291
      %v3307 = vpack.c.b16 %v3304, %v3303
      %v3308 = vpack.c.b16 %v3306, %v3305
      %3311 = vmatprep.subr.bf16.mxu0 0
      %3312 = vmatpush1.bf16.msra.mxu0 0
      %3313 = vmatprep.subr.bf16.mxu0 0
      %3314 = vmatpush1.bf16.msra.mxu0 0
      %3315 = vmatprep.subr.bf16.mxu0 0
      %3316 = vmatpush1.bf16.msra.mxu0 0
      %3317 = vmatprep.subr.bf16.mxu0 0
      %3318 = vmatpush1.bf16.msra.mxu0 0
      %3319 = vmatprep.subr.bf16.mxu0 0
      %3320 = vmatpush1.bf16.msra.mxu0 0
      %3321 = vmatprep.subr.bf16.mxu0 0
      %3322 = vmatpush1.bf16.msra.mxu0 0
      %3323 = vmatprep.subr.bf16.mxu0 0
      %3324 = vmatpush1.bf16.msra.mxu0 %v3308
      %3325 = vmatprep.subr.bf16.mxu0 0
      %3326 = vmatpush1.bf16.msra.mxu0 %v3307
      %3327 = vmatprep.subr.bf16.mxu0 0
      %3328 = vmatpush2.bf16.msra.mxu0 0
      %3329 = vmatprep.subr.bf16.mxu0 0
      %3330 = vmatpush2.bf16.msra.mxu0 0
      %3331 = vmatprep.subr.bf16.mxu0 0
      %3332 = vmatpush2.bf16.msra.mxu0 0
      %3333 = vmatprep.subr.bf16.mxu0 0
      %3334 = vmatpush2.bf16.msra.mxu0 0
      %3335 = vmatprep.subr.bf16.mxu0 0
      %3336 = vmatpush2.bf16.msra.mxu0 0
      %3337 = vmatprep.subr.bf16.mxu0 0
      %3338 = vmatpush2.bf16.msra.mxu0 0
      %3339 = vmatprep.subr.bf16.mxu0 0
      %3340 = vmatpush2.bf16.msra.mxu0 0
      %3341 = vmatprep.subr.bf16.mxu0 0
      %3342 = vmatpush2.bf16.msra.mxu0 0
      %3343 = vmatprep.mubr.bf16.mxu0 0
      %3344 = vmatmul.mubr.bf16.gmra.mxu0 %v2946
      %v3345 = vpop.f32.mrf.mxu0
      %v3346 = vadd.f32 %v3297, %v3345
      %v3347 = vpop.f32.mrf.mxu0
      %v3348 = vpop.f32.mrf.mxu0
      %v3349 = vpop.f32.mrf.mxu0
      %3350 = vdwg.mxu0
      %v3351 = vld [vmem:[%s2392] sm:$0xf]
      %v3352 = vld [vmem:[%s2392 + $0x4] sm:$0xf]
      %v3353 = vld [vmem:[%s2392 + $0x8] sm:$0xf]
      %v3354 = vld [vmem:[%s2392 + $0xc] sm:$0xf]
      %v3355 = vld [vmem:[%s2397] sm:$0x1]
      %v3357 = vlaneseq
      %v3358 = vshrl.u32 %v3357, 7
      %v3359 = vsub.s32 0, %v3358
      %v3360 = vrot.slane %v3355, %v3359
      %v3366 = vunpack.c.l.b16 %v3351
      %v3367 = vunpack.c.l.b16 %v3352
      %v3368 = vunpack.c.l.b16 %v3353
      %v3369 = vunpack.c.l.b16 %v3354
      %v3370 = vpack.c.b16 %v3367, %v3366
      %v3371 = vpack.c.b16 %v3369, %v3368
      %3374 = vmatprep.subr.bf16.mxu0 0
      %3375 = vmatpush1.bf16.msra.mxu0 0
      %3376 = vmatprep.subr.bf16.mxu0 0
      %3377 = vmatpush1.bf16.msra.mxu0 0
      %3378 = vmatprep.subr.bf16.mxu0 0
      %3379 = vmatpush1.bf16.msra.mxu0 0
      %3380 = vmatprep.subr.bf16.mxu0 0
      %3381 = vmatpush1.bf16.msra.mxu0 0
      %3382 = vmatprep.subr.bf16.mxu0 0
      %3383 = vmatpush1.bf16.msra.mxu0 0
      %3384 = vmatprep.subr.bf16.mxu0 0
      %3385 = vmatpush1.bf16.msra.mxu0 0
      %3386 = vmatprep.subr.bf16.mxu0 0
      %3387 = vmatpush1.bf16.msra.mxu0 %v3371
      %3388 = vmatprep.subr.bf16.mxu0 0
      %3389 = vmatpush1.bf16.msra.mxu0 %v3370
      %3390 = vmatprep.subr.bf16.mxu0 0
      %3391 = vmatpush2.bf16.msra.mxu0 0
      %3392 = vmatprep.subr.bf16.mxu0 0
      %3393 = vmatpush2.bf16.msra.mxu0 0
      %3394 = vmatprep.subr.bf16.mxu0 0
      %3395 = vmatpush2.bf16.msra.mxu0 0
      %3396 = vmatprep.subr.bf16.mxu0 0
      %3397 = vmatpush2.bf16.msra.mxu0 0
      %3398 = vmatprep.subr.bf16.mxu0 0
      %3399 = vmatpush2.bf16.msra.mxu0 0
      %3400 = vmatprep.subr.bf16.mxu0 0
      %3401 = vmatpush2.bf16.msra.mxu0 0
      %3402 = vmatprep.subr.bf16.mxu0 0
      %3403 = vmatpush2.bf16.msra.mxu0 0
      %3404 = vmatprep.subr.bf16.mxu0 0
      %3405 = vmatpush2.bf16.msra.mxu0 0
      %3406 = vmatprep.mubr.bf16.mxu0 0
      %3407 = vmatmul.mubr.bf16.gmra.mxu0 %v2946
      %v3408 = vpop.f32.mrf.mxu0
      %v3409 = vadd.f32 %v3360, %v3408
      %v3410 = vpop.f32.mrf.mxu0
      %v3411 = vpop.f32.mrf.mxu0
      %v3412 = vpop.f32.mrf.mxu0
      %3413 = vdwg.mxu0
      %v3414 = vpack.c.bf16 %v3283, %v3283
      %v3415 = vpack.c.bf16 %v3346, %v3346
      %v3417 = vsel %vm2146, %v3414, 0
      %v3420 = vsel %vm2146, %v3415, 0
      %3422 = vmatprep.subr.bf16.mxu0 0
      %3423 = vmatpush1.bf16.xpose.msra.mxu0 0
      %3424 = vmatprep.subr.bf16.mxu0 0
      %3425 = vmatpush1.bf16.xpose.msra.mxu0 0
      %3426 = vmatprep.subr.bf16.mxu0 0
      %3427 = vmatpush1.bf16.xpose.msra.mxu0 0
      %3428 = vmatprep.subr.bf16.mxu0 0
      %3429 = vmatpush1.bf16.xpose.msra.mxu0 0
      %3430 = vmatprep.subr.bf16.mxu0 0
      %3431 = vmatpush1.bf16.xpose.msra.mxu0 0
      %3432 = vmatprep.subr.bf16.mxu0 0
      %3433 = vmatpush1.bf16.xpose.msra.mxu0 0
      %3434 = vmatprep.subr.bf16.mxu0 0
      %3435 = vmatpush1.bf16.xpose.msra.mxu0 0
      %3436 = vmatprep.subr.bf16.mxu0 0
      %3437 = vmatpush1.bf16.xpose.msra.mxu0 %v3420
      %3438 = vmatprep.subr.bf16.mxu0 0
      %3439 = vmatpush2.bf16.xpose.msra.mxu0 0
      %3440 = vmatprep.subr.bf16.mxu0 0
      %3441 = vmatpush2.bf16.xpose.msra.mxu0 0
      %3442 = vmatprep.subr.bf16.mxu0 0
      %3443 = vmatpush2.bf16.xpose.msra.mxu0 0
      %3444 = vmatprep.subr.bf16.mxu0 0
      %3445 = vmatpush2.bf16.xpose.msra.mxu0 0
      %3446 = vmatprep.subr.bf16.mxu0 0
      %3447 = vmatpush2.bf16.xpose.msra.mxu0 0
      %3448 = vmatprep.subr.bf16.mxu0 0
      %3449 = vmatpush2.bf16.xpose.msra.mxu0 0
      %3450 = vmatprep.subr.bf16.mxu0 0
      %3451 = vmatpush2.bf16.xpose.msra.mxu0 0
      %3452 = vmatprep.subr.bf16.mxu0 0
      %3453 = vmatpush2.bf16.xpose.msra.mxu0 0
      %3454 = vmatprep.mubr.bf16.mxu0 0
      %3455 = vmatmul.mubr.bf16.gmra.mxu0 %v3417
      %v3456 = vpop.f32.mrf.mxu0
      %v3457 = vadd.f32 0.0, %v3456
      %v3458 = vpop.f32.mrf.mxu0
      %v3459 = vpop.f32.mrf.mxu0
      %v3460 = vpop.f32.mrf.mxu0
      %3461 = vdwg.mxu0
      %v3462 = vmul.f32 %v3457, 0.25
      %v3463 = vsel %vm2194, %v3462, -inf
      %3464 = vmax.xlane.f32.xlu0 %v3463
      %v3465 = vpop.xlane.xlu0 %3464
      %v3466 = vsub.f32 %v3462, %v3465
      %v3467 = vmul.f32 %v3466, 1.442695
      %v3468 = vpow.pop %v3467
      %v3469 = vsel %vm2194, %v3468, 0.0
      %3470 = vadd.xlane.f32.xlu0 %v3469
      %v3471 = vpop.xlane.xlu0 %3470
      %v3472 = vrcp.pop %v3471
      %v3473 = vmul.f32 %v3468, %v3472
      %v3474 = vpack.c.bf16 %v3473, %v3473
      %v3475 = vpack.c.bf16 %v3409, %v3409
      %v3477 = vsel %vm2208, %v3474, 0
      %v3480 = vand.u32 %v3475, %v2215
      %3482 = vmatprep.subr.bf16.mxu0 0
      %3483 = vmatpush1.bf16.msra.mxu0 0
      %3484 = vmatprep.subr.bf16.mxu0 0
      %3485 = vmatpush1.bf16.msra.mxu0 0
      %3486 = vmatprep.subr.bf16.mxu0 0
      %3487 = vmatpush1.bf16.msra.mxu0 0
      %3488 = vmatprep.subr.bf16.mxu0 0
      %3489 = vmatpush1.bf16.msra.mxu0 0
      %3490 = vmatprep.subr.bf16.mxu0 0
      %3491 = vmatpush1.bf16.msra.mxu0 0
      %3492 = vmatprep.subr.bf16.mxu0 0
      %3493 = vmatpush1.bf16.msra.mxu0 0
      %3494 = vmatprep.subr.bf16.mxu0 0
      %3495 = vmatpush1.bf16.msra.mxu0 0
      %3496 = vmatprep.subr.bf16.mxu0 0
      %3497 = vmatpush1.bf16.msra.mxu0 %v3480
      %3498 = vmatprep.subr.bf16.mxu0 0
      %3499 = vmatpush2.bf16.msra.mxu0 0
      %3500 = vmatprep.subr.bf16.mxu0 0
      %3501 = vmatpush2.bf16.msra.mxu0 0
      %3502 = vmatprep.subr.bf16.mxu0 0
      %3503 = vmatpush2.bf16.msra.mxu0 0
      %3504 = vmatprep.subr.bf16.mxu0 0
      %3505 = vmatpush2.bf16.msra.mxu0 0
      %3506 = vmatprep.subr.bf16.mxu0 0
      %3507 = vmatpush2.bf16.msra.mxu0 0
      %3508 = vmatprep.subr.bf16.mxu0 0
      %3509 = vmatpush2.bf16.msra.mxu0 0
      %3510 = vmatprep.subr.bf16.mxu0 0
      %3511 = vmatpush2.bf16.msra.mxu0 0
      %3512 = vmatprep.subr.bf16.mxu0 0
      %3513 = vmatpush2.bf16.msra.mxu0 0
      %3514 = vmatprep.mubr.bf16.mxu0 0
      %3515 = vmatmul.mubr.bf16.gmra.mxu0 %v3477
      %v3516 = vpop.f32.mrf.mxu0
      %v3517 = vadd.f32 0.0, %v3516
      %v3518 = vpop.f32.mrf.mxu0
      %v3519 = vpop.f32.mrf.mxu0
      %v3520 = vpop.f32.mrf.mxu0
      %3521 = vdwg.mxu0
      %v3522 = vpack.c.bf16 %v3517, %v3517
      %v3523 = vld [vmem:[%s2566] sm:$0xf]
      %v3524 = vld [vmem:[%s2566 + $0x4] sm:$0xf]
      %v3527 = vunpack.c.l.b16 %v3523
      %v3528 = vunpack.c.l.b16 %v3524
      %v3529 = vpack.c.b16 %v3528, %v3527
      %v3532 = vsel %vm2146, %v3522, 0
      %3534 = vmatprep.subr.bf16.mxu0 0
      %3535 = vmatpush1.bf16.msra.mxu0 0
      %3536 = vmatprep.subr.bf16.mxu0 0
      %3537 = vmatpush1.bf16.msra.mxu0 0
      %3538 = vmatprep.subr.bf16.mxu0 0
      %3539 = vmatpush1.bf16.msra.mxu0 0
      %3540 = vmatprep.subr.bf16.mxu0 0
      %3541 = vmatpush1.bf16.msra.mxu0 0
      %3542 = vmatprep.subr.bf16.mxu0 0
      %3543 = vmatpush1.bf16.msra.mxu0 0
      %3544 = vmatprep.subr.bf16.mxu0 0
      %3545 = vmatpush1.bf16.msra.mxu0 0
      %3546 = vmatprep.subr.bf16.mxu0 0
      %3547 = vmatpush1.bf16.msra.mxu0 0
      %3548 = vmatprep.subr.bf16.mxu0 0
      %3549 = vmatpush1.bf16.msra.mxu0 %v3529
      %3550 = vmatprep.subr.bf16.mxu0 0
      %3551 = vmatpush2.bf16.msra.mxu0 0
      %3552 = vmatprep.subr.bf16.mxu0 0
      %3553 = vmatpush2.bf16.msra.mxu0 0
      %3554 = vmatprep.subr.bf16.mxu0 0
      %3555 = vmatpush2.bf16.msra.mxu0 0
      %3556 = vmatprep.subr.bf16.mxu0 0
      %3557 = vmatpush2.bf16.msra.mxu0 0
      %3558 = vmatprep.subr.bf16.mxu0 0
      %3559 = vmatpush2.bf16.msra.mxu0 0
      %3560 = vmatprep.subr.bf16.mxu0 0
      %3561 = vmatpush2.bf16.msra.mxu0 0
      %3562 = vmatprep.subr.bf16.mxu0 0
      %3563 = vmatpush2.bf16.msra.mxu0 0
      %3564 = vmatprep.subr.bf16.mxu0 0
      %3565 = vmatpush2.bf16.msra.mxu0 0
      %3566 = vmatprep.mubr.bf16.mxu0 0
      %3567 = vmatmul.mubr.bf16.gmra.mxu0 %v3532
      %v3568 = vpop.f32.mrf.mxu0
      %v3569 = vadd.f32 0.0, %v3568
      %v3570 = vpop.f32.mrf.mxu0
      %v3571 = vpop.f32.mrf.mxu0
      %v3572 = vpop.f32.mrf.mxu0
      %3573 = vdwg.mxu0
      %v3576 = vunpack.c.l.b16 %v3223
      %v3577 = vunpack.c.l.b16 %v3224
      %v3578 = vpack.c.b16 %v3577, %v3576
      %v3581 = vsel %vm2146, %v3222, 0
      %3583 = vmatprep.subr.bf16.mxu0 0
      %3584 = vmatpush1.bf16.msra.mxu0 0
      %3585 = vmatprep.subr.bf16.mxu0 0
      %3586 = vmatpush1.bf16.msra.mxu0 0
      %3587 = vmatprep.subr.bf16.mxu0 0
      %3588 = vmatpush1.bf16.msra.mxu0 0
      %3589 = vmatprep.subr.bf16.mxu0 0
      %3590 = vmatpush1.bf16.msra.mxu0 0
      %3591 = vmatprep.subr.bf16.mxu0 0
      %3592 = vmatpush1.bf16.msra.mxu0 0
      %3593 = vmatprep.subr.bf16.mxu0 0
      %3594 = vmatpush1.bf16.msra.mxu0 0
      %3595 = vmatprep.subr.bf16.mxu0 0
      %3596 = vmatpush1.bf16.msra.mxu0 0
      %3597 = vmatprep.subr.bf16.mxu0 0
      %3598 = vmatpush1.bf16.msra.mxu0 %v3578
      %3599 = vmatprep.subr.bf16.mxu0 0
      %3600 = vmatpush2.bf16.msra.mxu0 0
      %3601 = vmatprep.subr.bf16.mxu0 0
      %3602 = vmatpush2.bf16.msra.mxu0 0
      %3603 = vmatprep.subr.bf16.mxu0 0
      %3604 = vmatpush2.bf16.msra.mxu0 0
      %3605 = vmatprep.subr.bf16.mxu0 0
      %3606 = vmatpush2.bf16.msra.mxu0 0
      %3607 = vmatprep.subr.bf16.mxu0 0
      %3608 = vmatpush2.bf16.msra.mxu0 0
      %3609 = vmatprep.subr.bf16.mxu0 0
      %3610 = vmatpush2.bf16.msra.mxu0 0
      %3611 = vmatprep.subr.bf16.mxu0 0
      %3612 = vmatpush2.bf16.msra.mxu0 0
      %3613 = vmatprep.subr.bf16.mxu0 0
      %3614 = vmatpush2.bf16.msra.mxu0 0
      %3615 = vmatprep.mubr.bf16.mxu0 0
      %3616 = vmatmul.mubr.bf16.gmra.mxu0 %v3581
      %v3617 = vpop.f32.mrf.mxu0
      %v3618 = vadd.f32 %v3569, %v3617
      %v3619 = vpop.f32.mrf.mxu0
      %v3620 = vpop.f32.mrf.mxu0
      %v3621 = vpop.f32.mrf.mxu0
      %3622 = vdwg.mxu0
      %v3623 = vadd.f32 %v3618, %v2671
      %v3624 = vmul.f32 %v2678, %v3623
      %v3625 = vadd.f32 %v2905, %v3624
      %v3626 = vsel %vm1921, %v3625, 0.0
      %3627 = vadd.xlane.f32.xlu0 %v3626
      %v3628 = vpop.xlane.xlu0 %3627
      %v3629 = vmul.f32 %v3628, %v1925
      %v3630 = vsub.f32 %v3625, %v3629
      %v3631 = vmul.f32 %v3630, %v3630
      %v3632 = vsel %vm1921, %v3631, 0.0
      %3633 = vadd.xlane.f32.xlu0 %v3632
      %v3634 = vpop.xlane.xlu0 %3633
      %v3635 = vmul.f32 %v3634, %v1925
      %v3636 = vadd.f32 %v3635, 1e-06
      %v3637 = vrsqrt.pop %v3636
      %v3638 = vmul.f32 %v3630, %v3637
      %v3639 = vmul.f32 %v3638, %v2699
      %v3640 = vadd.f32 %v3639, %v2706
      %v3641 = vpack.c.bf16 %v3640, %v3640
      %v3642 = vld [vmem:[%s998] sm:$0xf]
      %v3643 = vld [vmem:[%s998 + $0x4] sm:$0xf]
      %v3644 = vld [vmem:[%s998 + $0x8] sm:$0xf]
      %v3645 = vld [vmem:[%s998 + $0xc] sm:$0xf]
      %v3650 = vunpack.c.l.b16 %v3642
      %v3651 = vunpack.c.l.b16 %v3643
      %v3652 = vunpack.c.l.b16 %v3644
      %v3653 = vunpack.c.l.b16 %v3645
      %v3654 = vpack.c.b16 %v3651, %v3650
      %v3655 = vpack.c.b16 %v3653, %v3652
      %v3659 = vsel %vm1974, %v3641, 0
      %3661 = vmatprep.subr.bf16.mxu0 0
      %3662 = vmatpush1.bf16.msra.mxu0 0
      %3663 = vmatprep.subr.bf16.mxu0 0
      %3664 = vmatpush1.bf16.msra.mxu0 0
      %3665 = vmatprep.subr.bf16.mxu0 0
      %3666 = vmatpush1.bf16.msra.mxu0 0
      %3667 = vmatprep.subr.bf16.mxu0 0
      %3668 = vmatpush1.bf16.msra.mxu0 0
      %3669 = vmatprep.subr.bf16.mxu0 0
      %3670 = vmatpush1.bf16.msra.mxu0 0
      %3671 = vmatprep.subr.bf16.mxu0 0
      %3672 = vmatpush1.bf16.msra.mxu0 0
      %3673 = vmatprep.subr.bf16.mxu0 0
      %3674 = vmatpush1.bf16.msra.mxu0 %v3655
      %3675 = vmatprep.subr.bf16.mxu0 0
      %3676 = vmatpush1.bf16.msra.mxu0 %v3654
      %3677 = vmatprep.subr.bf16.mxu0 0
      %3678 = vmatpush2.bf16.msra.mxu0 0
      %3679 = vmatprep.subr.bf16.mxu0 0
      %3680 = vmatpush2.bf16.msra.mxu0 0
      %3681 = vmatprep.subr.bf16.mxu0 0
      %3682 = vmatpush2.bf16.msra.mxu0 0
      %3683 = vmatprep.subr.bf16.mxu0 0
      %3684 = vmatpush2.bf16.msra.mxu0 0
      %3685 = vmatprep.subr.bf16.mxu0 0
      %3686 = vmatpush2.bf16.msra.mxu0 0
      %3687 = vmatprep.subr.bf16.mxu0 0
      %3688 = vmatpush2.bf16.msra.mxu0 0
      %3689 = vmatprep.subr.bf16.mxu0 0
      %3690 = vmatpush2.bf16.msra.mxu0 0
      %3691 = vmatprep.subr.bf16.mxu0 0
      %3692 = vmatpush2.bf16.msra.mxu0 0
      %3693 = vmatprep.mubr.bf16.mxu0 0
      %3694 = vmatmul.mubr.bf16.gmra.mxu0 %v3659
      %v3695 = vpop.f32.mrf.mxu0
      %v3696 = vadd.f32 %v2718, %v3695
      %v3697 = vpop.f32.mrf.mxu0
      %v3698 = vpop.f32.mrf.mxu0
      %v3699 = vpop.f32.mrf.mxu0
      %3700 = vdwg.mxu0
      %v3701 = vmul.f32 %v3696, %v3696
      %v3702 = vmul.f32 %v3696, %v3701
      %v3703 = vmul.f32 %v3702, 0.044715
      %v3704 = vadd.f32 %v3696, %v3703
      %v3705 = vmul.f32 %v3704, 0.7978846
      %v3706 = vtanh.pop %v3705
      %v3707 = vadd.f32 %v3706, 1.0
      %v3708 = vmul.f32 %v3707, 0.5
      %v3709 = vmul.f32 %v3696, %v3708
      %v3710 = vpack.c.bf16 %v3709, %v3709
      %v3711 = vld [vmem:[%s1006] sm:$0xf]
      %v3712 = vld [vmem:[%s1006 + $0x4] sm:$0xf]
      %v3713 = vld [vmem:[%s1006 + $0x8] sm:$0xf]
      %v3714 = vld [vmem:[%s1006 + $0xc] sm:$0xf]
      %v3715 = vld [vmem:[%s1006 + $0x10] sm:$0xf]
      %v3716 = vld [vmem:[%s1006 + $0x14] sm:$0xf]
      %v3717 = vld [vmem:[%s1006 + $0x18] sm:$0xf]
      %v3718 = vld [vmem:[%s1006 + $0x1c] sm:$0xf]
      %v3719 = vld [vmem:[%s1006 + $0x20] sm:$0xf]
      %v3720 = vld [vmem:[%s1006 + $0x24] sm:$0xf]
      %v3721 = vld [vmem:[%s1006 + $0x28] sm:$0xf]
      %v3722 = vld [vmem:[%s1006 + $0x2c] sm:$0xf]
      %v3723 = vld [vmem:[%s1006 + $0x30] sm:$0xf]
      %v3724 = vld [vmem:[%s1006 + $0x34] sm:$0xf]
      %v3725 = vld [vmem:[%s1006 + $0x38] sm:$0xf]
      %v3726 = vld [vmem:[%s1006 + $0x3c] sm:$0xf]
      %v3743 = vunpack.c.l.b16 %v3711
      %v3744 = vunpack.c.l.b16 %v3712
      %v3745 = vunpack.c.l.b16 %v3713
      %v3746 = vunpack.c.l.b16 %v3714
      %v3747 = vunpack.c.l.b16 %v3715
      %v3748 = vunpack.c.l.b16 %v3716
      %v3749 = vunpack.c.l.b16 %v3717
      %v3750 = vunpack.c.l.b16 %v3718
      %v3751 = vunpack.c.l.b16 %v3719
      %v3752 = vunpack.c.l.b16 %v3720
      %v3753 = vunpack.c.l.b16 %v3721
      %v3754 = vunpack.c.l.b16 %v3722
      %v3755 = vunpack.c.l.b16 %v3723
      %v3756 = vunpack.c.l.b16 %v3724
      %v3757 = vunpack.c.l.b16 %v3725
      %v3758 = vunpack.c.l.b16 %v3726
      %v3759 = vpack.c.b16 %v3744, %v3743
      %v3760 = vpack.c.b16 %v3746, %v3745
      %v3761 = vpack.c.b16 %v3748, %v3747
      %v3762 = vpack.c.b16 %v3750, %v3749
      %v3763 = vpack.c.b16 %v3752, %v3751
      %v3764 = vpack.c.b16 %v3754, %v3753
      %v3765 = vpack.c.b16 %v3756, %v3755
      %v3766 = vpack.c.b16 %v3758, %v3757
      %3775 = vmatprep.subr.bf16.mxu0 0
      %3776 = vmatpush1.bf16.msra.mxu0 %v3766
      %3777 = vmatprep.subr.bf16.mxu0 0
      %3778 = vmatpush1.bf16.msra.mxu0 %v3765
      %3779 = vmatprep.subr.bf16.mxu0 0
      %3780 = vmatpush1.bf16.msra.mxu0 %v3764
      %3781 = vmatprep.subr.bf16.mxu0 0
      %3782 = vmatpush1.bf16.msra.mxu0 %v3763
      %3783 = vmatprep.subr.bf16.mxu0 0
      %3784 = vmatpush1.bf16.msra.mxu0 %v3762
      %3785 = vmatprep.subr.bf16.mxu0 0
      %3786 = vmatpush1.bf16.msra.mxu0 %v3761
      %3787 = vmatprep.subr.bf16.mxu0 0
      %3788 = vmatpush1.bf16.msra.mxu0 %v3760
      %3789 = vmatprep.subr.bf16.mxu0 0
      %3790 = vmatpush1.bf16.msra.mxu0 %v3759
      %3791 = vmatprep.subr.bf16.mxu0 0
      %3792 = vmatpush2.bf16.msra.mxu0 0
      %3793 = vmatprep.subr.bf16.mxu0 0
      %3794 = vmatpush2.bf16.msra.mxu0 0
      %3795 = vmatprep.subr.bf16.mxu0 0
      %3796 = vmatpush2.bf16.msra.mxu0 0
      %3797 = vmatprep.subr.bf16.mxu0 0
      %3798 = vmatpush2.bf16.msra.mxu0 0
      %3799 = vmatprep.subr.bf16.mxu0 0
      %3800 = vmatpush2.bf16.msra.mxu0 0
      %3801 = vmatprep.subr.bf16.mxu0 0
      %3802 = vmatpush2.bf16.msra.mxu0 0
      %3803 = vmatprep.subr.bf16.mxu0 0
      %3804 = vmatpush2.bf16.msra.mxu0 0
      %3805 = vmatprep.subr.bf16.mxu0 0
      %3806 = vmatpush2.bf16.msra.mxu0 0
      %3807 = vmatprep.mubr.bf16.mxu0 0
      %3808 = vmatmul.mubr.bf16.gmra.mxu0 %v3710
      %v3809 = vpop.f32.mrf.mxu0
      %v3810 = vadd.f32 %v2805, %v3809
      %v3811 = vpop.f32.mrf.mxu0
      %v3812 = vpop.f32.mrf.mxu0
      %v3813 = vpop.f32.mrf.mxu0
      %3814 = vdwg.mxu0
      %v3815 = vmul.f32 %v2899, %v3810
      %v3816 = vadd.f32 %v3625, %v3815
      %3817 = vst.msk [vmem:[%s2904] sm:$0x1f] %vm1921, %v3816
      %p3818 = scmp.eq.s32.totalorder %s39, 1
      // Predicated region
      $region117: #{semantic_loss.1} parent=111 // pred_check
        %p3819 = pneg %p3818
      $region118: #{semantic_loss.1} parent=111 // pred_check_branch
        %3821 = sbr.rel (%p3819) target = $region120
      $region119: #{semantic_loss.1} parent=111 // pred_region
        %v3822 = vld [vmem:[#allocation2] sm:$0x1f]
        %v3823 = vld [vmem:[%s2904] sm:$0x1f]
        %v3824 = vld [vmem:[%s21] sm:$0x1]
        %v3825 = vld [vmem:[%s22] sm:$0x1]
        %vm3826 = vcmask 253952
        %v3827 = vsel %vm3826, %v3822, 0.0
        %3828 = vadd.xlane.f32.xlu0 %v3827
        %v3829 = vpop.xlane.xlu0 %3828
        %v3830 = vmul.f32 %v3829, %v1925
        %v3831 = vsub.f32 %v3822, %v3830
        %v3832 = vmul.f32 %v3831, %v3831
        %v3833 = vsel %vm3826, %v3832, 0.0
        %3834 = vadd.xlane.f32.xlu0 %v3833
        %v3835 = vpop.xlane.xlu0 %3834
        %v3836 = vmul.f32 %v3835, %v1925
        %v3837 = vadd.f32 %v3836, 1e-06
        %v3838 = vrsqrt.pop %v3837
        %v3839 = vmul.f32 %v3831, %v3838
        %v3840 = vmul.f32 %v3839, %v3824
        %v3841 = vadd.f32 %v3840, %v3825
        %v3842 = vsel %vm3826, %v3823, 0.0
        %3843 = vadd.xlane.f32.xlu0 %v3842
        %v3844 = vpop.xlane.xlu0 %3843
        %v3845 = vmul.f32 %v3844, %v1925
        %v3846 = vsub.f32 %v3823, %v3845
        %v3847 = vmul.f32 %v3846, %v3846
        %v3848 = vsel %vm3826, %v3847, 0.0
        %3849 = vadd.xlane.f32.xlu0 %v3848
        %v3850 = vpop.xlane.xlu0 %3849
        %v3851 = vmul.f32 %v3850, %v1925
        %v3852 = vadd.f32 %v3851, 1e-06
        %v3853 = vrsqrt.pop %v3852
        %v3854 = vmul.f32 %v3846, %v3853
        %v3855 = vmul.f32 %v3854, %v3824
        %v3856 = vadd.f32 %v3855, %v3825
        %v3857 = vsub.f32 %v3841, %v3856
        %v3858 = vand.u32 2147483647, %v3857
        %v3859 = vsel %vm3826, %v3858, 0.0
        %3860 = vadd.xlane.f32.xlu0 %v3859
        %v3861 = vpop.xlane.xlu0 %3860
        %vm3862 = vcmask 0
        %3863 = vst.msk [vmem:[%s1015] sm:$0x1] %vm3862, %v3861
      $region120: #{semantic_loss.1} parent=111 // pred_fallthru
        _
      %p3864 = scmp.lt.s32.totalorder %s38, 1
      %s3865 = scalar_select %p3864, %s38, 1
      %s3866 = scalar_lea.vmem %s23, %s3865
      // Predicated region
      $region121: #{semantic_loss.1} parent=111 // pred_check
        %p3867 = pneg %p642
      $region122: #{semantic_loss.1} parent=111 // pred_check_branch
        %3869 = sbr.rel (%p3867) target = $region124
      $region123: #{semantic_loss.1} parent=111 // pred_region
        _
      $region124: #{semantic_loss.1} parent=111 // pred_fallthru
        _
    $region112: #{semantic_loss.1} parent=5 // pred_fallthru
      _
    %p3870 = scmp.le.s32.totalorder 2, %s29
    // Predicated region
    $region125: #{semantic_loss.1} parent=5 // pred_check
      %p3871 = pneg %p3870
    $region126: #{semantic_loss.1} parent=5 // pred_check_branch
      %3873 = sbr.rel (%p3871) target = $region128
    $region127: #{semantic_loss.1} parent=5 // pred_region
      %s3874 = ssub.s32 %s29, 2
      // Predicated region
      $region129: #{semantic_loss.1} parent=127 // pred_check
        %p3875 = pneg %p648
      $region130: #{semantic_loss.1} parent=127 // pred_check_branch
        %3877 = sbr.rel (%p3875) target = $region132
      $region131: #{semantic_loss.1} parent=127 // pred_region
        %p3878 = scmp.lt.s32.totalorder %s40, 1
        %s3879 = scalar_select %p3878, %s40, 1
        %s3880 = scalar_lea.vmem %s23, %s3879
      $region132: #{semantic_loss.1} parent=127 // pred_fallthru
        _
    $region128: #{semantic_loss.1} parent=5 // pred_fallthru
      _
  $region6: #{semantic_loss.1} parent=0 // loop_footer
    %s33 = sadd.s32 1, %s29
  $region7: #{semantic_loss.1} parent=0 // loop_footer_branch
    %28 = sbr.rel target = $region3
  $region8: #{semantic_loss.1} parent=0 // loop_exit
    _

</llo_original>
